<compile_context>
chip_gen: v7x
topology: tpu7x:2x2x1
jax: 0.10.0
libtpu: 0.0.40
codegen_flags: <defaults>
</compile_context>

<pallas_src>
import jax
import jax.numpy as jnp
from jax.experimental import pallas as pl
from jax.experimental.pallas import tpu as pltpu

EPS = 1e-5  # nn.InstanceNorm2d default eps


def _vmem_limit_bytes():
    """~3/4 of physical VMEM: ~96 MiB on v5e/v6e (128 MiB), ~48 MiB on v7x (64 MiB/TC)."""
    try:
        cap = int(pltpu.get_tpu_info().vmem_capacity_bytes)
    except Exception:
        cap = 64 * 1024 * 1024
    return int(min(cap * 3 // 4, 96 * 1024 * 1024))


def _fill_x3(x, x3_ref):
    """x: (H, W, C) f32.  Fills x3_ref (H+2, W, 3*C) bf16 with the ReflectionPad(1)
    3x3 im2col-lite operand: lane blocks = [dx=-1 | dx=0 | dx=+1] taps, leading axis
    = H padded with reflected rows.  Border columns of the rolled taps are repaired
    with single-column ref stores (no whole-slab selects)."""
    H, W, C = x.shape
    xl = pltpu.roll(x, 1, axis=1)        # x[:, j-1]  (col 0 wraps; fixed below)
    xr = pltpu.roll(x, W - 1, axis=1)    # x[:, j+1]  (col W-1 wraps; fixed below)
    for off, tap in ((0, xl), (C, x), (2 * C, xr)):
        tb = tap.astype(jnp.bfloat16)
        x3_ref[1:H + 1, :, off:off + C] = tb
        x3_ref[0:1, :, off:off + C] = tb[1:2]                 # reflect row -1 -> row 1
        x3_ref[H + 1:H + 2, :, off:off + C] = tb[H - 2:H - 1]  # reflect row H -> row H-2
    # W-reflection fix-up of the wrapped roll columns (single-column stores; also
    # yields the correct corner values since the center tap rows are already padded).
    x3_ref[:, 0:1, 0:C] = x3_ref[:, 1:2, C:2 * C]                       # dx=-1 tap, col 0 -> x[:, 1]
    x3_ref[:, W - 1:W, 2 * C:3 * C] = x3_ref[:, W - 2:W - 1, C:2 * C]   # dx=+1 tap, col W-1 -> x[:, W-2]


def _conv_inorm(x, w_ref, x3_ref, *, relu):
    """x: (H, W, Cp) f32.  w_ref: (3, 3*Cp, Cp) bf16 (rows = [dx0;dx1;dx2] per dy).
    ReflectionPad(1) -> conv3x3 (no bias; cancelled by InstanceNorm) -> InstanceNorm
    (-> ReLU).  bf16 MXU operands, f32 accumulation."""
    H, W, C = x.shape
    _fill_x3(x, x3_ref)

    y = jnp.dot(x3_ref[0:H].reshape(H * W, 3 * C), w_ref[0],
                preferred_element_type=jnp.float32)
    for dy in (1, 2):
        y = y + jnp.dot(x3_ref[dy:dy + H].reshape(H * W, 3 * C), w_ref[dy],
                        preferred_element_type=jnp.float32)

    # Instance norm (biased variance), single-pass stats on the live conv output.
    # (Conv output is near zero-mean once the redundant bias is dropped, so the
    # E[x^2]-E[x]^2 form is numerically safe here; clamp guards against tiny
    # negative round-off.)
    inv_hw = 1.0 / (H * W)
    s = jnp.sum(y, axis=0, keepdims=True)
    ss = jnp.sum(y * y, axis=0, keepdims=True)
    mean = s * inv_hw
    var = jnp.maximum(ss * inv_hw - mean * mean, 0.0)
    y = (y - mean) * jax.lax.rsqrt(var + EPS)
    if relu:
        y = jnp.maximum(y, 0.0)
    return y.reshape(H, W, C)


def residual_block_kernel(x_ref, w1_ref, w2_ref, o_ref, x3_ref):
    x = x_ref[0]                                     # (H, W, Cp) f32
    h = _conv_inorm(x, w1_ref, x3_ref, relu=True)
    h = _conv_inorm(h, w2_ref, x3_ref, relu=False)
    o_ref[0] = (x + h).astype(o_ref.dtype)


@jax.jit
def residual_block_nchw(x_nchw, w1, b1, w2, b2):
    """x_nchw: (N, C, H, W) f32.  w*: (C, C, 3, 3) PyTorch OIHW.  b*: (C,).
    The conv biases are cancelled exactly by InstanceNorm(affine=False), so they
    are accepted for interface parity but never passed to the kernel."""
    del b1, b2
    N, C, H, W = x_nchw.shape
    Cp = ((C + 127) // 128) * 128          # lane-dense channel dimension
    pc = Cp - C

    x = jnp.transpose(x_nchw, (0, 2, 3, 1))                        # NCHW -> NHWC
    x = jnp.pad(x, ((0, 0), (0, 0), (0, 0), (0, pc)))

    def prep_w(w):  # (Cout, Cin, 3, 3) -> (3, 3*Cp, Cp) bf16; rows = [dx0;dx1;dx2] per dy
        wt = jnp.transpose(w, (2, 3, 1, 0))                        # (ky, kx, Cin, Cout)
        wt = jnp.pad(wt, ((0, 0), (0, 0), (0, pc), (0, pc)))
        return wt.reshape(3, 3 * Cp, Cp).astype(jnp.bfloat16)

    out = pl.pallas_call(
        residual_block_kernel,
        out_shape=jax.ShapeDtypeStruct((N, H, W, Cp), x.dtype),
        grid=(N,),
        in_specs=[
            pl.BlockSpec((1, H, W, Cp), lambda n: (n, 0, 0, 0)),
            pl.BlockSpec((3, 3 * Cp, Cp), lambda n: (0, 0, 0)),
            pl.BlockSpec((3, 3 * Cp, Cp), lambda n: (0, 0, 0)),
        ],
        out_specs=pl.BlockSpec((1, H, W, Cp), lambda n: (n, 0, 0, 0)),
        scratch_shapes=[pltpu.VMEM((H + 2, W, 3 * Cp), jnp.bfloat16)],
        input_output_aliases={0: 0},
        compiler_params=pltpu.CompilerParams(
            dimension_semantics=("parallel",),
            vmem_limit_bytes=_vmem_limit_bytes(),
        ),
    )(x, prep_w(w1), prep_w(w2))

    out = out[..., :C]                                             # drop padded lanes
    return jnp.transpose(out, (0, 3, 1, 2))                        # NHWC -> NCHW


# ----- pure-JAX f32 reference (for correctness check) -----------------------
def _ref_forward(x, w1, b1, w2, b2):
    def reflect_pad(a):  # a: NCHW
        return jnp.pad(a, ((0, 0), (0, 0), (1, 1), (1, 1)), mode="reflect")

    def conv(a, w, b):
        y = jax.lax.conv_general_dilated(
            a, w, window_strides=(1, 1), padding="VALID",
            dimension_numbers=("NCHW", "OIHW", "NCHW"))
        return y + b.reshape(1, -1, 1, 1)

    def inorm(a):
        mean = jnp.mean(a, axis=(2, 3), keepdims=True)
        var = jnp.mean((a - mean) ** 2, axis=(2, 3), keepdims=True)
        return (a - mean) * jax.lax.rsqrt(var + EPS)

    h = conv(reflect_pad(x), w1, b1)
    h = jnp.maximum(inorm(h), 0.0)
    h = conv(reflect_pad(h), w2, b2)
    h = inorm(h)
    return x + h


if __name__ == "__main__":
    N, C, H, W = 2, 4, 16, 16
    key = jax.random.PRNGKey(0)
    kx, kw1, kb1, kw2, kb2 = jax.random.split(key, 5)

    x = jax.random.normal(kx, (N, C, H, W), jnp.float32)
    # PyTorch Conv2d weight layout: (Cout, Cin, 3, 3)
    w1 = jax.random.normal(kw1, (C, C, 3, 3), jnp.float32) * 0.1
    b1 = jax.random.normal(kb1, (C,), jnp.float32) * 0.1
    w2 = jax.random.normal(kw2, (C, C, 3, 3), jnp.float32) * 0.1
    b2 = jax.random.normal(kb2, (C,), jnp.float32) * 0.1

    out = jax.block_until_ready(residual_block_nchw(x, w1, b1, w2, b2))

    ref = _ref_forward(x, w1, b1, w2, b2)
    assert out.shape == (N, C, H, W)
    # bf16 MXU operands (f32 accumulation) give ~1e-2 worst-case abs error vs the
    # f32 reference; structural/indexing bugs would show up as O(1) errors.
    err = float(jnp.max(jnp.abs(out - ref)))
    assert err < 5e-2, f"mismatch vs JAX reference: {err}"

    print("KERNEL_OK")
</pallas_src>

<mosaic_0001>
module attributes {stable_mosaic.version = 11 : i64} {
  func.func @residual_block_kernel(%arg0: i32, %arg1: memref<1x16x16x128xf32, #tpu.memory_space<vmem>>, %arg2: memref<3x384x128xbf16, #tpu.memory_space<vmem>>, %arg3: memref<3x384x128xbf16, #tpu.memory_space<vmem>>, %arg4: memref<1x16x16x128xf32, #tpu.memory_space<vmem>>, %arg5: memref<18x16x384xbf16, #tpu.memory_space<vmem>>) attributes {dimension_semantics = [#tpu.dimension_semantics<parallel>], iteration_bounds = array<i64: 2>, scalar_prefetch = 0 : i64, scratch_operands = 1 : i64, tpu.core_type = #tpu.core_type<tc>, window_params = [{transform_indices = @transform_0, window_bounds = array<i64: 1, 16, 16, 128>}, {pipeline_mode = #tpu.pipeline_mode<synchronous>, transform_indices = @transform_1, window_bounds = array<i64: 3, 384, 128>}, {pipeline_mode = #tpu.pipeline_mode<synchronous>, transform_indices = @transform_2, window_bounds = array<i64: 3, 384, 128>}, {transform_indices = @transform_3, window_bounds = array<i64: 1, 16, 16, 128>}]} {
    %c0 = arith.constant 0 : index
    %c0_0 = arith.constant 0 : index
    %c0_1 = arith.constant 0 : index
    %c0_2 = arith.constant 0 : index
    %0 = vector.load %arg1[%c0, %c0_0, %c0_1, %c0_2] : memref<1x16x16x128xf32, #tpu.memory_space<vmem>>, vector<1x16x16x128xf32>
    %1 = vector.shape_cast %0 : vector<1x16x16x128xf32> to vector<16x16x128xf32>
    %c1_i32 = arith.constant 1 : i32
    %2 = tpu.dynamic_rotate %1 by %c1_i32 dim 1 : vector<16x16x128xf32>, i32 -> vector<16x16x128xf32>
    %c15_i32 = arith.constant 15 : i32
    %3 = tpu.dynamic_rotate %1 by %c15_i32 dim 1 : vector<16x16x128xf32>, i32 -> vector<16x16x128xf32>
    %4 = arith.truncf %2 : vector<16x16x128xf32> to vector<16x16x128xbf16>
    %c1 = arith.constant 1 : index
    %c0_3 = arith.constant 0 : index
    %c0_4 = arith.constant 0 : index
    %5 = vector.load %arg5[%c1, %c0_3, %c0_4] : memref<18x16x384xbf16, #tpu.memory_space<vmem>>, vector<16x16x128xbf16>
    tpu.vector_store %arg5[%c1, %c0_3, %c0_4], %4 {strides = array<i32>} : memref<18x16x384xbf16, #tpu.memory_space<vmem>>, vector<16x16x128xbf16>,
    %6 = vector.extract_strided_slice %4 {offsets = [1, 0, 0], sizes = [1, 16, 128], strides = [1, 1, 1]} : vector<16x16x128xbf16> to vector<1x16x128xbf16>
    %c0_5 = arith.constant 0 : index
    %c0_6 = arith.constant 0 : index
    %c0_7 = arith.constant 0 : index
    %7 = vector.load %arg5[%c0_5, %c0_6, %c0_7] : memref<18x16x384xbf16, #tpu.memory_space<vmem>>, vector<1x16x128xbf16>
    tpu.vector_store %arg5[%c0_5, %c0_6, %c0_7], %6 {strides = array<i32>} : memref<18x16x384xbf16, #tpu.memory_space<vmem>>, vector<1x16x128xbf16>,
    %8 = vector.extract_strided_slice %4 {offsets = [14, 0, 0], sizes = [1, 16, 128], strides = [1, 1, 1]} : vector<16x16x128xbf16> to vector<1x16x128xbf16>
    %c17 = arith.constant 17 : index
    %c0_8 = arith.constant 0 : index
    %c0_9 = arith.constant 0 : index
    %9 = vector.load %arg5[%c17, %c0_8, %c0_9] : memref<18x16x384xbf16, #tpu.memory_space<vmem>>, vector<1x16x128xbf16>
    tpu.vector_store %arg5[%c17, %c0_8, %c0_9], %8 {strides = array<i32>} : memref<18x16x384xbf16, #tpu.memory_space<vmem>>, vector<1x16x128xbf16>,
    %10 = arith.truncf %1 : vector<16x16x128xf32> to vector<16x16x128xbf16>
    %c1_10 = arith.constant 1 : index
    %c0_11 = arith.constant 0 : index
    %c128 = arith.constant 128 : index
    %11 = vector.load %arg5[%c1_10, %c0_11, %c128] : memref<18x16x384xbf16, #tpu.memory_space<vmem>>, vector<16x16x128xbf16>
    tpu.vector_store %arg5[%c1_10, %c0_11, %c128], %10 {strides = array<i32>} : memref<18x16x384xbf16, #tpu.memory_space<vmem>>, vector<16x16x128xbf16>,
    %12 = vector.extract_strided_slice %10 {offsets = [1, 0, 0], sizes = [1, 16, 128], strides = [1, 1, 1]} : vector<16x16x128xbf16> to vector<1x16x128xbf16>
    %c0_12 = arith.constant 0 : index
    %c0_13 = arith.constant 0 : index
    %c128_14 = arith.constant 128 : index
    %13 = vector.load %arg5[%c0_12, %c0_13, %c128_14] : memref<18x16x384xbf16, #tpu.memory_space<vmem>>, vector<1x16x128xbf16>
    tpu.vector_store %arg5[%c0_12, %c0_13, %c128_14], %12 {strides = array<i32>} : memref<18x16x384xbf16, #tpu.memory_space<vmem>>, vector<1x16x128xbf16>,
    %14 = vector.extract_strided_slice %10 {offsets = [14, 0, 0], sizes = [1, 16, 128], strides = [1, 1, 1]} : vector<16x16x128xbf16> to vector<1x16x128xbf16>
    %c17_15 = arith.constant 17 : index
    %c0_16 = arith.constant 0 : index
    %c128_17 = arith.constant 128 : index
    %15 = vector.load %arg5[%c17_15, %c0_16, %c128_17] : memref<18x16x384xbf16, #tpu.memory_space<vmem>>, vector<1x16x128xbf16>
    tpu.vector_store %arg5[%c17_15, %c0_16, %c128_17], %14 {strides = array<i32>} : memref<18x16x384xbf16, #tpu.memory_space<vmem>>, vector<1x16x128xbf16>,
    %16 = arith.truncf %3 : vector<16x16x128xf32> to vector<16x16x128xbf16>
    %c1_18 = arith.constant 1 : index
    %c0_19 = arith.constant 0 : index
    %c256 = arith.constant 256 : index
    %17 = vector.load %arg5[%c1_18, %c0_19, %c256] : memref<18x16x384xbf16, #tpu.memory_space<vmem>>, vector<16x16x128xbf16>
    tpu.vector_store %arg5[%c1_18, %c0_19, %c256], %16 {strides = array<i32>} : memref<18x16x384xbf16, #tpu.memory_space<vmem>>, vector<16x16x128xbf16>,
    %18 = vector.extract_strided_slice %16 {offsets = [1, 0, 0], sizes = [1, 16, 128], strides = [1, 1, 1]} : vector<16x16x128xbf16> to vector<1x16x128xbf16>
    %c0_20 = arith.constant 0 : index
    %c0_21 = arith.constant 0 : index
    %c256_22 = arith.constant 256 : index
    %19 = vector.load %arg5[%c0_20, %c0_21, %c256_22] : memref<18x16x384xbf16, #tpu.memory_space<vmem>>, vector<1x16x128xbf16>
    tpu.vector_store %arg5[%c0_20, %c0_21, %c256_22], %18 {strides = array<i32>} : memref<18x16x384xbf16, #tpu.memory_space<vmem>>, vector<1x16x128xbf16>,
    %20 = vector.extract_strided_slice %16 {offsets = [14, 0, 0], sizes = [1, 16, 128], strides = [1, 1, 1]} : vector<16x16x128xbf16> to vector<1x16x128xbf16>
    %c17_23 = arith.constant 17 : index
    %c0_24 = arith.constant 0 : index
    %c256_25 = arith.constant 256 : index
    %21 = vector.load %arg5[%c17_23, %c0_24, %c256_25] : memref<18x16x384xbf16, #tpu.memory_space<vmem>>, vector<1x16x128xbf16>
    tpu.vector_store %arg5[%c17_23, %c0_24, %c256_25], %20 {strides = array<i32>} : memref<18x16x384xbf16, #tpu.memory_space<vmem>>, vector<1x16x128xbf16>,
    %c0_26 = arith.constant 0 : index
    %c1_27 = arith.constant 1 : index
    %c128_28 = arith.constant 128 : index
    %22 = vector.load %arg5[%c0_26, %c1_27, %c128_28] : memref<18x16x384xbf16, #tpu.memory_space<vmem>>, vector<18x1x128xbf16>
    %c0_29 = arith.constant 0 : index
    %c0_30 = arith.constant 0 : index
    %c0_31 = arith.constant 0 : index
    %23 = vector.load %arg5[%c0_29, %c0_30, %c0_31] : memref<18x16x384xbf16, #tpu.memory_space<vmem>>, vector<18x1x128xbf16>
    tpu.vector_store %arg5[%c0_29, %c0_30, %c0_31], %22 {strides = array<i32>} : memref<18x16x384xbf16, #tpu.memory_space<vmem>>, vector<18x1x128xbf16>,
    %c0_32 = arith.constant 0 : index
    %c14 = arith.constant 14 : index
    %c128_33 = arith.constant 128 : index
    %24 = vector.load %arg5[%c0_32, %c14, %c128_33] : memref<18x16x384xbf16, #tpu.memory_space<vmem>>, vector<18x1x128xbf16>
    %c0_34 = arith.constant 0 : index
    %c15 = arith.constant 15 : index
    %c256_35 = arith.constant 256 : index
    %25 = vector.load %arg5[%c0_34, %c15, %c256_35] : memref<18x16x384xbf16, #tpu.memory_space<vmem>>, vector<18x1x128xbf16>
    tpu.vector_store %arg5[%c0_34, %c15, %c256_35], %24 {strides = array<i32>} : memref<18x16x384xbf16, #tpu.memory_space<vmem>>, vector<18x1x128xbf16>,
    %c0_36 = arith.constant 0 : index
    %c0_37 = arith.constant 0 : index
    %c0_38 = arith.constant 0 : index
    %26 = vector.load %arg5[%c0_36, %c0_37, %c0_38] : memref<18x16x384xbf16, #tpu.memory_space<vmem>>, vector<16x16x384xbf16>
    %27 = vector.shape_cast %26 : vector<16x16x384xbf16> to vector<256x384xbf16>
    %c0_39 = arith.constant 0 : index
    %c0_40 = arith.constant 0 : index
    %c0_41 = arith.constant 0 : index
    %28 = vector.load %arg2[%c0_39, %c0_40, %c0_41] : memref<3x384x128xbf16, #tpu.memory_space<vmem>>, vector<1x384x128xbf16>
    %29 = vector.shape_cast %28 : vector<1x384x128xbf16> to vector<384x128xbf16>
    %cst = arith.constant dense<0.000000e+00> : vector<256x128xf32>
    %30 = tpu.matmul %27, %29, %cst {dimension_numbers = #tpu.dot_dimension_numbers<[1], [0], [0], [1], [0, 0, 1, 1], [], []>} : vector<256x384xbf16>, vector<384x128xbf16>, vector<256x128xf32> -> vector<256x128xf32>
    %c1_42 = arith.constant 1 : index
    %c0_43 = arith.constant 0 : index
    %c0_44 = arith.constant 0 : index
    %31 = vector.load %arg5[%c1_42, %c0_43, %c0_44] : memref<18x16x384xbf16, #tpu.memory_space<vmem>>, vector<16x16x384xbf16>
    %32 = vector.shape_cast %31 : vector<16x16x384xbf16> to vector<256x384xbf16>
    %c1_45 = arith.constant 1 : index
    %c0_46 = arith.constant 0 : index
    %c0_47 = arith.constant 0 : index
    %33 = vector.load %arg2[%c1_45, %c0_46, %c0_47] : memref<3x384x128xbf16, #tpu.memory_space<vmem>>, vector<1x384x128xbf16>
    %34 = vector.shape_cast %33 : vector<1x384x128xbf16> to vector<384x128xbf16>
    %cst_48 = arith.constant dense<0.000000e+00> : vector<256x128xf32>
    %35 = tpu.matmul %32, %34, %cst_48 {dimension_numbers = #tpu.dot_dimension_numbers<[1], [0], [0], [1], [0, 0, 1, 1], [], []>} : vector<256x384xbf16>, vector<384x128xbf16>, vector<256x128xf32> -> vector<256x128xf32>
    %36 = arith.addf %30, %35 : vector<256x128xf32>
    %c2 = arith.constant 2 : index
    %c0_49 = arith.constant 0 : index
    %c0_50 = arith.constant 0 : index
    %37 = vector.load %arg5[%c2, %c0_49, %c0_50] : memref<18x16x384xbf16, #tpu.memory_space<vmem>>, vector<16x16x384xbf16>
    %38 = vector.shape_cast %37 : vector<16x16x384xbf16> to vector<256x384xbf16>
    %c2_51 = arith.constant 2 : index
    %c0_52 = arith.constant 0 : index
    %c0_53 = arith.constant 0 : index
    %39 = vector.load %arg2[%c2_51, %c0_52, %c0_53] : memref<3x384x128xbf16, #tpu.memory_space<vmem>>, vector<1x384x128xbf16>
    %40 = vector.shape_cast %39 : vector<1x384x128xbf16> to vector<384x128xbf16>
    %cst_54 = arith.constant dense<0.000000e+00> : vector<256x128xf32>
    %41 = tpu.matmul %38, %40, %cst_54 {dimension_numbers = #tpu.dot_dimension_numbers<[1], [0], [0], [1], [0, 0, 1, 1], [], []>} : vector<256x384xbf16>, vector<384x128xbf16>, vector<256x128xf32> -> vector<256x128xf32>
    %42 = arith.addf %36, %41 : vector<256x128xf32>
    %cst_55 = arith.constant dense<0.000000e+00> : vector<128xf32>
    %43 = vector.multi_reduction <add>, %42, %cst_55 [0] : vector<256x128xf32> to vector<128xf32>
    %44 = vector.shape_cast %43 : vector<128xf32> to vector<1x128xf32>
    %45 = arith.mulf %42, %42 : vector<256x128xf32>
    %cst_56 = arith.constant dense<0.000000e+00> : vector<128xf32>
    %46 = vector.multi_reduction <add>, %45, %cst_56 [0] : vector<256x128xf32> to vector<128xf32>
    %47 = vector.shape_cast %46 : vector<128xf32> to vector<1x128xf32>
    %cst_57 = arith.constant 3.906250e-03 : f32
    %48 = vector.broadcast %cst_57 : f32 to vector<1x128xf32>
    %49 = arith.mulf %44, %48 : vector<1x128xf32>
    %cst_58 = arith.constant 3.906250e-03 : f32
    %50 = vector.broadcast %cst_58 : f32 to vector<1x128xf32>
    %51 = arith.mulf %47, %50 : vector<1x128xf32>
    %52 = arith.mulf %49, %49 : vector<1x128xf32>
    %53 = arith.subf %51, %52 : vector<1x128xf32>
    %cst_59 = arith.constant 0.000000e+00 : f32
    %54 = vector.broadcast %cst_59 : f32 to vector<1x128xf32>
    %55 = arith.maximumf %53, %54 : vector<1x128xf32>
    %56 = vector.broadcast %49 : vector<1x128xf32> to vector<256x128xf32>
    %57 = arith.subf %42, %56 : vector<256x128xf32>
    %cst_60 = arith.constant 9.99999974E-6 : f32
    %58 = vector.broadcast %cst_60 : f32 to vector<1x128xf32>
    %59 = arith.addf %55, %58 : vector<1x128xf32>
    %60 = math.rsqrt %59 : vector<1x128xf32>
    %61 = vector.broadcast %60 : vector<1x128xf32> to vector<256x128xf32>
    %62 = arith.mulf %57, %61 : vector<256x128xf32>
    %cst_61 = arith.constant 0.000000e+00 : f32
    %63 = vector.broadcast %cst_61 : f32 to vector<256x128xf32>
    %64 = arith.maximumf %62, %63 : vector<256x128xf32>
    %65 = vector.shape_cast %64 : vector<256x128xf32> to vector<16x16x128xf32>
    %c1_i32_62 = arith.constant 1 : i32
    %66 = tpu.dynamic_rotate %65 by %c1_i32_62 dim 1 : vector<16x16x128xf32>, i32 -> vector<16x16x128xf32>
    %c15_i32_63 = arith.constant 15 : i32
    %67 = tpu.dynamic_rotate %65 by %c15_i32_63 dim 1 : vector<16x16x128xf32>, i32 -> vector<16x16x128xf32>
    %68 = arith.truncf %66 : vector<16x16x128xf32> to vector<16x16x128xbf16>
    %c1_64 = arith.constant 1 : index
    %c0_65 = arith.constant 0 : index
    %c0_66 = arith.constant 0 : index
    %69 = vector.load %arg5[%c1_64, %c0_65, %c0_66] : memref<18x16x384xbf16, #tpu.memory_space<vmem>>, vector<16x16x128xbf16>
    tpu.vector_store %arg5[%c1_64, %c0_65, %c0_66], %68 {strides = array<i32>} : memref<18x16x384xbf16, #tpu.memory_space<vmem>>, vector<16x16x128xbf16>,
    %70 = vector.extract_strided_slice %68 {offsets = [1, 0, 0], sizes = [1, 16, 128], strides = [1, 1, 1]} : vector<16x16x128xbf16> to vector<1x16x128xbf16>
    %c0_67 = arith.constant 0 : index
    %c0_68 = arith.constant 0 : index
    %c0_69 = arith.constant 0 : index
    %71 = vector.load %arg5[%c0_67, %c0_68, %c0_69] : memref<18x16x384xbf16, #tpu.memory_space<vmem>>, vector<1x16x128xbf16>
    tpu.vector_store %arg5[%c0_67, %c0_68, %c0_69], %70 {strides = array<i32>} : memref<18x16x384xbf16, #tpu.memory_space<vmem>>, vector<1x16x128xbf16>,
    %72 = vector.extract_strided_slice %68 {offsets = [14, 0, 0], sizes = [1, 16, 128], strides = [1, 1, 1]} : vector<16x16x128xbf16> to vector<1x16x128xbf16>
    %c17_70 = arith.constant 17 : index
    %c0_71 = arith.constant 0 : index
    %c0_72 = arith.constant 0 : index
    %73 = vector.load %arg5[%c17_70, %c0_71, %c0_72] : memref<18x16x384xbf16, #tpu.memory_space<vmem>>, vector<1x16x128xbf16>
    tpu.vector_store %arg5[%c17_70, %c0_71, %c0_72], %72 {strides = array<i32>} : memref<18x16x384xbf16, #tpu.memory_space<vmem>>, vector<1x16x128xbf16>,
    %74 = arith.truncf %65 : vector<16x16x128xf32> to vector<16x16x128xbf16>
    %c1_73 = arith.constant 1 : index
    %c0_74 = arith.constant 0 : index
    %c128_75 = arith.constant 128 : index
    %75 = vector.load %arg5[%c1_73, %c0_74, %c128_75] : memref<18x16x384xbf16, #tpu.memory_space<vmem>>, vector<16x16x128xbf16>
    tpu.vector_store %arg5[%c1_73, %c0_74, %c128_75], %74 {strides = array<i32>} : memref<18x16x384xbf16, #tpu.memory_space<vmem>>, vector<16x16x128xbf16>,
    %76 = vector.extract_strided_slice %74 {offsets = [1, 0, 0], sizes = [1, 16, 128], strides = [1, 1, 1]} : vector<16x16x128xbf16> to vector<1x16x128xbf16>
    %c0_76 = arith.constant 0 : index
    %c0_77 = arith.constant 0 : index
    %c128_78 = arith.constant 128 : index
    %77 = vector.load %arg5[%c0_76, %c0_77, %c128_78] : memref<18x16x384xbf16, #tpu.memory_space<vmem>>, vector<1x16x128xbf16>
    tpu.vector_store %arg5[%c0_76, %c0_77, %c128_78], %76 {strides = array<i32>} : memref<18x16x384xbf16, #tpu.memory_space<vmem>>, vector<1x16x128xbf16>,
    %78 = vector.extract_strided_slice %74 {offsets = [14, 0, 0], sizes = [1, 16, 128], strides = [1, 1, 1]} : vector<16x16x128xbf16> to vector<1x16x128xbf16>
    %c17_79 = arith.constant 17 : index
    %c0_80 = arith.constant 0 : index
    %c128_81 = arith.constant 128 : index
    %79 = vector.load %arg5[%c17_79, %c0_80, %c128_81] : memref<18x16x384xbf16, #tpu.memory_space<vmem>>, vector<1x16x128xbf16>
    tpu.vector_store %arg5[%c17_79, %c0_80, %c128_81], %78 {strides = array<i32>} : memref<18x16x384xbf16, #tpu.memory_space<vmem>>, vector<1x16x128xbf16>,
    %80 = arith.truncf %67 : vector<16x16x128xf32> to vector<16x16x128xbf16>
    %c1_82 = arith.constant 1 : index
    %c0_83 = arith.constant 0 : index
    %c256_84 = arith.constant 256 : index
    %81 = vector.load %arg5[%c1_82, %c0_83, %c256_84] : memref<18x16x384xbf16, #tpu.memory_space<vmem>>, vector<16x16x128xbf16>
    tpu.vector_store %arg5[%c1_82, %c0_83, %c256_84], %80 {strides = array<i32>} : memref<18x16x384xbf16, #tpu.memory_space<vmem>>, vector<16x16x128xbf16>,
    %82 = vector.extract_strided_slice %80 {offsets = [1, 0, 0], sizes = [1, 16, 128], strides = [1, 1, 1]} : vector<16x16x128xbf16> to vector<1x16x128xbf16>
    %c0_85 = arith.constant 0 : index
    %c0_86 = arith.constant 0 : index
    %c256_87 = arith.constant 256 : index
    %83 = vector.load %arg5[%c0_85, %c0_86, %c256_87] : memref<18x16x384xbf16, #tpu.memory_space<vmem>>, vector<1x16x128xbf16>
    tpu.vector_store %arg5[%c0_85, %c0_86, %c256_87], %82 {strides = array<i32>} : memref<18x16x384xbf16, #tpu.memory_space<vmem>>, vector<1x16x128xbf16>,
    %84 = vector.extract_strided_slice %80 {offsets = [14, 0, 0], sizes = [1, 16, 128], strides = [1, 1, 1]} : vector<16x16x128xbf16> to vector<1x16x128xbf16>
    %c17_88 = arith.constant 17 : index
    %c0_89 = arith.constant 0 : index
    %c256_90 = arith.constant 256 : index
    %85 = vector.load %arg5[%c17_88, %c0_89, %c256_90] : memref<18x16x384xbf16, #tpu.memory_space<vmem>>, vector<1x16x128xbf16>
    tpu.vector_store %arg5[%c17_88, %c0_89, %c256_90], %84 {strides = array<i32>} : memref<18x16x384xbf16, #tpu.memory_space<vmem>>, vector<1x16x128xbf16>,
    %c0_91 = arith.constant 0 : index
    %c1_92 = arith.constant 1 : index
    %c128_93 = arith.constant 128 : index
    %86 = vector.load %arg5[%c0_91, %c1_92, %c128_93] : memref<18x16x384xbf16, #tpu.memory_space<vmem>>, vector<18x1x128xbf16>
    %c0_94 = arith.constant 0 : index
    %c0_95 = arith.constant 0 : index
    %c0_96 = arith.constant 0 : index
    %87 = vector.load %arg5[%c0_94, %c0_95, %c0_96] : memref<18x16x384xbf16, #tpu.memory_space<vmem>>, vector<18x1x128xbf16>
    tpu.vector_store %arg5[%c0_94, %c0_95, %c0_96], %86 {strides = array<i32>} : memref<18x16x384xbf16, #tpu.memory_space<vmem>>, vector<18x1x128xbf16>,
    %c0_97 = arith.constant 0 : index
    %c14_98 = arith.constant 14 : index
    %c128_99 = arith.constant 128 : index
    %88 = vector.load %arg5[%c0_97, %c14_98, %c128_99] : memref<18x16x384xbf16, #tpu.memory_space<vmem>>, vector<18x1x128xbf16>
    %c0_100 = arith.constant 0 : index
    %c15_101 = arith.constant 15 : index
    %c256_102 = arith.constant 256 : index
    %89 = vector.load %arg5[%c0_100, %c15_101, %c256_102] : memref<18x16x384xbf16, #tpu.memory_space<vmem>>, vector<18x1x128xbf16>
    tpu.vector_store %arg5[%c0_100, %c15_101, %c256_102], %88 {strides = array<i32>} : memref<18x16x384xbf16, #tpu.memory_space<vmem>>, vector<18x1x128xbf16>,
    %c0_103 = arith.constant 0 : index
    %c0_104 = arith.constant 0 : index
    %c0_105 = arith.constant 0 : index
    %90 = vector.load %arg5[%c0_103, %c0_104, %c0_105] : memref<18x16x384xbf16, #tpu.memory_space<vmem>>, vector<16x16x384xbf16>
    %91 = vector.shape_cast %90 : vector<16x16x384xbf16> to vector<256x384xbf16>
    %c0_106 = arith.constant 0 : index
    %c0_107 = arith.constant 0 : index
    %c0_108 = arith.constant 0 : index
    %92 = vector.load %arg3[%c0_106, %c0_107, %c0_108] : memref<3x384x128xbf16, #tpu.memory_space<vmem>>, vector<1x384x128xbf16>
    %93 = vector.shape_cast %92 : vector<1x384x128xbf16> to vector<384x128xbf16>
    %cst_109 = arith.constant dense<0.000000e+00> : vector<256x128xf32>
    %94 = tpu.matmul %91, %93, %cst_109 {dimension_numbers = #tpu.dot_dimension_numbers<[1], [0], [0], [1], [0, 0, 1, 1], [], []>} : vector<256x384xbf16>, vector<384x128xbf16>, vector<256x128xf32> -> vector<256x128xf32>
    %c1_110 = arith.constant 1 : index
    %c0_111 = arith.constant 0 : index
    %c0_112 = arith.constant 0 : index
    %95 = vector.load %arg5[%c1_110, %c0_111, %c0_112] : memref<18x16x384xbf16, #tpu.memory_space<vmem>>, vector<16x16x384xbf16>
    %96 = vector.shape_cast %95 : vector<16x16x384xbf16> to vector<256x384xbf16>
    %c1_113 = arith.constant 1 : index
    %c0_114 = arith.constant 0 : index
    %c0_115 = arith.constant 0 : index
    %97 = vector.load %arg3[%c1_113, %c0_114, %c0_115] : memref<3x384x128xbf16, #tpu.memory_space<vmem>>, vector<1x384x128xbf16>
    %98 = vector.shape_cast %97 : vector<1x384x128xbf16> to vector<384x128xbf16>
    %cst_116 = arith.constant dense<0.000000e+00> : vector<256x128xf32>
    %99 = tpu.matmul %96, %98, %cst_116 {dimension_numbers = #tpu.dot_dimension_numbers<[1], [0], [0], [1], [0, 0, 1, 1], [], []>} : vector<256x384xbf16>, vector<384x128xbf16>, vector<256x128xf32> -> vector<256x128xf32>
    %100 = arith.addf %94, %99 : vector<256x128xf32>
    %c2_117 = arith.constant 2 : index
    %c0_118 = arith.constant 0 : index
    %c0_119 = arith.constant 0 : index
    %101 = vector.load %arg5[%c2_117, %c0_118, %c0_119] : memref<18x16x384xbf16, #tpu.memory_space<vmem>>, vector<16x16x384xbf16>
    %102 = vector.shape_cast %101 : vector<16x16x384xbf16> to vector<256x384xbf16>
    %c2_120 = arith.constant 2 : index
    %c0_121 = arith.constant 0 : index
    %c0_122 = arith.constant 0 : index
    %103 = vector.load %arg3[%c2_120, %c0_121, %c0_122] : memref<3x384x128xbf16, #tpu.memory_space<vmem>>, vector<1x384x128xbf16>
    %104 = vector.shape_cast %103 : vector<1x384x128xbf16> to vector<384x128xbf16>
    %cst_123 = arith.constant dense<0.000000e+00> : vector<256x128xf32>
    %105 = tpu.matmul %102, %104, %cst_123 {dimension_numbers = #tpu.dot_dimension_numbers<[1], [0], [0], [1], [0, 0, 1, 1], [], []>} : vector<256x384xbf16>, vector<384x128xbf16>, vector<256x128xf32> -> vector<256x128xf32>
    %106 = arith.addf %100, %105 : vector<256x128xf32>
    %cst_124 = arith.constant dense<0.000000e+00> : vector<128xf32>
    %107 = vector.multi_reduction <add>, %106, %cst_124 [0] : vector<256x128xf32> to vector<128xf32>
    %108 = vector.shape_cast %107 : vector<128xf32> to vector<1x128xf32>
    %109 = arith.mulf %106, %106 : vector<256x128xf32>
    %cst_125 = arith.constant dense<0.000000e+00> : vector<128xf32>
    %110 = vector.multi_reduction <add>, %109, %cst_125 [0] : vector<256x128xf32> to vector<128xf32>
    %111 = vector.shape_cast %110 : vector<128xf32> to vector<1x128xf32>
    %cst_126 = arith.constant 3.906250e-03 : f32
    %112 = vector.broadcast %cst_126 : f32 to vector<1x128xf32>
    %113 = arith.mulf %108, %112 : vector<1x128xf32>
    %cst_127 = arith.constant 3.906250e-03 : f32
    %114 = vector.broadcast %cst_127 : f32 to vector<1x128xf32>
    %115 = arith.mulf %111, %114 : vector<1x128xf32>
    %116 = arith.mulf %113, %113 : vector<1x128xf32>
    %117 = arith.subf %115, %116 : vector<1x128xf32>
    %cst_128 = arith.constant 0.000000e+00 : f32
    %118 = vector.broadcast %cst_128 : f32 to vector<1x128xf32>
    %119 = arith.maximumf %117, %118 : vector<1x128xf32>
    %120 = vector.broadcast %113 : vector<1x128xf32> to vector<256x128xf32>
    %121 = arith.subf %106, %120 : vector<256x128xf32>
    %cst_129 = arith.constant 9.99999974E-6 : f32
    %122 = vector.broadcast %cst_129 : f32 to vector<1x128xf32>
    %123 = arith.addf %119, %122 : vector<1x128xf32>
    %124 = math.rsqrt %123 : vector<1x128xf32>
    %125 = vector.broadcast %124 : vector<1x128xf32> to vector<256x128xf32>
    %126 = arith.mulf %121, %125 : vector<256x128xf32>
    %127 = vector.shape_cast %126 : vector<256x128xf32> to vector<16x16x128xf32>
    %128 = arith.addf %1, %127 : vector<16x16x128xf32>
    %c0_130 = arith.constant 0 : index
    %c0_131 = arith.constant 0 : index
    %c0_132 = arith.constant 0 : index
    %c0_133 = arith.constant 0 : index
    %129 = vector.load %arg4[%c0_130, %c0_131, %c0_132, %c0_133] : memref<1x16x16x128xf32, #tpu.memory_space<vmem>>, vector<1x16x16x128xf32>
    %130 = vector.shape_cast %129 : vector<1x16x16x128xf32> to vector<16x16x128xf32>
    %131 = vector.shape_cast %128 : vector<16x16x128xf32> to vector<1x16x16x128xf32>
    tpu.vector_store %arg4[%c0_130, %c0_131, %c0_132, %c0_133], %131 {strides = array<i32>} : memref<1x16x16x128xf32, #tpu.memory_space<vmem>>, vector<1x16x16x128xf32>,
    return
  }
  func.func @transform_0(%arg0: i32) -> (i32, i32, i32, i32) {
    %c0_i32 = arith.constant 0 : i32
    %c0_i32_0 = arith.constant 0 : i32
    %c0_i32_1 = arith.constant 0 : i32
    %c0_i32_2 = arith.constant 0 : i32
    return %arg0, %c0_i32, %c0_i32_0, %c0_i32_1 : i32, i32, i32, i32
  }
  func.func @transform_1(%arg0: i32) -> (i32, i32, i32) {
    %c0_i32 = arith.constant 0 : i32
    %c0_i32_0 = arith.constant 0 : i32
    %c0_i32_1 = arith.constant 0 : i32
    %c0_i32_2 = arith.constant 0 : i32
    return %c0_i32, %c0_i32_0, %c0_i32_1 : i32, i32, i32
  }
  func.func @transform_2(%arg0: i32) -> (i32, i32, i32) {
    %c0_i32 = arith.constant 0 : i32
    %c0_i32_0 = arith.constant 0 : i32
    %c0_i32_1 = arith.constant 0 : i32
    %c0_i32_2 = arith.constant 0 : i32
    return %c0_i32, %c0_i32_0, %c0_i32_1 : i32, i32, i32
  }
  func.func @transform_3(%arg0: i32) -> (i32, i32, i32, i32) {
    %c0_i32 = arith.constant 0 : i32
    %c0_i32_0 = arith.constant 0 : i32
    %c0_i32_1 = arith.constant 0 : i32
    %c0_i32_2 = arith.constant 0 : i32
    return %arg0, %c0_i32, %c0_i32_0, %c0_i32_1 : i32, i32, i32, i32
  }
}

</mosaic_0001>

<llo_original>
// kernel: residual_block_nchw.1
$region0: #{residual_block_nchw.1}
  #allocation0 [shape = 'u32[]', space=smem, size = 0x4, offset = 0x4, fixed_abs, tag = 'smem constant byte address 0x4 - core index']
  #allocation1 [shape = 'u32[144,128]{1,0:T(1,128)}', space=vmem, size = 0x12000, scoped, tag = 'internal scratch']
  #allocation2 [shape = 'bf16[18,16,384]{2,1,0:T(16,128)(2,1)}', space=vmem, size = 0x36000, scoped, tag = 'scratch operand']
  %s0 = inlined_call_operand.vmem [shape: f32[2,16,16,128], index: 0, kind: input, shape index: {}, may-alias: {0,3}]
  %s1 = inlined_call_operand.vmem [shape: bf16[3,384,128], index: 1, kind: input, shape index: {}]
  %s2 = inlined_call_operand.vmem [shape: bf16[3,384,128], index: 2, kind: input, shape index: {}]
  %s3 = inlined_call_operand.vmem [shape: f32[2,16,16,128], index: 3, kind: output, shape index: {}, may-alias: {0,3}]
  %s4 = sld [smem:[#allocation0]]
  $region45: #{residual_block_nchw.1} parent=0
    _
  %s6 = ssub.s32 1, %s4
  %s7 = scalar_select 0, %s6, %s4
  loop: start=0, step=1, limit=4
  $region2: #{residual_block_nchw.1} parent=0 // loop_pre_header
    _
  $region3: #{residual_block_nchw.1} parent=0 // loop_header
    %s9 = sphi 0, %s13
    %p10 = scmp.ge.s32.totalorder %s9, 4
    %s19 = sphi 0, %s21
    %s22 = sphi 0, %s19
    %s23 = sphi 0, %s22
    %s39 = sphi 0, %s23
    %s43 = sphi 0, %s43
    %s45 = sphi 0, %s43
    %s46 = sphi 0, %s45
    %s60 = sphi 0, %s46
    %s64 = sphi 0, %s64
    %s66 = sphi 0, %s64
    %s67 = sphi 0, %s66
    %s81 = sphi 0, %s67
    %s87 = sphi 0, %s89
    %s90 = sphi 0, %s87
    %s91 = sphi 0, %s90
    %s107 = sphi 0, %s91
  $region4: #{residual_block_nchw.1} parent=0 // loop_header_branch
    %12 = sbr.rel (%p10) target = $region8
  $region5: #{residual_block_nchw.1} parent=0 // loop_body
    %s14 = ssub.s32 %s9, 1
    %s15 = ssub.s32 %s9, 2
    %s16 = sadd.s32 %s9, 1
    %s17 = ssub.s32 %s9, %s16
    %p18 = scmp.eq.s32.totalorder %s17, 0
    %s20 = sadd.s32 %s19, 1
    %s21 = scalar_select %p18, %s19, %s20
    %p24 = pneg %p18
    %p25 = scmp.eq.s32.totalorder %s9, 1
    %p26 = por %p24, %p25
    %p27 = scmp.ne.s32.totalorder %s19, %s22
    %p28 = scmp.eq.s32.totalorder %s9, 0
    %p29 = por %p27, %p28
    %p30 = scmp.ne.s32.totalorder %s19, %s22
    %p31 = scmp.eq.s32.totalorder %s14, 1
    %p32 = por %p30, %p31
    %p33 = scmp.ne.s32.totalorder %s22, %s23
    %p34 = scmp.eq.s32.totalorder %s14, 0
    %p35 = por %p33, %p34
    %p36 = scmp.ne.s32.totalorder %s22, %s23
    %p37 = scmp.eq.s32.totalorder %s15, 1
    %p38 = por %p36, %p37
    %p40 = scmp.ne.s32.totalorder %s23, %s39
    %p41 = scmp.eq.s32.totalorder %s15, 0
    %p42 = por %p40, %p41
    %s44 = sadd.s32 %s43, 1
    %p47 = scmp.eq.s32.totalorder %s9, 1
    %p48 = scmp.ne.s32.totalorder %s43, %s45
    %p49 = scmp.eq.s32.totalorder %s9, 0
    %p50 = por %p48, %p49
    %p51 = scmp.ne.s32.totalorder %s43, %s45
    %p52 = scmp.eq.s32.totalorder %s14, 1
    %p53 = por %p51, %p52
    %p54 = scmp.ne.s32.totalorder %s45, %s46
    %p55 = scmp.eq.s32.totalorder %s14, 0
    %p56 = por %p54, %p55
    %p57 = scmp.ne.s32.totalorder %s45, %s46
    %p58 = scmp.eq.s32.totalorder %s15, 1
    %p59 = por %p57, %p58
    %p61 = scmp.ne.s32.totalorder %s46, %s60
    %p62 = scmp.eq.s32.totalorder %s15, 0
    %p63 = por %p61, %p62
    %s65 = sadd.s32 %s64, 1
    %p68 = scmp.eq.s32.totalorder %s9, 1
    %p69 = scmp.ne.s32.totalorder %s64, %s66
    %p70 = scmp.eq.s32.totalorder %s9, 0
    %p71 = por %p69, %p70
    %p72 = scmp.ne.s32.totalorder %s64, %s66
    %p73 = scmp.eq.s32.totalorder %s14, 1
    %p74 = por %p72, %p73
    %p75 = scmp.ne.s32.totalorder %s66, %s67
    %p76 = scmp.eq.s32.totalorder %s14, 0
    %p77 = por %p75, %p76
    %p78 = scmp.ne.s32.totalorder %s66, %s67
    %p79 = scmp.eq.s32.totalorder %s15, 1
    %p80 = por %p78, %p79
    %p82 = scmp.ne.s32.totalorder %s67, %s81
    %p83 = scmp.eq.s32.totalorder %s15, 0
    %p84 = por %p82, %p83
    %s85 = ssub.s32 %s9, %s16
    %p86 = scmp.eq.s32.totalorder %s85, 0
    %s88 = sadd.s32 %s87, 1
    %s89 = scalar_select %p86, %s87, %s88
    %p92 = pneg %p86
    %p93 = scmp.eq.s32.totalorder %s9, 1
    %p94 = por %p92, %p93
    %p95 = scmp.ne.s32.totalorder %s87, %s90
    %p96 = scmp.eq.s32.totalorder %s9, 0
    %p97 = por %p95, %p96
    %p98 = scmp.ne.s32.totalorder %s87, %s90
    %p99 = scmp.eq.s32.totalorder %s14, 1
    %p100 = por %p98, %p99
    %p101 = scmp.ne.s32.totalorder %s90, %s91
    %p102 = scmp.eq.s32.totalorder %s14, 0
    %p103 = por %p101, %p102
    %p104 = scmp.ne.s32.totalorder %s90, %s91
    %p105 = scmp.eq.s32.totalorder %s15, 1
    %p106 = por %p104, %p105
    %p108 = scmp.ne.s32.totalorder %s91, %s107
    %p109 = scmp.eq.s32.totalorder %s15, 0
    %p110 = por %p108, %p109
    %p111 = scmp.le.s32.totalorder 1, %s9
    %p112 = scmp.lt.s32.totalorder %s9, 3
    %p113 = pnand %p111, %p112
    %p114 = pneg %p113
    // Predicated region
    $region9: #{residual_block_nchw.1} parent=5 // pred_check
      _
    $region10: #{residual_block_nchw.1} parent=5 // pred_check_branch
      %116 = sbr.rel (%p113) target = $region12
    $region11: #{residual_block_nchw.1} parent=5 // pred_region
      %s117 = ssub.s32 %s9, 1
      // Predicated region
      $region13: #{residual_block_nchw.1} parent=11 // pred_check
        %p118 = pneg %p56
      $region14: #{residual_block_nchw.1} parent=11 // pred_check_branch
        %120 = sbr.rel (%p118) target = $region16
      $region15: #{residual_block_nchw.1} parent=11 // pred_region
        _
      $region16: #{residual_block_nchw.1} parent=11 // pred_fallthru
        _
      // Predicated region
      $region17: #{residual_block_nchw.1} parent=11 // pred_check
        %p121 = pneg %p77
      $region18: #{residual_block_nchw.1} parent=11 // pred_check_branch
        %123 = sbr.rel (%p121) target = $region20
      $region19: #{residual_block_nchw.1} parent=11 // pred_region
        _
      $region20: #{residual_block_nchw.1} parent=11 // pred_fallthru
        _
    $region12: #{residual_block_nchw.1} parent=5 // pred_fallthru
      _
    %p124 = scmp.lt.s32.totalorder %s9, 2
    // Predicated region
    $region21: #{residual_block_nchw.1} parent=5 // pred_check
      %p125 = pneg %p124
    $region22: #{residual_block_nchw.1} parent=5 // pred_check_branch
      %127 = sbr.rel (%p125) target = $region24
    $region23: #{residual_block_nchw.1} parent=5 // pred_region
      // Predicated region
      $region25: #{residual_block_nchw.1} parent=23 // pred_check
        %p128 = pneg %p29
      $region26: #{residual_block_nchw.1} parent=23 // pred_check_branch
        %130 = sbr.rel (%p128) target = $region28
      $region27: #{residual_block_nchw.1} parent=23 // pred_region
        %p131 = scmp.lt.s32.totalorder %s9, 1
        %s132 = scalar_select %p131, %s9, 1
        %s133 = smul.addr %s132, 32
        %s134 = smul.addr %s133, 8
        %s135 = scalar_lea.vmem %s0, %s134
      $region28: #{residual_block_nchw.1} parent=23 // pred_fallthru
        _
    $region24: #{residual_block_nchw.1} parent=5 // pred_fallthru
      _
    %p136 = scmp.le.s32.totalorder 1, %s9
    %p137 = scmp.lt.s32.totalorder %s9, 3
    %p138 = pnand %p136, %p137
    %p139 = pneg %p138
    // Predicated region
    $region29: #{residual_block_nchw.1} parent=5 // pred_check
      _
    $region30: #{residual_block_nchw.1} parent=5 // pred_check_branch
      %141 = sbr.rel (%p138) target = $region32
    $region31: #{residual_block_nchw.1} parent=5 // pred_region
      %s142 = ssub.s32 %s9, 1
      %p143 = scmp.lt.s32.totalorder %s14, 1
      %s144 = scalar_select %p143, %s14, 1
      %s145 = smul.addr %s144, 32
      %s146 = smul.addr %s145, 8
      %s147 = scalar_lea.vmem %s0, %s146
      %p148 = pneg %p35
      %p149 = pneg %p32
      %p150 = pneg %p56
      %p151 = pneg %p53
      %p152 = pneg %p77
      %p153 = pneg %p74
      %p154 = pneg %p103
      %p155 = pneg %p100
      %p156 = scmp.lt.s32.totalorder %s14, 1
      %s157 = scalar_select %p156, %s14, 1
      %s158 = smul.addr %s157, 32
      %s159 = smul.addr %s158, 8
      %s160 = scalar_lea.vmem %s3, %s159
      %p161 = scmp.lt.s32.totalorder %s14, 1
      %s162 = scalar_select %p161, %s14, 1
      %s163 = smul.addr %s162, 32
      %s164 = smul.addr %s163, 8
      %s165 = scalar_lea.vmem %s0, %s164
      %p166 = scmp.lt.s32.totalorder %s14, 1
      %s167 = scalar_select %p166, %s14, 1
      %s168 = smul.addr %s167, 32
      %s169 = smul.addr %s168, 8
      %s170 = scalar_lea.vmem %s3, %s169
      %v172 = vld [vmem:[%s165] sm:$0xff]
      %v173 = vld [vmem:[%s165 + $0x8] sm:$0xff]
      %v174 = vld [vmem:[%s165 + $0x10] sm:$0xff]
      %v175 = vld [vmem:[%s165 + $0x18] sm:$0xff]
      %v176 = vld [vmem:[%s165 + $0x20] sm:$0xff]
      %v177 = vld [vmem:[%s165 + $0x28] sm:$0xff]
      %v178 = vld [vmem:[%s165 + $0x30] sm:$0xff]
      %v179 = vld [vmem:[%s165 + $0x38] sm:$0xff]
      %v180 = vld [vmem:[%s165 + $0x40] sm:$0xff]
      %v181 = vld [vmem:[%s165 + $0x48] sm:$0xff]
      %v182 = vld [vmem:[%s165 + $0x50] sm:$0xff]
      %v183 = vld [vmem:[%s165 + $0x58] sm:$0xff]
      %v184 = vld [vmem:[%s165 + $0x60] sm:$0xff]
      %v185 = vld [vmem:[%s165 + $0x68] sm:$0xff]
      %v186 = vld [vmem:[%s165 + $0x70] sm:$0xff]
      %v187 = vld [vmem:[%s165 + $0x78] sm:$0xff]
      %v188 = vld [vmem:[%s165 + $0x80] sm:$0xff]
      %v189 = vld [vmem:[%s165 + $0x88] sm:$0xff]
      %v190 = vld [vmem:[%s165 + $0x90] sm:$0xff]
      %v191 = vld [vmem:[%s165 + $0x98] sm:$0xff]
      %v192 = vld [vmem:[%s165 + $0xa0] sm:$0xff]
      %v193 = vld [vmem:[%s165 + $0xa8] sm:$0xff]
      %v194 = vld [vmem:[%s165 + $0xb0] sm:$0xff]
      %v195 = vld [vmem:[%s165 + $0xb8] sm:$0xff]
      %v196 = vld [vmem:[%s165 + $0xc0] sm:$0xff]
      %v197 = vld [vmem:[%s165 + $0xc8] sm:$0xff]
      %v198 = vld [vmem:[%s165 + $0xd0] sm:$0xff]
      %v199 = vld [vmem:[%s165 + $0xd8] sm:$0xff]
      %v200 = vld [vmem:[%s165 + $0xe0] sm:$0xff]
      %v201 = vld [vmem:[%s165 + $0xe8] sm:$0xff]
      %v202 = vld [vmem:[%s165 + $0xf0] sm:$0xff]
      %v203 = vld [vmem:[%s165 + $0xf8] sm:$0xff]
      %v204 = vrot.slane %v172, 7
      %v205 = vrot.slane %v174, 7
      %v206 = vrot.slane %v176, 7
      %v207 = vrot.slane %v178, 7
      %v208 = vrot.slane %v180, 7
      %v209 = vrot.slane %v182, 7
      %v210 = vrot.slane %v184, 7
      %v211 = vrot.slane %v186, 7
      %v212 = vrot.slane %v188, 7
      %v213 = vrot.slane %v190, 7
      %v214 = vrot.slane %v192, 7
      %v215 = vrot.slane %v194, 7
      %v216 = vrot.slane %v196, 7
      %v217 = vrot.slane %v198, 7
      %v218 = vrot.slane %v200, 7
      %v219 = vrot.slane %v202, 7
      %v220 = vrot.slane %v173, 7
      %v221 = vrot.slane %v175, 7
      %v222 = vrot.slane %v177, 7
      %v223 = vrot.slane %v179, 7
      %v224 = vrot.slane %v181, 7
      %v225 = vrot.slane %v183, 7
      %v226 = vrot.slane %v185, 7
      %v227 = vrot.slane %v187, 7
      %v228 = vrot.slane %v189, 7
      %v229 = vrot.slane %v191, 7
      %v230 = vrot.slane %v193, 7
      %v231 = vrot.slane %v195, 7
      %v232 = vrot.slane %v197, 7
      %v233 = vrot.slane %v199, 7
      %v234 = vrot.slane %v201, 7
      %v235 = vrot.slane %v203, 7
      %v236 = vlaneseq
      %v237 = vshrl.u32 %v236, 7
      %vm238 = vcmp.lt.s32.totalorder %v237, 1
      %v239 = vsel %vm238, %v204, %v220
      %v240 = vsel %vm238, %v205, %v221
      %v241 = vsel %vm238, %v206, %v222
      %v242 = vsel %vm238, %v207, %v223
      %v243 = vsel %vm238, %v208, %v224
      %v244 = vsel %vm238, %v209, %v225
      %v245 = vsel %vm238, %v210, %v226
      %v246 = vsel %vm238, %v211, %v227
      %v247 = vsel %vm238, %v212, %v228
      %v248 = vsel %vm238, %v213, %v229
      %v249 = vsel %vm238, %v214, %v230
      %v250 = vsel %vm238, %v215, %v231
      %v251 = vsel %vm238, %v216, %v232
      %v252 = vsel %vm238, %v217, %v233
      %v253 = vsel %vm238, %v218, %v234
      %v254 = vsel %vm238, %v219, %v235
      %v255 = vsel %vm238, %v220, %v204
      %v256 = vsel %vm238, %v221, %v205
      %v257 = vsel %vm238, %v222, %v206
      %v258 = vsel %vm238, %v223, %v207
      %v259 = vsel %vm238, %v224, %v208
      %v260 = vsel %vm238, %v225, %v209
      %v261 = vsel %vm238, %v226, %v210
      %v262 = vsel %vm238, %v227, %v211
      %v263 = vsel %vm238, %v228, %v212
      %v264 = vsel %vm238, %v229, %v213
      %v265 = vsel %vm238, %v230, %v214
      %v266 = vsel %vm238, %v231, %v215
      %v267 = vsel %vm238, %v232, %v216
      %v268 = vsel %vm238, %v233, %v217
      %v269 = vsel %vm238, %v234, %v218
      %v270 = vsel %vm238, %v235, %v219
      %v271 = vrot.slane %v172, 1
      %v272 = vrot.slane %v174, 1
      %v273 = vrot.slane %v176, 1
      %v274 = vrot.slane %v178, 1
      %v275 = vrot.slane %v180, 1
      %v276 = vrot.slane %v182, 1
      %v277 = vrot.slane %v184, 1
      %v278 = vrot.slane %v186, 1
      %v279 = vrot.slane %v188, 1
      %v280 = vrot.slane %v190, 1
      %v281 = vrot.slane %v192, 1
      %v282 = vrot.slane %v194, 1
      %v283 = vrot.slane %v196, 1
      %v284 = vrot.slane %v198, 1
      %v285 = vrot.slane %v200, 1
      %v286 = vrot.slane %v202, 1
      %v287 = vrot.slane %v173, 1
      %v288 = vrot.slane %v175, 1
      %v289 = vrot.slane %v177, 1
      %v290 = vrot.slane %v179, 1
      %v291 = vrot.slane %v181, 1
      %v292 = vrot.slane %v183, 1
      %v293 = vrot.slane %v185, 1
      %v294 = vrot.slane %v187, 1
      %v295 = vrot.slane %v189, 1
      %v296 = vrot.slane %v191, 1
      %v297 = vrot.slane %v193, 1
      %v298 = vrot.slane %v195, 1
      %v299 = vrot.slane %v197, 1
      %v300 = vrot.slane %v199, 1
      %v301 = vrot.slane %v201, 1
      %v302 = vrot.slane %v203, 1
      %vm303 = vcmp.lt.s32.totalorder %v237, 7
      %v304 = vsel %vm303, %v271, %v287
      %v305 = vsel %vm303, %v272, %v288
      %v306 = vsel %vm303, %v273, %v289
      %v307 = vsel %vm303, %v274, %v290
      %v308 = vsel %vm303, %v275, %v291
      %v309 = vsel %vm303, %v276, %v292
      %v310 = vsel %vm303, %v277, %v293
      %v311 = vsel %vm303, %v278, %v294
      %v312 = vsel %vm303, %v279, %v295
      %v313 = vsel %vm303, %v280, %v296
      %v314 = vsel %vm303, %v281, %v297
      %v315 = vsel %vm303, %v282, %v298
      %v316 = vsel %vm303, %v283, %v299
      %v317 = vsel %vm303, %v284, %v300
      %v318 = vsel %vm303, %v285, %v301
      %v319 = vsel %vm303, %v286, %v302
      %v320 = vsel %vm303, %v287, %v271
      %v321 = vsel %vm303, %v288, %v272
      %v322 = vsel %vm303, %v289, %v273
      %v323 = vsel %vm303, %v290, %v274
      %v324 = vsel %vm303, %v291, %v275
      %v325 = vsel %vm303, %v292, %v276
      %v326 = vsel %vm303, %v293, %v277
      %v327 = vsel %vm303, %v294, %v278
      %v328 = vsel %vm303, %v295, %v279
      %v329 = vsel %vm303, %v296, %v280
      %v330 = vsel %vm303, %v297, %v281
      %v331 = vsel %vm303, %v298, %v282
      %v332 = vsel %vm303, %v299, %v283
      %v333 = vsel %vm303, %v300, %v284
      %v334 = vsel %vm303, %v301, %v285
      %v335 = vsel %vm303, %v302, %v286
      %v336 = vpack.c.bf16 %v239, %v255
      %v337 = vpack.c.bf16 %v240, %v256
      %v338 = vpack.c.bf16 %v241, %v257
      %v339 = vpack.c.bf16 %v242, %v258
      %v340 = vpack.c.bf16 %v243, %v259
      %v341 = vpack.c.bf16 %v244, %v260
      %v342 = vpack.c.bf16 %v245, %v261
      %v343 = vpack.c.bf16 %v246, %v262
      %v344 = vpack.c.bf16 %v247, %v263
      %v345 = vpack.c.bf16 %v248, %v264
      %v346 = vpack.c.bf16 %v249, %v265
      %v347 = vpack.c.bf16 %v250, %v266
      %v348 = vpack.c.bf16 %v251, %v267
      %v349 = vpack.c.bf16 %v252, %v268
      %v350 = vpack.c.bf16 %v253, %v269
      %v351 = vpack.c.bf16 %v254, %v270
      %s352 = scalar_lea.vmem [#allocation2], 24
      %353 = vst [vmem:[%s352] sm:$0xff] %v336
      %354 = vst [vmem:[%s352 + $0x18] sm:$0xff] %v337
      %355 = vst [vmem:[%s352 + $0x30] sm:$0xff] %v338
      %356 = vst [vmem:[%s352 + $0x48] sm:$0xff] %v339
      %357 = vst [vmem:[%s352 + $0x60] sm:$0xff] %v340
      %358 = vst [vmem:[%s352 + $0x78] sm:$0xff] %v341
      %359 = vst [vmem:[%s352 + $0x90] sm:$0xff] %v342
      %360 = vst [vmem:[%s352 + $0xa8] sm:$0xff] %v343
      %361 = vst [vmem:[%s352 + $0xc0] sm:$0xff] %v344
      %362 = vst [vmem:[%s352 + $0xd8] sm:$0xff] %v345
      %363 = vst [vmem:[%s352 + $0xf0] sm:$0xff] %v346
      %364 = vst [vmem:[%s352 + $0x108] sm:$0xff] %v347
      %365 = vst [vmem:[%s352 + $0x120] sm:$0xff] %v348
      %366 = vst [vmem:[%s352 + $0x138] sm:$0xff] %v349
      %367 = vst [vmem:[%s352 + $0x150] sm:$0xff] %v350
      %368 = vst [vmem:[%s352 + $0x168] sm:$0xff] %v351
      %369 = vst [vmem:[#allocation2] sm:$0xff] %v337
      %s370 = scalar_lea.vmem [#allocation2], 408
      %371 = vst [vmem:[%s370] sm:$0xff] %v350
      %v372 = vpack.c.bf16 %v173, %v172
      %v373 = vpack.c.bf16 %v175, %v174
      %v374 = vpack.c.bf16 %v177, %v176
      %v375 = vpack.c.bf16 %v179, %v178
      %v376 = vpack.c.bf16 %v181, %v180
      %v377 = vpack.c.bf16 %v183, %v182
      %v378 = vpack.c.bf16 %v185, %v184
      %v379 = vpack.c.bf16 %v187, %v186
      %v380 = vpack.c.bf16 %v189, %v188
      %v381 = vpack.c.bf16 %v191, %v190
      %v382 = vpack.c.bf16 %v193, %v192
      %v383 = vpack.c.bf16 %v195, %v194
      %v384 = vpack.c.bf16 %v197, %v196
      %v385 = vpack.c.bf16 %v199, %v198
      %v386 = vpack.c.bf16 %v201, %v200
      %v387 = vpack.c.bf16 %v203, %v202
      %388 = vst [vmem:[%s352 + $0x8] sm:$0xff] %v372
      %389 = vst [vmem:[%s352 + $0x20] sm:$0xff] %v373
      %390 = vst [vmem:[%s352 + $0x38] sm:$0xff] %v374
      %391 = vst [vmem:[%s352 + $0x50] sm:$0xff] %v375
      %392 = vst [vmem:[%s352 + $0x68] sm:$0xff] %v376
      %393 = vst [vmem:[%s352 + $0x80] sm:$0xff] %v377
      %394 = vst [vmem:[%s352 + $0x98] sm:$0xff] %v378
      %395 = vst [vmem:[%s352 + $0xb0] sm:$0xff] %v379
      %396 = vst [vmem:[%s352 + $0xc8] sm:$0xff] %v380
      %397 = vst [vmem:[%s352 + $0xe0] sm:$0xff] %v381
      %398 = vst [vmem:[%s352 + $0xf8] sm:$0xff] %v382
      %399 = vst [vmem:[%s352 + $0x110] sm:$0xff] %v383
      %400 = vst [vmem:[%s352 + $0x128] sm:$0xff] %v384
      %401 = vst [vmem:[%s352 + $0x140] sm:$0xff] %v385
      %402 = vst [vmem:[%s352 + $0x158] sm:$0xff] %v386
      %403 = vst [vmem:[%s352 + $0x170] sm:$0xff] %v387
      %404 = vst [vmem:[#allocation2 + $0x8] sm:$0xff] %v373
      %405 = vst [vmem:[%s370 + $0x8] sm:$0xff] %v386
      %v406 = vpack.c.bf16 %v320, %v304
      %v407 = vpack.c.bf16 %v321, %v305
      %v408 = vpack.c.bf16 %v322, %v306
      %v409 = vpack.c.bf16 %v323, %v307
      %v410 = vpack.c.bf16 %v324, %v308
      %v411 = vpack.c.bf16 %v325, %v309
      %v412 = vpack.c.bf16 %v326, %v310
      %v413 = vpack.c.bf16 %v327, %v311
      %v414 = vpack.c.bf16 %v328, %v312
      %v415 = vpack.c.bf16 %v329, %v313
      %v416 = vpack.c.bf16 %v330, %v314
      %v417 = vpack.c.bf16 %v331, %v315
      %v418 = vpack.c.bf16 %v332, %v316
      %v419 = vpack.c.bf16 %v333, %v317
      %v420 = vpack.c.bf16 %v334, %v318
      %v421 = vpack.c.bf16 %v335, %v319
      %422 = vst [vmem:[%s352 + $0x10] sm:$0xff] %v406
      %423 = vst [vmem:[%s352 + $0x28] sm:$0xff] %v407
      %424 = vst [vmem:[%s352 + $0x40] sm:$0xff] %v408
      %425 = vst [vmem:[%s352 + $0x58] sm:$0xff] %v409
      %426 = vst [vmem:[%s352 + $0x70] sm:$0xff] %v410
      %427 = vst [vmem:[%s352 + $0x88] sm:$0xff] %v411
      %428 = vst [vmem:[%s352 + $0xa0] sm:$0xff] %v412
      %429 = vst [vmem:[%s352 + $0xb8] sm:$0xff] %v413
      %430 = vst [vmem:[%s352 + $0xd0] sm:$0xff] %v414
      %431 = vst [vmem:[%s352 + $0xe8] sm:$0xff] %v415
      %432 = vst [vmem:[%s352 + $0x100] sm:$0xff] %v416
      %433 = vst [vmem:[%s352 + $0x118] sm:$0xff] %v417
      %434 = vst [vmem:[%s352 + $0x130] sm:$0xff] %v418
      %435 = vst [vmem:[%s352 + $0x148] sm:$0xff] %v419
      %436 = vst [vmem:[%s352 + $0x160] sm:$0xff] %v420
      %437 = vst [vmem:[%s352 + $0x178] sm:$0xff] %v421
      %438 = vst [vmem:[#allocation2 + $0x10] sm:$0xff] %v407
      %439 = vst [vmem:[%s370 + $0x10] sm:$0xff] %v420
      %v440 = vld [vmem:[#allocation2 + $0x8] sm:$0x1]
      %v441 = vld [vmem:[#allocation2 + $0x20] sm:$0x1]
      %v442 = vld [vmem:[#allocation2 + $0x38] sm:$0x1]
      %v443 = vld [vmem:[#allocation2 + $0x50] sm:$0x1]
      %v444 = vld [vmem:[#allocation2 + $0x68] sm:$0x1]
      %v445 = vld [vmem:[#allocation2 + $0x80] sm:$0x1]
      %v446 = vld [vmem:[#allocation2 + $0x98] sm:$0x1]
      %v447 = vld [vmem:[#allocation2 + $0xb0] sm:$0x1]
      %v448 = vld [vmem:[#allocation2 + $0xc8] sm:$0x1]
      %v449 = vld [vmem:[#allocation2 + $0xe0] sm:$0x1]
      %v450 = vld [vmem:[#allocation2 + $0xf8] sm:$0x1]
      %v451 = vld [vmem:[#allocation2 + $0x110] sm:$0x1]
      %v452 = vld [vmem:[#allocation2 + $0x128] sm:$0x1]
      %v453 = vld [vmem:[#allocation2 + $0x140] sm:$0x1]
      %v454 = vld [vmem:[#allocation2 + $0x158] sm:$0x1]
      %v455 = vld [vmem:[#allocation2 + $0x170] sm:$0x1]
      %v456 = vld [vmem:[#allocation2 + $0x188] sm:$0x1]
      %v457 = vld [vmem:[#allocation2 + $0x1a0] sm:$0x1]
      %v459 = vshrl.u32 %v440, 16
      %v462 = vshrl.u32 %v441, 16
      %v465 = vshrl.u32 %v442, 16
      %v468 = vshrl.u32 %v443, 16
      %v471 = vshrl.u32 %v444, 16
      %v474 = vshrl.u32 %v445, 16
      %v477 = vshrl.u32 %v446, 16
      %v480 = vshrl.u32 %v447, 16
      %v483 = vshrl.u32 %v448, 16
      %v486 = vshrl.u32 %v449, 16
      %v489 = vshrl.u32 %v450, 16
      %v492 = vshrl.u32 %v451, 16
      %v495 = vshrl.u32 %v452, 16
      %v498 = vshrl.u32 %v453, 16
      %v501 = vshrl.u32 %v454, 16
      %v504 = vshrl.u32 %v455, 16
      %v507 = vshrl.u32 %v456, 16
      %v510 = vshrl.u32 %v457, 16
      %vm530 = vcmask 1040384
      %vm531 = vsmask.f32 256
      %vm532 = vmand %vm530, %vm531
      %v533 = vld [vmem:[#allocation2] sm:$0x1]
      %v534 = vsel %vm532, %v459, %v533
      %535 = vst [vmem:[#allocation2] sm:$0x1] %v534
      %v536 = vld [vmem:[#allocation2 + $0x18] sm:$0x1]
      %v537 = vsel %vm532, %v462, %v536
      %538 = vst [vmem:[#allocation2 + $0x18] sm:$0x1] %v537
      %v539 = vld [vmem:[#allocation2 + $0x30] sm:$0x1]
      %v540 = vsel %vm532, %v465, %v539
      %541 = vst [vmem:[#allocation2 + $0x30] sm:$0x1] %v540
      %v542 = vld [vmem:[#allocation2 + $0x48] sm:$0x1]
      %v543 = vsel %vm532, %v468, %v542
      %544 = vst [vmem:[#allocation2 + $0x48] sm:$0x1] %v543
      %v545 = vld [vmem:[#allocation2 + $0x60] sm:$0x1]
      %v546 = vsel %vm532, %v471, %v545
      %547 = vst [vmem:[#allocation2 + $0x60] sm:$0x1] %v546
      %v548 = vld [vmem:[#allocation2 + $0x78] sm:$0x1]
      %v549 = vsel %vm532, %v474, %v548
      %550 = vst [vmem:[#allocation2 + $0x78] sm:$0x1] %v549
      %v551 = vld [vmem:[#allocation2 + $0x90] sm:$0x1]
      %v552 = vsel %vm532, %v477, %v551
      %553 = vst [vmem:[#allocation2 + $0x90] sm:$0x1] %v552
      %v554 = vld [vmem:[#allocation2 + $0xa8] sm:$0x1]
      %v555 = vsel %vm532, %v480, %v554
      %556 = vst [vmem:[#allocation2 + $0xa8] sm:$0x1] %v555
      %v557 = vld [vmem:[#allocation2 + $0xc0] sm:$0x1]
      %v558 = vsel %vm532, %v483, %v557
      %559 = vst [vmem:[#allocation2 + $0xc0] sm:$0x1] %v558
      %v560 = vld [vmem:[#allocation2 + $0xd8] sm:$0x1]
      %v561 = vsel %vm532, %v486, %v560
      %562 = vst [vmem:[#allocation2 + $0xd8] sm:$0x1] %v561
      %v563 = vld [vmem:[#allocation2 + $0xf0] sm:$0x1]
      %v564 = vsel %vm532, %v489, %v563
      %565 = vst [vmem:[#allocation2 + $0xf0] sm:$0x1] %v564
      %v566 = vld [vmem:[#allocation2 + $0x108] sm:$0x1]
      %v567 = vsel %vm532, %v492, %v566
      %568 = vst [vmem:[#allocation2 + $0x108] sm:$0x1] %v567
      %v569 = vld [vmem:[#allocation2 + $0x120] sm:$0x1]
      %v570 = vsel %vm532, %v495, %v569
      %571 = vst [vmem:[#allocation2 + $0x120] sm:$0x1] %v570
      %v572 = vld [vmem:[#allocation2 + $0x138] sm:$0x1]
      %v573 = vsel %vm532, %v498, %v572
      %574 = vst [vmem:[#allocation2 + $0x138] sm:$0x1] %v573
      %v575 = vld [vmem:[#allocation2 + $0x150] sm:$0x1]
      %v576 = vsel %vm532, %v501, %v575
      %577 = vst [vmem:[#allocation2 + $0x150] sm:$0x1] %v576
      %v578 = vld [vmem:[#allocation2 + $0x168] sm:$0x1]
      %v579 = vsel %vm532, %v504, %v578
      %580 = vst [vmem:[#allocation2 + $0x168] sm:$0x1] %v579
      %v581 = vld [vmem:[#allocation2 + $0x180] sm:$0x1]
      %v582 = vsel %vm532, %v507, %v581
      %583 = vst [vmem:[#allocation2 + $0x180] sm:$0x1] %v582
      %v584 = vld [vmem:[#allocation2 + $0x198] sm:$0x1]
      %v585 = vsel %vm532, %v510, %v584
      %586 = vst [vmem:[#allocation2 + $0x198] sm:$0x1] %v585
      %v587 = vld [vmem:[#allocation2 + $0x8] sm:$0x80]
      %v588 = vld [vmem:[#allocation2 + $0x20] sm:$0x80]
      %v589 = vld [vmem:[#allocation2 + $0x38] sm:$0x80]
      %v590 = vld [vmem:[#allocation2 + $0x50] sm:$0x80]
      %v591 = vld [vmem:[#allocation2 + $0x68] sm:$0x80]
      %v592 = vld [vmem:[#allocation2 + $0x80] sm:$0x80]
      %v593 = vld [vmem:[#allocation2 + $0x98] sm:$0x80]
      %v594 = vld [vmem:[#allocation2 + $0xb0] sm:$0x80]
      %v595 = vld [vmem:[#allocation2 + $0xc8] sm:$0x80]
      %v596 = vld [vmem:[#allocation2 + $0xe0] sm:$0x80]
      %v597 = vld [vmem:[#allocation2 + $0xf8] sm:$0x80]
      %v598 = vld [vmem:[#allocation2 + $0x110] sm:$0x80]
      %v599 = vld [vmem:[#allocation2 + $0x128] sm:$0x80]
      %v600 = vld [vmem:[#allocation2 + $0x140] sm:$0x80]
      %v601 = vld [vmem:[#allocation2 + $0x158] sm:$0x80]
      %v602 = vld [vmem:[#allocation2 + $0x170] sm:$0x80]
      %v603 = vld [vmem:[#allocation2 + $0x188] sm:$0x80]
      %v604 = vld [vmem:[#allocation2 + $0x1a0] sm:$0x80]
      %v606 = vshll.u32 %v587, 16
      %v609 = vshll.u32 %v588, 16
      %v612 = vshll.u32 %v589, 16
      %v615 = vshll.u32 %v590, 16
      %v618 = vshll.u32 %v591, 16
      %v621 = vshll.u32 %v592, 16
      %v624 = vshll.u32 %v593, 16
      %v627 = vshll.u32 %v594, 16
      %v630 = vshll.u32 %v595, 16
      %v633 = vshll.u32 %v596, 16
      %v636 = vshll.u32 %v597, 16
      %v639 = vshll.u32 %v598, 16
      %v642 = vshll.u32 %v599, 16
      %v645 = vshll.u32 %v600, 16
      %v648 = vshll.u32 %v601, 16
      %v651 = vshll.u32 %v602, 16
      %v654 = vshll.u32 %v603, 16
      %v657 = vshll.u32 %v604, 16
      %vm677 = vcmask 1047559
      %vm678 = vsmask.f32 7966
      %vm679 = vmand %vm677, %vm678
      %v680 = vld [vmem:[#allocation2 + $0x10] sm:$0x80]
      %v681 = vsel %vm679, %v606, %v680
      %682 = vst [vmem:[#allocation2 + $0x10] sm:$0x80] %v681
      %v683 = vld [vmem:[#allocation2 + $0x28] sm:$0x80]
      %v684 = vsel %vm679, %v609, %v683
      %685 = vst [vmem:[#allocation2 + $0x28] sm:$0x80] %v684
      %v686 = vld [vmem:[#allocation2 + $0x40] sm:$0x80]
      %v687 = vsel %vm679, %v612, %v686
      %688 = vst [vmem:[#allocation2 + $0x40] sm:$0x80] %v687
      %v689 = vld [vmem:[#allocation2 + $0x58] sm:$0x80]
      %v690 = vsel %vm679, %v615, %v689
      %691 = vst [vmem:[#allocation2 + $0x58] sm:$0x80] %v690
      %v692 = vld [vmem:[#allocation2 + $0x70] sm:$0x80]
      %v693 = vsel %vm679, %v618, %v692
      %694 = vst [vmem:[#allocation2 + $0x70] sm:$0x80] %v693
      %v695 = vld [vmem:[#allocation2 + $0x88] sm:$0x80]
      %v696 = vsel %vm679, %v621, %v695
      %697 = vst [vmem:[#allocation2 + $0x88] sm:$0x80] %v696
      %v698 = vld [vmem:[#allocation2 + $0xa0] sm:$0x80]
      %v699 = vsel %vm679, %v624, %v698
      %700 = vst [vmem:[#allocation2 + $0xa0] sm:$0x80] %v699
      %v701 = vld [vmem:[#allocation2 + $0xb8] sm:$0x80]
      %v702 = vsel %vm679, %v627, %v701
      %703 = vst [vmem:[#allocation2 + $0xb8] sm:$0x80] %v702
      %v704 = vld [vmem:[#allocation2 + $0xd0] sm:$0x80]
      %v705 = vsel %vm679, %v630, %v704
      %706 = vst [vmem:[#allocation2 + $0xd0] sm:$0x80] %v705
      %v707 = vld [vmem:[#allocation2 + $0xe8] sm:$0x80]
      %v708 = vsel %vm679, %v633, %v707
      %709 = vst [vmem:[#allocation2 + $0xe8] sm:$0x80] %v708
      %v710 = vld [vmem:[#allocation2 + $0x100] sm:$0x80]
      %v711 = vsel %vm679, %v636, %v710
      %712 = vst [vmem:[#allocation2 + $0x100] sm:$0x80] %v711
      %v713 = vld [vmem:[#allocation2 + $0x118] sm:$0x80]
      %v714 = vsel %vm679, %v639, %v713
      %715 = vst [vmem:[#allocation2 + $0x118] sm:$0x80] %v714
      %v716 = vld [vmem:[#allocation2 + $0x130] sm:$0x80]
      %v717 = vsel %vm679, %v642, %v716
      %718 = vst [vmem:[#allocation2 + $0x130] sm:$0x80] %v717
      %v719 = vld [vmem:[#allocation2 + $0x148] sm:$0x80]
      %v720 = vsel %vm679, %v645, %v719
      %721 = vst [vmem:[#allocation2 + $0x148] sm:$0x80] %v720
      %v722 = vld [vmem:[#allocation2 + $0x160] sm:$0x80]
      %v723 = vsel %vm679, %v648, %v722
      %724 = vst [vmem:[#allocation2 + $0x160] sm:$0x80] %v723
      %v725 = vld [vmem:[#allocation2 + $0x178] sm:$0x80]
      %v726 = vsel %vm679, %v651, %v725
      %727 = vst [vmem:[#allocation2 + $0x178] sm:$0x80] %v726
      %v728 = vld [vmem:[#allocation2 + $0x190] sm:$0x80]
      %v729 = vsel %vm679, %v654, %v728
      %730 = vst [vmem:[#allocation2 + $0x190] sm:$0x80] %v729
      %v731 = vld [vmem:[#allocation2 + $0x1a8] sm:$0x80]
      %v732 = vsel %vm679, %v657, %v731
      %733 = vst [vmem:[#allocation2 + $0x1a8] sm:$0x80] %v732
      %v734 = vld [vmem:[#allocation2] sm:$0xff]
      %v735 = vld [vmem:[#allocation2 + $0x8] sm:$0xff]
      %v736 = vld [vmem:[#allocation2 + $0x10] sm:$0xff]
      %v737 = vld [vmem:[#allocation2 + $0x18] sm:$0xff]
      %v738 = vld [vmem:[#allocation2 + $0x20] sm:$0xff]
      %v739 = vld [vmem:[#allocation2 + $0x28] sm:$0xff]
      %v740 = vld [vmem:[#allocation2 + $0x30] sm:$0xff]
      %v741 = vld [vmem:[#allocation2 + $0x38] sm:$0xff]
      %v742 = vld [vmem:[#allocation2 + $0x40] sm:$0xff]
      %v743 = vld [vmem:[#allocation2 + $0x48] sm:$0xff]
      %v744 = vld [vmem:[#allocation2 + $0x50] sm:$0xff]
      %v745 = vld [vmem:[#allocation2 + $0x58] sm:$0xff]
      %v746 = vld [vmem:[#allocation2 + $0x60] sm:$0xff]
      %v747 = vld [vmem:[#allocation2 + $0x68] sm:$0xff]
      %v748 = vld [vmem:[#allocation2 + $0x70] sm:$0xff]
      %v749 = vld [vmem:[#allocation2 + $0x78] sm:$0xff]
      %v750 = vld [vmem:[#allocation2 + $0x80] sm:$0xff]
      %v751 = vld [vmem:[#allocation2 + $0x88] sm:$0xff]
      %v752 = vld [vmem:[#allocation2 + $0x90] sm:$0xff]
      %v753 = vld [vmem:[#allocation2 + $0x98] sm:$0xff]
      %v754 = vld [vmem:[#allocation2 + $0xa0] sm:$0xff]
      %v755 = vld [vmem:[#allocation2 + $0xa8] sm:$0xff]
      %v756 = vld [vmem:[#allocation2 + $0xb0] sm:$0xff]
      %v757 = vld [vmem:[#allocation2 + $0xb8] sm:$0xff]
      %v758 = vld [vmem:[#allocation2 + $0xc0] sm:$0xff]
      %v759 = vld [vmem:[#allocation2 + $0xc8] sm:$0xff]
      %v760 = vld [vmem:[#allocation2 + $0xd0] sm:$0xff]
      %v761 = vld [vmem:[#allocation2 + $0xd8] sm:$0xff]
      %v762 = vld [vmem:[#allocation2 + $0xe0] sm:$0xff]
      %v763 = vld [vmem:[#allocation2 + $0xe8] sm:$0xff]
      %v764 = vld [vmem:[#allocation2 + $0xf0] sm:$0xff]
      %v765 = vld [vmem:[#allocation2 + $0xf8] sm:$0xff]
      %v766 = vld [vmem:[#allocation2 + $0x100] sm:$0xff]
      %v767 = vld [vmem:[#allocation2 + $0x108] sm:$0xff]
      %v768 = vld [vmem:[#allocation2 + $0x110] sm:$0xff]
      %v769 = vld [vmem:[#allocation2 + $0x118] sm:$0xff]
      %v770 = vld [vmem:[#allocation2 + $0x120] sm:$0xff]
      %v771 = vld [vmem:[#allocation2 + $0x128] sm:$0xff]
      %v772 = vld [vmem:[#allocation2 + $0x130] sm:$0xff]
      %v773 = vld [vmem:[#allocation2 + $0x138] sm:$0xff]
      %v774 = vld [vmem:[#allocation2 + $0x140] sm:$0xff]
      %v775 = vld [vmem:[#allocation2 + $0x148] sm:$0xff]
      %v776 = vld [vmem:[#allocation2 + $0x150] sm:$0xff]
      %v777 = vld [vmem:[#allocation2 + $0x158] sm:$0xff]
      %v778 = vld [vmem:[#allocation2 + $0x160] sm:$0xff]
      %v779 = vld [vmem:[#allocation2 + $0x168] sm:$0xff]
      %v780 = vld [vmem:[#allocation2 + $0x170] sm:$0xff]
      %v781 = vld [vmem:[#allocation2 + $0x178] sm:$0xff]
      %v782 = vld [vmem:[%s1] sm:$0xf]
      %v783 = vld [vmem:[%s1 + $0x4] sm:$0xf]
      %v784 = vld [vmem:[%s1 + $0x8] sm:$0xf]
      %v785 = vld [vmem:[%s1 + $0xc] sm:$0xf]
      %v786 = vld [vmem:[%s1 + $0x10] sm:$0xf]
      %v787 = vld [vmem:[%s1 + $0x14] sm:$0xf]
      %v788 = vld [vmem:[%s1 + $0x18] sm:$0xf]
      %v789 = vld [vmem:[%s1 + $0x1c] sm:$0xf]
      %v790 = vld [vmem:[%s1 + $0x20] sm:$0xf]
      %v791 = vld [vmem:[%s1 + $0x24] sm:$0xf]
      %v792 = vld [vmem:[%s1 + $0x28] sm:$0xf]
      %v793 = vld [vmem:[%s1 + $0x2c] sm:$0xf]
      %v794 = vld [vmem:[%s1 + $0x30] sm:$0xf]
      %v795 = vld [vmem:[%s1 + $0x34] sm:$0xf]
      %v796 = vld [vmem:[%s1 + $0x38] sm:$0xf]
      %v797 = vld [vmem:[%s1 + $0x3c] sm:$0xf]
      %v798 = vld [vmem:[%s1 + $0x40] sm:$0xf]
      %v799 = vld [vmem:[%s1 + $0x44] sm:$0xf]
      %v800 = vld [vmem:[%s1 + $0x48] sm:$0xf]
      %v801 = vld [vmem:[%s1 + $0x4c] sm:$0xf]
      %v802 = vld [vmem:[%s1 + $0x50] sm:$0xf]
      %v803 = vld [vmem:[%s1 + $0x54] sm:$0xf]
      %v804 = vld [vmem:[%s1 + $0x58] sm:$0xf]
      %v805 = vld [vmem:[%s1 + $0x5c] sm:$0xf]
      %v806 = vld [vmem:[%s1 + $0x60] sm:$0xf]
      %v807 = vld [vmem:[%s1 + $0x64] sm:$0xf]
      %v808 = vld [vmem:[%s1 + $0x68] sm:$0xf]
      %v809 = vld [vmem:[%s1 + $0x6c] sm:$0xf]
      %v810 = vld [vmem:[%s1 + $0x70] sm:$0xf]
      %v811 = vld [vmem:[%s1 + $0x74] sm:$0xf]
      %v812 = vld [vmem:[%s1 + $0x78] sm:$0xf]
      %v813 = vld [vmem:[%s1 + $0x7c] sm:$0xf]
      %v814 = vld [vmem:[%s1 + $0x80] sm:$0xf]
      %v815 = vld [vmem:[%s1 + $0x84] sm:$0xf]
      %v816 = vld [vmem:[%s1 + $0x88] sm:$0xf]
      %v817 = vld [vmem:[%s1 + $0x8c] sm:$0xf]
      %v818 = vld [vmem:[%s1 + $0x90] sm:$0xf]
      %v819 = vld [vmem:[%s1 + $0x94] sm:$0xf]
      %v820 = vld [vmem:[%s1 + $0x98] sm:$0xf]
      %v821 = vld [vmem:[%s1 + $0x9c] sm:$0xf]
      %v822 = vld [vmem:[%s1 + $0xa0] sm:$0xf]
      %v823 = vld [vmem:[%s1 + $0xa4] sm:$0xf]
      %v824 = vld [vmem:[%s1 + $0xa8] sm:$0xf]
      %v825 = vld [vmem:[%s1 + $0xac] sm:$0xf]
      %v826 = vld [vmem:[%s1 + $0xb0] sm:$0xf]
      %v827 = vld [vmem:[%s1 + $0xb4] sm:$0xf]
      %v828 = vld [vmem:[%s1 + $0xb8] sm:$0xf]
      %v829 = vld [vmem:[%s1 + $0xbc] sm:$0xf]
      %v830 = vld [vmem:[%s352] sm:$0xff]
      %v831 = vld [vmem:[%s352 + $0x8] sm:$0xff]
      %v832 = vld [vmem:[%s352 + $0x10] sm:$0xff]
      %v833 = vld [vmem:[%s352 + $0x18] sm:$0xff]
      %v834 = vld [vmem:[%s352 + $0x20] sm:$0xff]
      %v835 = vld [vmem:[%s352 + $0x28] sm:$0xff]
      %v836 = vld [vmem:[%s352 + $0x30] sm:$0xff]
      %v837 = vld [vmem:[%s352 + $0x38] sm:$0xff]
      %v838 = vld [vmem:[%s352 + $0x40] sm:$0xff]
      %v839 = vld [vmem:[%s352 + $0x48] sm:$0xff]
      %v840 = vld [vmem:[%s352 + $0x50] sm:$0xff]
      %v841 = vld [vmem:[%s352 + $0x58] sm:$0xff]
      %v842 = vld [vmem:[%s352 + $0x60] sm:$0xff]
      %v843 = vld [vmem:[%s352 + $0x68] sm:$0xff]
      %v844 = vld [vmem:[%s352 + $0x70] sm:$0xff]
      %v845 = vld [vmem:[%s352 + $0x78] sm:$0xff]
      %v846 = vld [vmem:[%s352 + $0x80] sm:$0xff]
      %v847 = vld [vmem:[%s352 + $0x88] sm:$0xff]
      %v848 = vld [vmem:[%s352 + $0x90] sm:$0xff]
      %v849 = vld [vmem:[%s352 + $0x98] sm:$0xff]
      %v850 = vld [vmem:[%s352 + $0xa0] sm:$0xff]
      %v851 = vld [vmem:[%s352 + $0xa8] sm:$0xff]
      %v852 = vld [vmem:[%s352 + $0xb0] sm:$0xff]
      %v853 = vld [vmem:[%s352 + $0xb8] sm:$0xff]
      %v854 = vld [vmem:[%s352 + $0xc0] sm:$0xff]
      %v855 = vld [vmem:[%s352 + $0xc8] sm:$0xff]
      %v856 = vld [vmem:[%s352 + $0xd0] sm:$0xff]
      %v857 = vld [vmem:[%s352 + $0xd8] sm:$0xff]
      %v858 = vld [vmem:[%s352 + $0xe0] sm:$0xff]
      %v859 = vld [vmem:[%s352 + $0xe8] sm:$0xff]
      %v860 = vld [vmem:[%s352 + $0xf0] sm:$0xff]
      %v861 = vld [vmem:[%s352 + $0xf8] sm:$0xff]
      %v862 = vld [vmem:[%s352 + $0x100] sm:$0xff]
      %v863 = vld [vmem:[%s352 + $0x108] sm:$0xff]
      %v864 = vld [vmem:[%s352 + $0x110] sm:$0xff]
      %v865 = vld [vmem:[%s352 + $0x118] sm:$0xff]
      %v866 = vld [vmem:[%s352 + $0x120] sm:$0xff]
      %v867 = vld [vmem:[%s352 + $0x128] sm:$0xff]
      %v868 = vld [vmem:[%s352 + $0x130] sm:$0xff]
      %v869 = vld [vmem:[%s352 + $0x138] sm:$0xff]
      %v870 = vld [vmem:[%s352 + $0x140] sm:$0xff]
      %v871 = vld [vmem:[%s352 + $0x148] sm:$0xff]
      %v872 = vld [vmem:[%s352 + $0x150] sm:$0xff]
      %v873 = vld [vmem:[%s352 + $0x158] sm:$0xff]
      %v874 = vld [vmem:[%s352 + $0x160] sm:$0xff]
      %v875 = vld [vmem:[%s352 + $0x168] sm:$0xff]
      %v876 = vld [vmem:[%s352 + $0x170] sm:$0xff]
      %v877 = vld [vmem:[%s352 + $0x178] sm:$0xff]
      %s878 = scalar_lea.vmem %s1, 192
      %v879 = vld [vmem:[%s878] sm:$0xf]
      %v880 = vld [vmem:[%s878 + $0x4] sm:$0xf]
      %v881 = vld [vmem:[%s878 + $0x8] sm:$0xf]
      %v882 = vld [vmem:[%s878 + $0xc] sm:$0xf]
      %v883 = vld [vmem:[%s878 + $0x10] sm:$0xf]
      %v884 = vld [vmem:[%s878 + $0x14] sm:$0xf]
      %v885 = vld [vmem:[%s878 + $0x18] sm:$0xf]
      %v886 = vld [vmem:[%s878 + $0x1c] sm:$0xf]
      %v887 = vld [vmem:[%s878 + $0x20] sm:$0xf]
      %v888 = vld [vmem:[%s878 + $0x24] sm:$0xf]
      %v889 = vld [vmem:[%s878 + $0x28] sm:$0xf]
      %v890 = vld [vmem:[%s878 + $0x2c] sm:$0xf]
      %v891 = vld [vmem:[%s878 + $0x30] sm:$0xf]
      %v892 = vld [vmem:[%s878 + $0x34] sm:$0xf]
      %v893 = vld [vmem:[%s878 + $0x38] sm:$0xf]
      %v894 = vld [vmem:[%s878 + $0x3c] sm:$0xf]
      %v895 = vld [vmem:[%s878 + $0x40] sm:$0xf]
      %v896 = vld [vmem:[%s878 + $0x44] sm:$0xf]
      %v897 = vld [vmem:[%s878 + $0x48] sm:$0xf]
      %v898 = vld [vmem:[%s878 + $0x4c] sm:$0xf]
      %v899 = vld [vmem:[%s878 + $0x50] sm:$0xf]
      %v900 = vld [vmem:[%s878 + $0x54] sm:$0xf]
      %v901 = vld [vmem:[%s878 + $0x58] sm:$0xf]
      %v902 = vld [vmem:[%s878 + $0x5c] sm:$0xf]
      %v903 = vld [vmem:[%s878 + $0x60] sm:$0xf]
      %v904 = vld [vmem:[%s878 + $0x64] sm:$0xf]
      %v905 = vld [vmem:[%s878 + $0x68] sm:$0xf]
      %v906 = vld [vmem:[%s878 + $0x6c] sm:$0xf]
      %v907 = vld [vmem:[%s878 + $0x70] sm:$0xf]
      %v908 = vld [vmem:[%s878 + $0x74] sm:$0xf]
      %v909 = vld [vmem:[%s878 + $0x78] sm:$0xf]
      %v910 = vld [vmem:[%s878 + $0x7c] sm:$0xf]
      %v911 = vld [vmem:[%s878 + $0x80] sm:$0xf]
      %v912 = vld [vmem:[%s878 + $0x84] sm:$0xf]
      %v913 = vld [vmem:[%s878 + $0x88] sm:$0xf]
      %v914 = vld [vmem:[%s878 + $0x8c] sm:$0xf]
      %v915 = vld [vmem:[%s878 + $0x90] sm:$0xf]
      %v916 = vld [vmem:[%s878 + $0x94] sm:$0xf]
      %v917 = vld [vmem:[%s878 + $0x98] sm:$0xf]
      %v918 = vld [vmem:[%s878 + $0x9c] sm:$0xf]
      %v919 = vld [vmem:[%s878 + $0xa0] sm:$0xf]
      %v920 = vld [vmem:[%s878 + $0xa4] sm:$0xf]
      %v921 = vld [vmem:[%s878 + $0xa8] sm:$0xf]
      %v922 = vld [vmem:[%s878 + $0xac] sm:$0xf]
      %v923 = vld [vmem:[%s878 + $0xb0] sm:$0xf]
      %v924 = vld [vmem:[%s878 + $0xb4] sm:$0xf]
      %v925 = vld [vmem:[%s878 + $0xb8] sm:$0xf]
      %v926 = vld [vmem:[%s878 + $0xbc] sm:$0xf]
      %v975 = vunpack.c.l.b16 %v879
      %v976 = vunpack.c.l.b16 %v880
      %v977 = vunpack.c.l.b16 %v881
      %v978 = vunpack.c.l.b16 %v882
      %v979 = vunpack.c.l.b16 %v883
      %v980 = vunpack.c.l.b16 %v884
      %v981 = vunpack.c.l.b16 %v885
      %v982 = vunpack.c.l.b16 %v886
      %v983 = vunpack.c.l.b16 %v887
      %v984 = vunpack.c.l.b16 %v888
      %v985 = vunpack.c.l.b16 %v889
      %v986 = vunpack.c.l.b16 %v890
      %v987 = vunpack.c.l.b16 %v891
      %v988 = vunpack.c.l.b16 %v892
      %v989 = vunpack.c.l.b16 %v893
      %v990 = vunpack.c.l.b16 %v894
      %v991 = vunpack.c.l.b16 %v895
      %v992 = vunpack.c.l.b16 %v896
      %v993 = vunpack.c.l.b16 %v897
      %v994 = vunpack.c.l.b16 %v898
      %v995 = vunpack.c.l.b16 %v899
      %v996 = vunpack.c.l.b16 %v900
      %v997 = vunpack.c.l.b16 %v901
      %v998 = vunpack.c.l.b16 %v902
      %v999 = vunpack.c.l.b16 %v903
      %v1000 = vunpack.c.l.b16 %v904
      %v1001 = vunpack.c.l.b16 %v905
      %v1002 = vunpack.c.l.b16 %v906
      %v1003 = vunpack.c.l.b16 %v907
      %v1004 = vunpack.c.l.b16 %v908
      %v1005 = vunpack.c.l.b16 %v909
      %v1006 = vunpack.c.l.b16 %v910
      %v1007 = vunpack.c.l.b16 %v911
      %v1008 = vunpack.c.l.b16 %v912
      %v1009 = vunpack.c.l.b16 %v913
      %v1010 = vunpack.c.l.b16 %v914
      %v1011 = vunpack.c.l.b16 %v915
      %v1012 = vunpack.c.l.b16 %v916
      %v1013 = vunpack.c.l.b16 %v917
      %v1014 = vunpack.c.l.b16 %v918
      %v1015 = vunpack.c.l.b16 %v919
      %v1016 = vunpack.c.l.b16 %v920
      %v1017 = vunpack.c.l.b16 %v921
      %v1018 = vunpack.c.l.b16 %v922
      %v1019 = vunpack.c.l.b16 %v923
      %v1020 = vunpack.c.l.b16 %v924
      %v1021 = vunpack.c.l.b16 %v925
      %v1022 = vunpack.c.l.b16 %v926
      %v1023 = vpack.c.b16 %v976, %v975
      %v1024 = vpack.c.b16 %v978, %v977
      %v1025 = vpack.c.b16 %v980, %v979
      %v1026 = vpack.c.b16 %v982, %v981
      %v1027 = vpack.c.b16 %v984, %v983
      %v1028 = vpack.c.b16 %v986, %v985
      %v1029 = vpack.c.b16 %v988, %v987
      %v1030 = vpack.c.b16 %v990, %v989
      %v1031 = vpack.c.b16 %v992, %v991
      %v1032 = vpack.c.b16 %v994, %v993
      %v1033 = vpack.c.b16 %v996, %v995
      %v1034 = vpack.c.b16 %v998, %v997
      %v1035 = vpack.c.b16 %v1000, %v999
      %v1036 = vpack.c.b16 %v1002, %v1001
      %v1037 = vpack.c.b16 %v1004, %v1003
      %v1038 = vpack.c.b16 %v1006, %v1005
      %v1039 = vpack.c.b16 %v1008, %v1007
      %v1040 = vpack.c.b16 %v1010, %v1009
      %v1041 = vpack.c.b16 %v1012, %v1011
      %v1042 = vpack.c.b16 %v1014, %v1013
      %v1043 = vpack.c.b16 %v1016, %v1015
      %v1044 = vpack.c.b16 %v1018, %v1017
      %v1045 = vpack.c.b16 %v1020, %v1019
      %v1046 = vpack.c.b16 %v1022, %v1021
      %1071 = vmatprep.subr.bf16.mxu0 0
      %1072 = vmatpush1.bf16.msra.mxu0 %v1023
      %1073 = vmatprep.subr.bf16.mxu0 0
      %1074 = vmatpush1.bf16.msra.mxu0 %v1024
      %1075 = vmatprep.subr.bf16.mxu0 0
      %1076 = vmatpush1.bf16.msra.mxu0 %v1025
      %1077 = vmatprep.subr.bf16.mxu0 0
      %1078 = vmatpush1.bf16.msra.mxu0 %v1026
      %1079 = vmatprep.subr.bf16.mxu0 0
      %1080 = vmatpush1.bf16.msra.mxu0 %v1027
      %1081 = vmatprep.subr.bf16.mxu0 0
      %1082 = vmatpush1.bf16.msra.mxu0 %v1028
      %1083 = vmatprep.subr.bf16.mxu0 0
      %1084 = vmatpush1.bf16.msra.mxu0 %v1029
      %1085 = vmatprep.subr.bf16.mxu0 0
      %1086 = vmatpush1.bf16.msra.mxu0 %v1030
      %1087 = vmatprep.subr.bf16.mxu0 0
      %1088 = vmatpush1.bf16.msra.mxu0 %v1031
      %1089 = vmatprep.subr.bf16.mxu0 0
      %1090 = vmatpush1.bf16.msra.mxu0 %v1032
      %1091 = vmatprep.subr.bf16.mxu0 0
      %1092 = vmatpush1.bf16.msra.mxu0 %v1033
      %1093 = vmatprep.subr.bf16.mxu0 0
      %1094 = vmatpush1.bf16.msra.mxu0 %v1034
      %1095 = vmatprep.subr.bf16.mxu0 0
      %1096 = vmatpush1.bf16.msra.mxu0 %v1035
      %1097 = vmatprep.subr.bf16.mxu0 0
      %1098 = vmatpush1.bf16.msra.mxu0 %v1036
      %1099 = vmatprep.subr.bf16.mxu0 0
      %1100 = vmatpush1.bf16.msra.mxu0 %v1037
      %1101 = vmatprep.subr.bf16.mxu0 0
      %1102 = vmatpush1.bf16.msra.mxu0 %v1038
      %1103 = vmatprep.mubr.bf16.mxu0 %v831
      %1104 = vmatmul.mubr.bf16.gmra.mrb[0].mxu0 %v830
      %v1105 = vpop.f32.mrb[0].mxu0
      %v1106 = vadd.f32 0.0, %v1105
      %v1107 = vpop.f32.mrb[0].mxu0
      %v1108 = vpop.f32.mrb[0].mxu0
      %v1109 = vadd.f32 0.0, %v1108
      %v1110 = vpop.f32.mrb[0].mxu0
      %1111 = vmatprep.mubr.bf16.mxu0 %v834
      %1112 = vmatmul.mubr.bf16.gmra.mrb[0].mxu0 %v833
      %v1113 = vpop.f32.mrb[0].mxu0
      %v1114 = vadd.f32 0.0, %v1113
      %v1115 = vpop.f32.mrb[0].mxu0
      %v1116 = vpop.f32.mrb[0].mxu0
      %v1117 = vadd.f32 0.0, %v1116
      %v1118 = vpop.f32.mrb[0].mxu0
      %1119 = vmatprep.mubr.bf16.mxu0 %v837
      %1120 = vmatmul.mubr.bf16.gmra.mrb[0].mxu0 %v836
      %v1121 = vpop.f32.mrb[0].mxu0
      %v1122 = vadd.f32 0.0, %v1121
      %v1123 = vpop.f32.mrb[0].mxu0
      %v1124 = vpop.f32.mrb[0].mxu0
      %v1125 = vadd.f32 0.0, %v1124
      %v1126 = vpop.f32.mrb[0].mxu0
      %1127 = vmatprep.mubr.bf16.mxu0 %v840
      %1128 = vmatmul.mubr.bf16.gmra.mrb[0].mxu0 %v839
      %v1129 = vpop.f32.mrb[0].mxu0
      %v1130 = vadd.f32 0.0, %v1129
      %v1131 = vpop.f32.mrb[0].mxu0
      %v1132 = vpop.f32.mrb[0].mxu0
      %v1133 = vadd.f32 0.0, %v1132
      %v1134 = vpop.f32.mrb[0].mxu0
      %1135 = vmatprep.mubr.bf16.mxu0 %v843
      %1136 = vmatmul.mubr.bf16.gmra.mrb[0].mxu0 %v842
      %v1137 = vpop.f32.mrb[0].mxu0
      %v1138 = vadd.f32 0.0, %v1137
      %v1139 = vpop.f32.mrb[0].mxu0
      %v1140 = vpop.f32.mrb[0].mxu0
      %v1141 = vadd.f32 0.0, %v1140
      %v1142 = vpop.f32.mrb[0].mxu0
      %1143 = vmatprep.mubr.bf16.mxu0 %v846
      %1144 = vmatmul.mubr.bf16.gmra.mrb[0].mxu0 %v845
      %v1145 = vpop.f32.mrb[0].mxu0
      %v1146 = vadd.f32 0.0, %v1145
      %v1147 = vpop.f32.mrb[0].mxu0
      %v1148 = vpop.f32.mrb[0].mxu0
      %v1149 = vadd.f32 0.0, %v1148
      %v1150 = vpop.f32.mrb[0].mxu0
      %1151 = vmatprep.mubr.bf16.mxu0 %v849
      %1152 = vmatmul.mubr.bf16.gmra.mrb[0].mxu0 %v848
      %v1153 = vpop.f32.mrb[0].mxu0
      %v1154 = vadd.f32 0.0, %v1153
      %v1155 = vpop.f32.mrb[0].mxu0
      %v1156 = vpop.f32.mrb[0].mxu0
      %v1157 = vadd.f32 0.0, %v1156
      %v1158 = vpop.f32.mrb[0].mxu0
      %1159 = vmatprep.mubr.bf16.mxu0 %v852
      %1160 = vmatmul.mubr.bf16.gmra.mrb[0].mxu0 %v851
      %v1161 = vpop.f32.mrb[0].mxu0
      %v1162 = vadd.f32 0.0, %v1161
      %v1163 = vpop.f32.mrb[0].mxu0
      %v1164 = vpop.f32.mrb[0].mxu0
      %v1165 = vadd.f32 0.0, %v1164
      %v1166 = vpop.f32.mrb[0].mxu0
      %1167 = vmatprep.mubr.bf16.mxu0 %v855
      %1168 = vmatmul.mubr.bf16.gmra.mrb[0].mxu0 %v854
      %v1169 = vpop.f32.mrb[0].mxu0
      %v1170 = vadd.f32 0.0, %v1169
      %v1171 = vpop.f32.mrb[0].mxu0
      %v1172 = vpop.f32.mrb[0].mxu0
      %v1173 = vadd.f32 0.0, %v1172
      %v1174 = vpop.f32.mrb[0].mxu0
      %1175 = vmatprep.mubr.bf16.mxu0 %v858
      %1176 = vmatmul.mubr.bf16.gmra.mrb[0].mxu0 %v857
      %v1177 = vpop.f32.mrb[0].mxu0
      %v1178 = vadd.f32 0.0, %v1177
      %v1179 = vpop.f32.mrb[0].mxu0
      %v1180 = vpop.f32.mrb[0].mxu0
      %v1181 = vadd.f32 0.0, %v1180
      %v1182 = vpop.f32.mrb[0].mxu0
      %1183 = vmatprep.mubr.bf16.mxu0 %v861
      %1184 = vmatmul.mubr.bf16.gmra.mrb[0].mxu0 %v860
      %v1185 = vpop.f32.mrb[0].mxu0
      %v1186 = vadd.f32 0.0, %v1185
      %v1187 = vpop.f32.mrb[0].mxu0
      %v1188 = vpop.f32.mrb[0].mxu0
      %v1189 = vadd.f32 0.0, %v1188
      %v1190 = vpop.f32.mrb[0].mxu0
      %1191 = vmatprep.mubr.bf16.mxu0 %v864
      %1192 = vmatmul.mubr.bf16.gmra.mrb[0].mxu0 %v863
      %v1193 = vpop.f32.mrb[0].mxu0
      %v1194 = vadd.f32 0.0, %v1193
      %v1195 = vpop.f32.mrb[0].mxu0
      %v1196 = vpop.f32.mrb[0].mxu0
      %v1197 = vadd.f32 0.0, %v1196
      %v1198 = vpop.f32.mrb[0].mxu0
      %1199 = vmatprep.mubr.bf16.mxu0 %v867
      %1200 = vmatmul.mubr.bf16.gmra.mrb[0].mxu0 %v866
      %v1201 = vpop.f32.mrb[0].mxu0
      %v1202 = vadd.f32 0.0, %v1201
      %v1203 = vpop.f32.mrb[0].mxu0
      %v1204 = vpop.f32.mrb[0].mxu0
      %v1205 = vadd.f32 0.0, %v1204
      %v1206 = vpop.f32.mrb[0].mxu0
      %1207 = vmatprep.mubr.bf16.mxu0 %v870
      %1208 = vmatmul.mubr.bf16.gmra.mrb[0].mxu0 %v869
      %v1209 = vpop.f32.mrb[0].mxu0
      %v1210 = vadd.f32 0.0, %v1209
      %v1211 = vpop.f32.mrb[0].mxu0
      %v1212 = vpop.f32.mrb[0].mxu0
      %v1213 = vadd.f32 0.0, %v1212
      %v1214 = vpop.f32.mrb[0].mxu0
      %1215 = vmatprep.mubr.bf16.mxu0 %v873
      %1216 = vmatmul.mubr.bf16.gmra.mrb[0].mxu0 %v872
      %v1217 = vpop.f32.mrb[0].mxu0
      %v1218 = vadd.f32 0.0, %v1217
      %v1219 = vpop.f32.mrb[0].mxu0
      %v1220 = vpop.f32.mrb[0].mxu0
      %v1221 = vadd.f32 0.0, %v1220
      %v1222 = vpop.f32.mrb[0].mxu0
      %1223 = vmatprep.mubr.bf16.mxu0 %v876
      %1224 = vmatmul.mubr.bf16.gmra.mrb[0].mxu0 %v875
      %v1225 = vpop.f32.mrb[0].mxu0
      %v1226 = vadd.f32 0.0, %v1225
      %v1227 = vpop.f32.mrb[0].mxu0
      %v1228 = vpop.f32.mrb[0].mxu0
      %v1229 = vadd.f32 0.0, %v1228
      %v1230 = vpop.f32.mrb[0].mxu0
      %1231 = vdwg.mxu0
      %1232 = vmatprep.subr.bf16.mxu0 0
      %1233 = vmatpush1.bf16.msra.mxu0 %v1039
      %1234 = vmatprep.subr.bf16.mxu0 0
      %1235 = vmatpush1.bf16.msra.mxu0 %v1040
      %1236 = vmatprep.subr.bf16.mxu0 0
      %1237 = vmatpush1.bf16.msra.mxu0 %v1041
      %1238 = vmatprep.subr.bf16.mxu0 0
      %1239 = vmatpush1.bf16.msra.mxu0 %v1042
      %1240 = vmatprep.subr.bf16.mxu0 0
      %1241 = vmatpush1.bf16.msra.mxu0 %v1043
      %1242 = vmatprep.subr.bf16.mxu0 0
      %1243 = vmatpush1.bf16.msra.mxu0 %v1044
      %1244 = vmatprep.subr.bf16.mxu0 0
      %1245 = vmatpush1.bf16.msra.mxu0 %v1045
      %1246 = vmatprep.subr.bf16.mxu0 0
      %1247 = vmatpush1.bf16.msra.mxu0 %v1046
      %1248 = vmatprep.subr.bf16.mxu0 0
      %1249 = vmatpush1.bf16.msra.mxu0 0
      %1250 = vmatprep.subr.bf16.mxu0 0
      %1251 = vmatpush1.bf16.msra.mxu0 0
      %1252 = vmatprep.subr.bf16.mxu0 0
      %1253 = vmatpush1.bf16.msra.mxu0 0
      %1254 = vmatprep.subr.bf16.mxu0 0
      %1255 = vmatpush1.bf16.msra.mxu0 0
      %1256 = vmatprep.subr.bf16.mxu0 0
      %1257 = vmatpush1.bf16.msra.mxu0 0
      %1258 = vmatprep.subr.bf16.mxu0 0
      %1259 = vmatpush1.bf16.msra.mxu0 0
      %1260 = vmatprep.subr.bf16.mxu0 0
      %1261 = vmatpush1.bf16.msra.mxu0 0
      %1262 = vmatprep.subr.bf16.mxu0 0
      %1263 = vmatpush1.bf16.msra.mxu0 0
      %1264 = vmatprep.mubr.bf16.mxu0 0
      %1265 = vmatmul.mubr.bf16.gmra.mrb[0].mxu0 %v832
      %v1266 = vpop.f32.mrb[0].mxu0
      %v1267 = vadd.f32 %v1106, %v1266
      %v1268 = vpop.f32.mrb[0].mxu0
      %v1269 = vpop.f32.mrb[0].mxu0
      %v1270 = vadd.f32 %v1109, %v1269
      %v1271 = vpop.f32.mrb[0].mxu0
      %1272 = vmatprep.mubr.bf16.mxu0 0
      %1273 = vmatmul.mubr.bf16.gmra.mrb[0].mxu0 %v835
      %v1274 = vpop.f32.mrb[0].mxu0
      %v1275 = vadd.f32 %v1114, %v1274
      %v1276 = vpop.f32.mrb[0].mxu0
      %v1277 = vpop.f32.mrb[0].mxu0
      %v1278 = vadd.f32 %v1117, %v1277
      %v1279 = vpop.f32.mrb[0].mxu0
      %1280 = vmatprep.mubr.bf16.mxu0 0
      %1281 = vmatmul.mubr.bf16.gmra.mrb[0].mxu0 %v838
      %v1282 = vpop.f32.mrb[0].mxu0
      %v1283 = vadd.f32 %v1122, %v1282
      %v1284 = vpop.f32.mrb[0].mxu0
      %v1285 = vpop.f32.mrb[0].mxu0
      %v1286 = vadd.f32 %v1125, %v1285
      %v1287 = vpop.f32.mrb[0].mxu0
      %1288 = vmatprep.mubr.bf16.mxu0 0
      %1289 = vmatmul.mubr.bf16.gmra.mrb[0].mxu0 %v841
      %v1290 = vpop.f32.mrb[0].mxu0
      %v1291 = vadd.f32 %v1130, %v1290
      %v1292 = vpop.f32.mrb[0].mxu0
      %v1293 = vpop.f32.mrb[0].mxu0
      %v1294 = vadd.f32 %v1133, %v1293
      %v1295 = vpop.f32.mrb[0].mxu0
      %1296 = vmatprep.mubr.bf16.mxu0 0
      %1297 = vmatmul.mubr.bf16.gmra.mrb[0].mxu0 %v844
      %v1298 = vpop.f32.mrb[0].mxu0
      %v1299 = vadd.f32 %v1138, %v1298
      %v1300 = vpop.f32.mrb[0].mxu0
      %v1301 = vpop.f32.mrb[0].mxu0
      %v1302 = vadd.f32 %v1141, %v1301
      %v1303 = vpop.f32.mrb[0].mxu0
      %1304 = vmatprep.mubr.bf16.mxu0 0
      %1305 = vmatmul.mubr.bf16.gmra.mrb[0].mxu0 %v847
      %v1306 = vpop.f32.mrb[0].mxu0
      %v1307 = vadd.f32 %v1146, %v1306
      %v1308 = vpop.f32.mrb[0].mxu0
      %v1309 = vpop.f32.mrb[0].mxu0
      %v1310 = vadd.f32 %v1149, %v1309
      %v1311 = vpop.f32.mrb[0].mxu0
      %1312 = vmatprep.mubr.bf16.mxu0 0
      %1313 = vmatmul.mubr.bf16.gmra.mrb[0].mxu0 %v850
      %v1314 = vpop.f32.mrb[0].mxu0
      %v1315 = vadd.f32 %v1154, %v1314
      %v1316 = vpop.f32.mrb[0].mxu0
      %v1317 = vpop.f32.mrb[0].mxu0
      %v1318 = vadd.f32 %v1157, %v1317
      %v1319 = vpop.f32.mrb[0].mxu0
      %1320 = vmatprep.mubr.bf16.mxu0 0
      %1321 = vmatmul.mubr.bf16.gmra.mrb[0].mxu0 %v853
      %v1322 = vpop.f32.mrb[0].mxu0
      %v1323 = vadd.f32 %v1162, %v1322
      %v1324 = vpop.f32.mrb[0].mxu0
      %v1325 = vpop.f32.mrb[0].mxu0
      %v1326 = vadd.f32 %v1165, %v1325
      %v1327 = vpop.f32.mrb[0].mxu0
      %1328 = vmatprep.mubr.bf16.mxu0 0
      %1329 = vmatmul.mubr.bf16.gmra.mrb[0].mxu0 %v856
      %v1330 = vpop.f32.mrb[0].mxu0
      %v1331 = vadd.f32 %v1170, %v1330
      %v1332 = vpop.f32.mrb[0].mxu0
      %v1333 = vpop.f32.mrb[0].mxu0
      %v1334 = vadd.f32 %v1173, %v1333
      %v1335 = vpop.f32.mrb[0].mxu0
      %1336 = vmatprep.mubr.bf16.mxu0 0
      %1337 = vmatmul.mubr.bf16.gmra.mrb[0].mxu0 %v859
      %v1338 = vpop.f32.mrb[0].mxu0
      %v1339 = vadd.f32 %v1178, %v1338
      %v1340 = vpop.f32.mrb[0].mxu0
      %v1341 = vpop.f32.mrb[0].mxu0
      %v1342 = vadd.f32 %v1181, %v1341
      %v1343 = vpop.f32.mrb[0].mxu0
      %1344 = vmatprep.mubr.bf16.mxu0 0
      %1345 = vmatmul.mubr.bf16.gmra.mrb[0].mxu0 %v862
      %v1346 = vpop.f32.mrb[0].mxu0
      %v1347 = vadd.f32 %v1186, %v1346
      %v1348 = vpop.f32.mrb[0].mxu0
      %v1349 = vpop.f32.mrb[0].mxu0
      %v1350 = vadd.f32 %v1189, %v1349
      %v1351 = vpop.f32.mrb[0].mxu0
      %1352 = vmatprep.mubr.bf16.mxu0 0
      %1353 = vmatmul.mubr.bf16.gmra.mrb[0].mxu0 %v865
      %v1354 = vpop.f32.mrb[0].mxu0
      %v1355 = vadd.f32 %v1194, %v1354
      %v1356 = vpop.f32.mrb[0].mxu0
      %v1357 = vpop.f32.mrb[0].mxu0
      %v1358 = vadd.f32 %v1197, %v1357
      %v1359 = vpop.f32.mrb[0].mxu0
      %1360 = vmatprep.mubr.bf16.mxu0 0
      %1361 = vmatmul.mubr.bf16.gmra.mrb[0].mxu0 %v868
      %v1362 = vpop.f32.mrb[0].mxu0
      %v1363 = vadd.f32 %v1202, %v1362
      %v1364 = vpop.f32.mrb[0].mxu0
      %v1365 = vpop.f32.mrb[0].mxu0
      %v1366 = vadd.f32 %v1205, %v1365
      %v1367 = vpop.f32.mrb[0].mxu0
      %1368 = vmatprep.mubr.bf16.mxu0 0
      %1369 = vmatmul.mubr.bf16.gmra.mrb[0].mxu0 %v871
      %v1370 = vpop.f32.mrb[0].mxu0
      %v1371 = vadd.f32 %v1210, %v1370
      %v1372 = vpop.f32.mrb[0].mxu0
      %v1373 = vpop.f32.mrb[0].mxu0
      %v1374 = vadd.f32 %v1213, %v1373
      %v1375 = vpop.f32.mrb[0].mxu0
      %1376 = vmatprep.mubr.bf16.mxu0 0
      %1377 = vmatmul.mubr.bf16.gmra.mrb[0].mxu0 %v874
      %v1378 = vpop.f32.mrb[0].mxu0
      %v1379 = vadd.f32 %v1218, %v1378
      %v1380 = vpop.f32.mrb[0].mxu0
      %v1381 = vpop.f32.mrb[0].mxu0
      %v1382 = vadd.f32 %v1221, %v1381
      %v1383 = vpop.f32.mrb[0].mxu0
      %1384 = vmatprep.mubr.bf16.mxu0 0
      %1385 = vmatmul.mubr.bf16.gmra.mrb[0].mxu0 %v877
      %v1386 = vpop.f32.mrb[0].mxu0
      %v1387 = vadd.f32 %v1226, %v1386
      %v1388 = vpop.f32.mrb[0].mxu0
      %v1389 = vpop.f32.mrb[0].mxu0
      %v1390 = vadd.f32 %v1229, %v1389
      %v1391 = vpop.f32.mrb[0].mxu0
      %1392 = vdwg.mxu0
      %v1441 = vunpack.c.l.b16 %v782
      %v1442 = vunpack.c.l.b16 %v783
      %v1443 = vunpack.c.l.b16 %v784
      %v1444 = vunpack.c.l.b16 %v785
      %v1445 = vunpack.c.l.b16 %v786
      %v1446 = vunpack.c.l.b16 %v787
      %v1447 = vunpack.c.l.b16 %v788
      %v1448 = vunpack.c.l.b16 %v789
      %v1449 = vunpack.c.l.b16 %v790
      %v1450 = vunpack.c.l.b16 %v791
      %v1451 = vunpack.c.l.b16 %v792
      %v1452 = vunpack.c.l.b16 %v793
      %v1453 = vunpack.c.l.b16 %v794
      %v1454 = vunpack.c.l.b16 %v795
      %v1455 = vunpack.c.l.b16 %v796
      %v1456 = vunpack.c.l.b16 %v797
      %v1457 = vunpack.c.l.b16 %v798
      %v1458 = vunpack.c.l.b16 %v799
      %v1459 = vunpack.c.l.b16 %v800
      %v1460 = vunpack.c.l.b16 %v801
      %v1461 = vunpack.c.l.b16 %v802
      %v1462 = vunpack.c.l.b16 %v803
      %v1463 = vunpack.c.l.b16 %v804
      %v1464 = vunpack.c.l.b16 %v805
      %v1465 = vunpack.c.l.b16 %v806
      %v1466 = vunpack.c.l.b16 %v807
      %v1467 = vunpack.c.l.b16 %v808
      %v1468 = vunpack.c.l.b16 %v809
      %v1469 = vunpack.c.l.b16 %v810
      %v1470 = vunpack.c.l.b16 %v811
      %v1471 = vunpack.c.l.b16 %v812
      %v1472 = vunpack.c.l.b16 %v813
      %v1473 = vunpack.c.l.b16 %v814
      %v1474 = vunpack.c.l.b16 %v815
      %v1475 = vunpack.c.l.b16 %v816
      %v1476 = vunpack.c.l.b16 %v817
      %v1477 = vunpack.c.l.b16 %v818
      %v1478 = vunpack.c.l.b16 %v819
      %v1479 = vunpack.c.l.b16 %v820
      %v1480 = vunpack.c.l.b16 %v821
      %v1481 = vunpack.c.l.b16 %v822
      %v1482 = vunpack.c.l.b16 %v823
      %v1483 = vunpack.c.l.b16 %v824
      %v1484 = vunpack.c.l.b16 %v825
      %v1485 = vunpack.c.l.b16 %v826
      %v1486 = vunpack.c.l.b16 %v827
      %v1487 = vunpack.c.l.b16 %v828
      %v1488 = vunpack.c.l.b16 %v829
      %v1489 = vpack.c.b16 %v1442, %v1441
      %v1490 = vpack.c.b16 %v1444, %v1443
      %v1491 = vpack.c.b16 %v1446, %v1445
      %v1492 = vpack.c.b16 %v1448, %v1447
      %v1493 = vpack.c.b16 %v1450, %v1449
      %v1494 = vpack.c.b16 %v1452, %v1451
      %v1495 = vpack.c.b16 %v1454, %v1453
      %v1496 = vpack.c.b16 %v1456, %v1455
      %v1497 = vpack.c.b16 %v1458, %v1457
      %v1498 = vpack.c.b16 %v1460, %v1459
      %v1499 = vpack.c.b16 %v1462, %v1461
      %v1500 = vpack.c.b16 %v1464, %v1463
      %v1501 = vpack.c.b16 %v1466, %v1465
      %v1502 = vpack.c.b16 %v1468, %v1467
      %v1503 = vpack.c.b16 %v1470, %v1469
      %v1504 = vpack.c.b16 %v1472, %v1471
      %v1505 = vpack.c.b16 %v1474, %v1473
      %v1506 = vpack.c.b16 %v1476, %v1475
      %v1507 = vpack.c.b16 %v1478, %v1477
      %v1508 = vpack.c.b16 %v1480, %v1479
      %v1509 = vpack.c.b16 %v1482, %v1481
      %v1510 = vpack.c.b16 %v1484, %v1483
      %v1511 = vpack.c.b16 %v1486, %v1485
      %v1512 = vpack.c.b16 %v1488, %v1487
      %1537 = vmatprep.subr.bf16.mxu0 0
      %1538 = vmatpush1.bf16.msra.mxu0 %v1489
      %1539 = vmatprep.subr.bf16.mxu0 0
      %1540 = vmatpush1.bf16.msra.mxu0 %v1490
      %1541 = vmatprep.subr.bf16.mxu0 0
      %1542 = vmatpush1.bf16.msra.mxu0 %v1491
      %1543 = vmatprep.subr.bf16.mxu0 0
      %1544 = vmatpush1.bf16.msra.mxu0 %v1492
      %1545 = vmatprep.subr.bf16.mxu0 0
      %1546 = vmatpush1.bf16.msra.mxu0 %v1493
      %1547 = vmatprep.subr.bf16.mxu0 0
      %1548 = vmatpush1.bf16.msra.mxu0 %v1494
      %1549 = vmatprep.subr.bf16.mxu0 0
      %1550 = vmatpush1.bf16.msra.mxu0 %v1495
      %1551 = vmatprep.subr.bf16.mxu0 0
      %1552 = vmatpush1.bf16.msra.mxu0 %v1496
      %1553 = vmatprep.subr.bf16.mxu0 0
      %1554 = vmatpush1.bf16.msra.mxu0 %v1497
      %1555 = vmatprep.subr.bf16.mxu0 0
      %1556 = vmatpush1.bf16.msra.mxu0 %v1498
      %1557 = vmatprep.subr.bf16.mxu0 0
      %1558 = vmatpush1.bf16.msra.mxu0 %v1499
      %1559 = vmatprep.subr.bf16.mxu0 0
      %1560 = vmatpush1.bf16.msra.mxu0 %v1500
      %1561 = vmatprep.subr.bf16.mxu0 0
      %1562 = vmatpush1.bf16.msra.mxu0 %v1501
      %1563 = vmatprep.subr.bf16.mxu0 0
      %1564 = vmatpush1.bf16.msra.mxu0 %v1502
      %1565 = vmatprep.subr.bf16.mxu0 0
      %1566 = vmatpush1.bf16.msra.mxu0 %v1503
      %1567 = vmatprep.subr.bf16.mxu0 0
      %1568 = vmatpush1.bf16.msra.mxu0 %v1504
      %1569 = vmatprep.mubr.bf16.mxu0 %v735
      %1570 = vmatmul.mubr.bf16.gmra.mrb[0].mxu0 %v734
      %v1571 = vpop.f32.mrb[0].mxu0
      %v1572 = vadd.f32 %v1267, %v1571
      %v1573 = vpop.f32.mrb[0].mxu0
      %v1574 = vpop.f32.mrb[0].mxu0
      %v1575 = vadd.f32 %v1270, %v1574
      %v1576 = vpop.f32.mrb[0].mxu0
      %1577 = vmatprep.mubr.bf16.mxu0 %v738
      %1578 = vmatmul.mubr.bf16.gmra.mrb[0].mxu0 %v737
      %v1579 = vpop.f32.mrb[0].mxu0
      %v1580 = vadd.f32 %v1275, %v1579
      %v1581 = vpop.f32.mrb[0].mxu0
      %v1582 = vpop.f32.mrb[0].mxu0
      %v1583 = vadd.f32 %v1278, %v1582
      %v1584 = vpop.f32.mrb[0].mxu0
      %1585 = vmatprep.mubr.bf16.mxu0 %v741
      %1586 = vmatmul.mubr.bf16.gmra.mrb[0].mxu0 %v740
      %v1587 = vpop.f32.mrb[0].mxu0
      %v1588 = vadd.f32 %v1283, %v1587
      %v1589 = vpop.f32.mrb[0].mxu0
      %v1590 = vpop.f32.mrb[0].mxu0
      %v1591 = vadd.f32 %v1286, %v1590
      %v1592 = vpop.f32.mrb[0].mxu0
      %1593 = vmatprep.mubr.bf16.mxu0 %v744
      %1594 = vmatmul.mubr.bf16.gmra.mrb[0].mxu0 %v743
      %v1595 = vpop.f32.mrb[0].mxu0
      %v1596 = vadd.f32 %v1291, %v1595
      %v1597 = vpop.f32.mrb[0].mxu0
      %v1598 = vpop.f32.mrb[0].mxu0
      %v1599 = vadd.f32 %v1294, %v1598
      %v1600 = vpop.f32.mrb[0].mxu0
      %1601 = vmatprep.mubr.bf16.mxu0 %v747
      %1602 = vmatmul.mubr.bf16.gmra.mrb[0].mxu0 %v746
      %v1603 = vpop.f32.mrb[0].mxu0
      %v1604 = vadd.f32 %v1299, %v1603
      %v1605 = vpop.f32.mrb[0].mxu0
      %v1606 = vpop.f32.mrb[0].mxu0
      %v1607 = vadd.f32 %v1302, %v1606
      %v1608 = vpop.f32.mrb[0].mxu0
      %1609 = vmatprep.mubr.bf16.mxu0 %v750
      %1610 = vmatmul.mubr.bf16.gmra.mrb[0].mxu0 %v749
      %v1611 = vpop.f32.mrb[0].mxu0
      %v1612 = vadd.f32 %v1307, %v1611
      %v1613 = vpop.f32.mrb[0].mxu0
      %v1614 = vpop.f32.mrb[0].mxu0
      %v1615 = vadd.f32 %v1310, %v1614
      %v1616 = vpop.f32.mrb[0].mxu0
      %1617 = vmatprep.mubr.bf16.mxu0 %v753
      %1618 = vmatmul.mubr.bf16.gmra.mrb[0].mxu0 %v752
      %v1619 = vpop.f32.mrb[0].mxu0
      %v1620 = vadd.f32 %v1315, %v1619
      %v1621 = vpop.f32.mrb[0].mxu0
      %v1622 = vpop.f32.mrb[0].mxu0
      %v1623 = vadd.f32 %v1318, %v1622
      %v1624 = vpop.f32.mrb[0].mxu0
      %1625 = vmatprep.mubr.bf16.mxu0 %v756
      %1626 = vmatmul.mubr.bf16.gmra.mrb[0].mxu0 %v755
      %v1627 = vpop.f32.mrb[0].mxu0
      %v1628 = vadd.f32 %v1323, %v1627
      %v1629 = vpop.f32.mrb[0].mxu0
      %v1630 = vpop.f32.mrb[0].mxu0
      %v1631 = vadd.f32 %v1326, %v1630
      %v1632 = vpop.f32.mrb[0].mxu0
      %1633 = vmatprep.mubr.bf16.mxu0 %v759
      %1634 = vmatmul.mubr.bf16.gmra.mrb[0].mxu0 %v758
      %v1635 = vpop.f32.mrb[0].mxu0
      %v1636 = vadd.f32 %v1331, %v1635
      %v1637 = vpop.f32.mrb[0].mxu0
      %v1638 = vpop.f32.mrb[0].mxu0
      %v1639 = vadd.f32 %v1334, %v1638
      %v1640 = vpop.f32.mrb[0].mxu0
      %1641 = vmatprep.mubr.bf16.mxu0 %v762
      %1642 = vmatmul.mubr.bf16.gmra.mrb[0].mxu0 %v761
      %v1643 = vpop.f32.mrb[0].mxu0
      %v1644 = vadd.f32 %v1339, %v1643
      %v1645 = vpop.f32.mrb[0].mxu0
      %v1646 = vpop.f32.mrb[0].mxu0
      %v1647 = vadd.f32 %v1342, %v1646
      %v1648 = vpop.f32.mrb[0].mxu0
      %1649 = vmatprep.mubr.bf16.mxu0 %v765
      %1650 = vmatmul.mubr.bf16.gmra.mrb[0].mxu0 %v764
      %v1651 = vpop.f32.mrb[0].mxu0
      %v1652 = vadd.f32 %v1347, %v1651
      %v1653 = vpop.f32.mrb[0].mxu0
      %v1654 = vpop.f32.mrb[0].mxu0
      %v1655 = vadd.f32 %v1350, %v1654
      %v1656 = vpop.f32.mrb[0].mxu0
      %1657 = vmatprep.mubr.bf16.mxu0 %v768
      %1658 = vmatmul.mubr.bf16.gmra.mrb[0].mxu0 %v767
      %v1659 = vpop.f32.mrb[0].mxu0
      %v1660 = vadd.f32 %v1355, %v1659
      %v1661 = vpop.f32.mrb[0].mxu0
      %v1662 = vpop.f32.mrb[0].mxu0
      %v1663 = vadd.f32 %v1358, %v1662
      %v1664 = vpop.f32.mrb[0].mxu0
      %1665 = vmatprep.mubr.bf16.mxu0 %v771
      %1666 = vmatmul.mubr.bf16.gmra.mrb[0].mxu0 %v770
      %v1667 = vpop.f32.mrb[0].mxu0
      %v1668 = vadd.f32 %v1363, %v1667
      %v1669 = vpop.f32.mrb[0].mxu0
      %v1670 = vpop.f32.mrb[0].mxu0
      %v1671 = vadd.f32 %v1366, %v1670
      %v1672 = vpop.f32.mrb[0].mxu0
      %1673 = vmatprep.mubr.bf16.mxu0 %v774
      %1674 = vmatmul.mubr.bf16.gmra.mrb[0].mxu0 %v773
      %v1675 = vpop.f32.mrb[0].mxu0
      %v1676 = vadd.f32 %v1371, %v1675
      %v1677 = vpop.f32.mrb[0].mxu0
      %v1678 = vpop.f32.mrb[0].mxu0
      %v1679 = vadd.f32 %v1374, %v1678
      %v1680 = vpop.f32.mrb[0].mxu0
      %1681 = vmatprep.mubr.bf16.mxu0 %v777
      %1682 = vmatmul.mubr.bf16.gmra.mrb[0].mxu0 %v776
      %v1683 = vpop.f32.mrb[0].mxu0
      %v1684 = vadd.f32 %v1379, %v1683
      %v1685 = vpop.f32.mrb[0].mxu0
      %v1686 = vpop.f32.mrb[0].mxu0
      %v1687 = vadd.f32 %v1382, %v1686
      %v1688 = vpop.f32.mrb[0].mxu0
      %1689 = vmatprep.mubr.bf16.mxu0 %v780
      %1690 = vmatmul.mubr.bf16.gmra.mrb[0].mxu0 %v779
      %v1691 = vpop.f32.mrb[0].mxu0
      %v1692 = vadd.f32 %v1387, %v1691
      %v1693 = vpop.f32.mrb[0].mxu0
      %v1694 = vpop.f32.mrb[0].mxu0
      %v1695 = vadd.f32 %v1390, %v1694
      %v1696 = vpop.f32.mrb[0].mxu0
      %1697 = vdwg.mxu0
      %1698 = vmatprep.subr.bf16.mxu0 0
      %1699 = vmatpush1.bf16.msra.mxu0 %v1505
      %1700 = vmatprep.subr.bf16.mxu0 0
      %1701 = vmatpush1.bf16.msra.mxu0 %v1506
      %1702 = vmatprep.subr.bf16.mxu0 0
      %1703 = vmatpush1.bf16.msra.mxu0 %v1507
      %1704 = vmatprep.subr.bf16.mxu0 0
      %1705 = vmatpush1.bf16.msra.mxu0 %v1508
      %1706 = vmatprep.subr.bf16.mxu0 0
      %1707 = vmatpush1.bf16.msra.mxu0 %v1509
      %1708 = vmatprep.subr.bf16.mxu0 0
      %1709 = vmatpush1.bf16.msra.mxu0 %v1510
      %1710 = vmatprep.subr.bf16.mxu0 0
      %1711 = vmatpush1.bf16.msra.mxu0 %v1511
      %1712 = vmatprep.subr.bf16.mxu0 0
      %1713 = vmatpush1.bf16.msra.mxu0 %v1512
      %1714 = vmatprep.subr.bf16.mxu0 0
      %1715 = vmatpush1.bf16.msra.mxu0 0
      %1716 = vmatprep.subr.bf16.mxu0 0
      %1717 = vmatpush1.bf16.msra.mxu0 0
      %1718 = vmatprep.subr.bf16.mxu0 0
      %1719 = vmatpush1.bf16.msra.mxu0 0
      %1720 = vmatprep.subr.bf16.mxu0 0
      %1721 = vmatpush1.bf16.msra.mxu0 0
      %1722 = vmatprep.subr.bf16.mxu0 0
      %1723 = vmatpush1.bf16.msra.mxu0 0
      %1724 = vmatprep.subr.bf16.mxu0 0
      %1725 = vmatpush1.bf16.msra.mxu0 0
      %1726 = vmatprep.subr.bf16.mxu0 0
      %1727 = vmatpush1.bf16.msra.mxu0 0
      %1728 = vmatprep.subr.bf16.mxu0 0
      %1729 = vmatpush1.bf16.msra.mxu0 0
      %1730 = vmatprep.mubr.bf16.mxu0 0
      %1731 = vmatmul.mubr.bf16.gmra.mrb[0].mxu0 %v736
      %v1732 = vpop.f32.mrb[0].mxu0
      %v1733 = vadd.f32 %v1572, %v1732
      %v1734 = vpop.f32.mrb[0].mxu0
      %v1735 = vpop.f32.mrb[0].mxu0
      %v1736 = vadd.f32 %v1575, %v1735
      %v1737 = vpop.f32.mrb[0].mxu0
      %1738 = vmatprep.mubr.bf16.mxu0 0
      %1739 = vmatmul.mubr.bf16.gmra.mrb[0].mxu0 %v739
      %v1740 = vpop.f32.mrb[0].mxu0
      %v1741 = vadd.f32 %v1580, %v1740
      %v1742 = vpop.f32.mrb[0].mxu0
      %v1743 = vpop.f32.mrb[0].mxu0
      %v1744 = vadd.f32 %v1583, %v1743
      %v1745 = vpop.f32.mrb[0].mxu0
      %1746 = vmatprep.mubr.bf16.mxu0 0
      %1747 = vmatmul.mubr.bf16.gmra.mrb[0].mxu0 %v742
      %v1748 = vpop.f32.mrb[0].mxu0
      %v1749 = vadd.f32 %v1588, %v1748
      %v1750 = vpop.f32.mrb[0].mxu0
      %v1751 = vpop.f32.mrb[0].mxu0
      %v1752 = vadd.f32 %v1591, %v1751
      %v1753 = vpop.f32.mrb[0].mxu0
      %1754 = vmatprep.mubr.bf16.mxu0 0
      %1755 = vmatmul.mubr.bf16.gmra.mrb[0].mxu0 %v745
      %v1756 = vpop.f32.mrb[0].mxu0
      %v1757 = vadd.f32 %v1596, %v1756
      %v1758 = vpop.f32.mrb[0].mxu0
      %v1759 = vpop.f32.mrb[0].mxu0
      %v1760 = vadd.f32 %v1599, %v1759
      %v1761 = vpop.f32.mrb[0].mxu0
      %1762 = vmatprep.mubr.bf16.mxu0 0
      %1763 = vmatmul.mubr.bf16.gmra.mrb[0].mxu0 %v748
      %v1764 = vpop.f32.mrb[0].mxu0
      %v1765 = vadd.f32 %v1604, %v1764
      %v1766 = vpop.f32.mrb[0].mxu0
      %v1767 = vpop.f32.mrb[0].mxu0
      %v1768 = vadd.f32 %v1607, %v1767
      %v1769 = vpop.f32.mrb[0].mxu0
      %1770 = vmatprep.mubr.bf16.mxu0 0
      %1771 = vmatmul.mubr.bf16.gmra.mrb[0].mxu0 %v751
      %v1772 = vpop.f32.mrb[0].mxu0
      %v1773 = vadd.f32 %v1612, %v1772
      %v1774 = vpop.f32.mrb[0].mxu0
      %v1775 = vpop.f32.mrb[0].mxu0
      %v1776 = vadd.f32 %v1615, %v1775
      %v1777 = vpop.f32.mrb[0].mxu0
      %1778 = vmatprep.mubr.bf16.mxu0 0
      %1779 = vmatmul.mubr.bf16.gmra.mrb[0].mxu0 %v754
      %v1780 = vpop.f32.mrb[0].mxu0
      %v1781 = vadd.f32 %v1620, %v1780
      %v1782 = vpop.f32.mrb[0].mxu0
      %v1783 = vpop.f32.mrb[0].mxu0
      %v1784 = vadd.f32 %v1623, %v1783
      %v1785 = vpop.f32.mrb[0].mxu0
      %1786 = vmatprep.mubr.bf16.mxu0 0
      %1787 = vmatmul.mubr.bf16.gmra.mrb[0].mxu0 %v757
      %v1788 = vpop.f32.mrb[0].mxu0
      %v1789 = vadd.f32 %v1628, %v1788
      %v1790 = vpop.f32.mrb[0].mxu0
      %v1791 = vpop.f32.mrb[0].mxu0
      %v1792 = vadd.f32 %v1631, %v1791
      %v1793 = vpop.f32.mrb[0].mxu0
      %1794 = vmatprep.mubr.bf16.mxu0 0
      %1795 = vmatmul.mubr.bf16.gmra.mrb[0].mxu0 %v760
      %v1796 = vpop.f32.mrb[0].mxu0
      %v1797 = vadd.f32 %v1636, %v1796
      %v1798 = vpop.f32.mrb[0].mxu0
      %v1799 = vpop.f32.mrb[0].mxu0
      %v1800 = vadd.f32 %v1639, %v1799
      %v1801 = vpop.f32.mrb[0].mxu0
      %1802 = vmatprep.mubr.bf16.mxu0 0
      %1803 = vmatmul.mubr.bf16.gmra.mrb[0].mxu0 %v763
      %v1804 = vpop.f32.mrb[0].mxu0
      %v1805 = vadd.f32 %v1644, %v1804
      %v1806 = vpop.f32.mrb[0].mxu0
      %v1807 = vpop.f32.mrb[0].mxu0
      %v1808 = vadd.f32 %v1647, %v1807
      %v1809 = vpop.f32.mrb[0].mxu0
      %1810 = vmatprep.mubr.bf16.mxu0 0
      %1811 = vmatmul.mubr.bf16.gmra.mrb[0].mxu0 %v766
      %v1812 = vpop.f32.mrb[0].mxu0
      %v1813 = vadd.f32 %v1652, %v1812
      %v1814 = vpop.f32.mrb[0].mxu0
      %v1815 = vpop.f32.mrb[0].mxu0
      %v1816 = vadd.f32 %v1655, %v1815
      %v1817 = vpop.f32.mrb[0].mxu0
      %1818 = vmatprep.mubr.bf16.mxu0 0
      %1819 = vmatmul.mubr.bf16.gmra.mrb[0].mxu0 %v769
      %v1820 = vpop.f32.mrb[0].mxu0
      %v1821 = vadd.f32 %v1660, %v1820
      %v1822 = vpop.f32.mrb[0].mxu0
      %v1823 = vpop.f32.mrb[0].mxu0
      %v1824 = vadd.f32 %v1663, %v1823
      %v1825 = vpop.f32.mrb[0].mxu0
      %1826 = vmatprep.mubr.bf16.mxu0 0
      %1827 = vmatmul.mubr.bf16.gmra.mrb[0].mxu0 %v772
      %v1828 = vpop.f32.mrb[0].mxu0
      %v1829 = vadd.f32 %v1668, %v1828
      %v1830 = vpop.f32.mrb[0].mxu0
      %v1831 = vpop.f32.mrb[0].mxu0
      %v1832 = vadd.f32 %v1671, %v1831
      %v1833 = vpop.f32.mrb[0].mxu0
      %1834 = vmatprep.mubr.bf16.mxu0 0
      %1835 = vmatmul.mubr.bf16.gmra.mrb[0].mxu0 %v775
      %v1836 = vpop.f32.mrb[0].mxu0
      %v1837 = vadd.f32 %v1676, %v1836
      %v1838 = vpop.f32.mrb[0].mxu0
      %v1839 = vpop.f32.mrb[0].mxu0
      %v1840 = vadd.f32 %v1679, %v1839
      %v1841 = vpop.f32.mrb[0].mxu0
      %1842 = vmatprep.mubr.bf16.mxu0 0
      %1843 = vmatmul.mubr.bf16.gmra.mrb[0].mxu0 %v778
      %v1844 = vpop.f32.mrb[0].mxu0
      %v1845 = vadd.f32 %v1684, %v1844
      %v1846 = vpop.f32.mrb[0].mxu0
      %v1847 = vpop.f32.mrb[0].mxu0
      %v1848 = vadd.f32 %v1687, %v1847
      %v1849 = vpop.f32.mrb[0].mxu0
      %1850 = vmatprep.mubr.bf16.mxu0 0
      %1851 = vmatmul.mubr.bf16.gmra.mrb[0].mxu0 %v781
      %v1852 = vpop.f32.mrb[0].mxu0
      %v1853 = vadd.f32 %v1692, %v1852
      %v1854 = vpop.f32.mrb[0].mxu0
      %v1855 = vpop.f32.mrb[0].mxu0
      %v1856 = vadd.f32 %v1695, %v1855
      %v1857 = vpop.f32.mrb[0].mxu0
      %1858 = vdwg.mxu0
      %s1859 = scalar_lea.vmem [#allocation2], 48
      %v1860 = vld [vmem:[%s1859] sm:$0xff]
      %v1861 = vld [vmem:[%s1859 + $0x8] sm:$0xff]
      %v1862 = vld [vmem:[%s1859 + $0x10] sm:$0xff]
      %v1863 = vld [vmem:[%s1859 + $0x18] sm:$0xff]
      %v1864 = vld [vmem:[%s1859 + $0x20] sm:$0xff]
      %v1865 = vld [vmem:[%s1859 + $0x28] sm:$0xff]
      %v1866 = vld [vmem:[%s1859 + $0x30] sm:$0xff]
      %v1867 = vld [vmem:[%s1859 + $0x38] sm:$0xff]
      %v1868 = vld [vmem:[%s1859 + $0x40] sm:$0xff]
      %v1869 = vld [vmem:[%s1859 + $0x48] sm:$0xff]
      %v1870 = vld [vmem:[%s1859 + $0x50] sm:$0xff]
      %v1871 = vld [vmem:[%s1859 + $0x58] sm:$0xff]
      %v1872 = vld [vmem:[%s1859 + $0x60] sm:$0xff]
      %v1873 = vld [vmem:[%s1859 + $0x68] sm:$0xff]
      %v1874 = vld [vmem:[%s1859 + $0x70] sm:$0xff]
      %v1875 = vld [vmem:[%s1859 + $0x78] sm:$0xff]
      %v1876 = vld [vmem:[%s1859 + $0x80] sm:$0xff]
      %v1877 = vld [vmem:[%s1859 + $0x88] sm:$0xff]
      %v1878 = vld [vmem:[%s1859 + $0x90] sm:$0xff]
      %v1879 = vld [vmem:[%s1859 + $0x98] sm:$0xff]
      %v1880 = vld [vmem:[%s1859 + $0xa0] sm:$0xff]
      %v1881 = vld [vmem:[%s1859 + $0xa8] sm:$0xff]
      %v1882 = vld [vmem:[%s1859 + $0xb0] sm:$0xff]
      %v1883 = vld [vmem:[%s1859 + $0xb8] sm:$0xff]
      %v1884 = vld [vmem:[%s1859 + $0xc0] sm:$0xff]
      %v1885 = vld [vmem:[%s1859 + $0xc8] sm:$0xff]
      %v1886 = vld [vmem:[%s1859 + $0xd0] sm:$0xff]
      %v1887 = vld [vmem:[%s1859 + $0xd8] sm:$0xff]
      %v1888 = vld [vmem:[%s1859 + $0xe0] sm:$0xff]
      %v1889 = vld [vmem:[%s1859 + $0xe8] sm:$0xff]
      %v1890 = vld [vmem:[%s1859 + $0xf0] sm:$0xff]
      %v1891 = vld [vmem:[%s1859 + $0xf8] sm:$0xff]
      %v1892 = vld [vmem:[%s1859 + $0x100] sm:$0xff]
      %v1893 = vld [vmem:[%s1859 + $0x108] sm:$0xff]
      %v1894 = vld [vmem:[%s1859 + $0x110] sm:$0xff]
      %v1895 = vld [vmem:[%s1859 + $0x118] sm:$0xff]
      %v1896 = vld [vmem:[%s1859 + $0x120] sm:$0xff]
      %v1897 = vld [vmem:[%s1859 + $0x128] sm:$0xff]
      %v1898 = vld [vmem:[%s1859 + $0x130] sm:$0xff]
      %v1899 = vld [vmem:[%s1859 + $0x138] sm:$0xff]
      %v1900 = vld [vmem:[%s1859 + $0x140] sm:$0xff]
      %v1901 = vld [vmem:[%s1859 + $0x148] sm:$0xff]
      %v1902 = vld [vmem:[%s1859 + $0x150] sm:$0xff]
      %v1903 = vld [vmem:[%s1859 + $0x158] sm:$0xff]
      %v1904 = vld [vmem:[%s1859 + $0x160] sm:$0xff]
      %v1905 = vld [vmem:[%s1859 + $0x168] sm:$0xff]
      %v1906 = vld [vmem:[%s1859 + $0x170] sm:$0xff]
      %v1907 = vld [vmem:[%s1859 + $0x178] sm:$0xff]
      %s1908 = scalar_lea.vmem %s1, 384
      %v1909 = vld [vmem:[%s1908] sm:$0xf]
      %v1910 = vld [vmem:[%s1908 + $0x4] sm:$0xf]
      %v1911 = vld [vmem:[%s1908 + $0x8] sm:$0xf]
      %v1912 = vld [vmem:[%s1908 + $0xc] sm:$0xf]
      %v1913 = vld [vmem:[%s1908 + $0x10] sm:$0xf]
      %v1914 = vld [vmem:[%s1908 + $0x14] sm:$0xf]
      %v1915 = vld [vmem:[%s1908 + $0x18] sm:$0xf]
      %v1916 = vld [vmem:[%s1908 + $0x1c] sm:$0xf]
      %v1917 = vld [vmem:[%s1908 + $0x20] sm:$0xf]
      %v1918 = vld [vmem:[%s1908 + $0x24] sm:$0xf]
      %v1919 = vld [vmem:[%s1908 + $0x28] sm:$0xf]
      %v1920 = vld [vmem:[%s1908 + $0x2c] sm:$0xf]
      %v1921 = vld [vmem:[%s1908 + $0x30] sm:$0xf]
      %v1922 = vld [vmem:[%s1908 + $0x34] sm:$0xf]
      %v1923 = vld [vmem:[%s1908 + $0x38] sm:$0xf]
      %v1924 = vld [vmem:[%s1908 + $0x3c] sm:$0xf]
      %v1925 = vld [vmem:[%s1908 + $0x40] sm:$0xf]
      %v1926 = vld [vmem:[%s1908 + $0x44] sm:$0xf]
      %v1927 = vld [vmem:[%s1908 + $0x48] sm:$0xf]
      %v1928 = vld [vmem:[%s1908 + $0x4c] sm:$0xf]
      %v1929 = vld [vmem:[%s1908 + $0x50] sm:$0xf]
      %v1930 = vld [vmem:[%s1908 + $0x54] sm:$0xf]
      %v1931 = vld [vmem:[%s1908 + $0x58] sm:$0xf]
      %v1932 = vld [vmem:[%s1908 + $0x5c] sm:$0xf]
      %v1933 = vld [vmem:[%s1908 + $0x60] sm:$0xf]
      %v1934 = vld [vmem:[%s1908 + $0x64] sm:$0xf]
      %v1935 = vld [vmem:[%s1908 + $0x68] sm:$0xf]
      %v1936 = vld [vmem:[%s1908 + $0x6c] sm:$0xf]
      %v1937 = vld [vmem:[%s1908 + $0x70] sm:$0xf]
      %v1938 = vld [vmem:[%s1908 + $0x74] sm:$0xf]
      %v1939 = vld [vmem:[%s1908 + $0x78] sm:$0xf]
      %v1940 = vld [vmem:[%s1908 + $0x7c] sm:$0xf]
      %v1941 = vld [vmem:[%s1908 + $0x80] sm:$0xf]
      %v1942 = vld [vmem:[%s1908 + $0x84] sm:$0xf]
      %v1943 = vld [vmem:[%s1908 + $0x88] sm:$0xf]
      %v1944 = vld [vmem:[%s1908 + $0x8c] sm:$0xf]
      %v1945 = vld [vmem:[%s1908 + $0x90] sm:$0xf]
      %v1946 = vld [vmem:[%s1908 + $0x94] sm:$0xf]
      %v1947 = vld [vmem:[%s1908 + $0x98] sm:$0xf]
      %v1948 = vld [vmem:[%s1908 + $0x9c] sm:$0xf]
      %v1949 = vld [vmem:[%s1908 + $0xa0] sm:$0xf]
      %v1950 = vld [vmem:[%s1908 + $0xa4] sm:$0xf]
      %v1951 = vld [vmem:[%s1908 + $0xa8] sm:$0xf]
      %v1952 = vld [vmem:[%s1908 + $0xac] sm:$0xf]
      %v1953 = vld [vmem:[%s1908 + $0xb0] sm:$0xf]
      %v1954 = vld [vmem:[%s1908 + $0xb4] sm:$0xf]
      %v1955 = vld [vmem:[%s1908 + $0xb8] sm:$0xf]
      %v1956 = vld [vmem:[%s1908 + $0xbc] sm:$0xf]
      %v2005 = vunpack.c.l.b16 %v1909
      %v2006 = vunpack.c.l.b16 %v1910
      %v2007 = vunpack.c.l.b16 %v1911
      %v2008 = vunpack.c.l.b16 %v1912
      %v2009 = vunpack.c.l.b16 %v1913
      %v2010 = vunpack.c.l.b16 %v1914
      %v2011 = vunpack.c.l.b16 %v1915
      %v2012 = vunpack.c.l.b16 %v1916
      %v2013 = vunpack.c.l.b16 %v1917
      %v2014 = vunpack.c.l.b16 %v1918
      %v2015 = vunpack.c.l.b16 %v1919
      %v2016 = vunpack.c.l.b16 %v1920
      %v2017 = vunpack.c.l.b16 %v1921
      %v2018 = vunpack.c.l.b16 %v1922
      %v2019 = vunpack.c.l.b16 %v1923
      %v2020 = vunpack.c.l.b16 %v1924
      %v2021 = vunpack.c.l.b16 %v1925
      %v2022 = vunpack.c.l.b16 %v1926
      %v2023 = vunpack.c.l.b16 %v1927
      %v2024 = vunpack.c.l.b16 %v1928
      %v2025 = vunpack.c.l.b16 %v1929
      %v2026 = vunpack.c.l.b16 %v1930
      %v2027 = vunpack.c.l.b16 %v1931
      %v2028 = vunpack.c.l.b16 %v1932
      %v2029 = vunpack.c.l.b16 %v1933
      %v2030 = vunpack.c.l.b16 %v1934
      %v2031 = vunpack.c.l.b16 %v1935
      %v2032 = vunpack.c.l.b16 %v1936
      %v2033 = vunpack.c.l.b16 %v1937
      %v2034 = vunpack.c.l.b16 %v1938
      %v2035 = vunpack.c.l.b16 %v1939
      %v2036 = vunpack.c.l.b16 %v1940
      %v2037 = vunpack.c.l.b16 %v1941
      %v2038 = vunpack.c.l.b16 %v1942
      %v2039 = vunpack.c.l.b16 %v1943
      %v2040 = vunpack.c.l.b16 %v1944
      %v2041 = vunpack.c.l.b16 %v1945
      %v2042 = vunpack.c.l.b16 %v1946
      %v2043 = vunpack.c.l.b16 %v1947
      %v2044 = vunpack.c.l.b16 %v1948
      %v2045 = vunpack.c.l.b16 %v1949
      %v2046 = vunpack.c.l.b16 %v1950
      %v2047 = vunpack.c.l.b16 %v1951
      %v2048 = vunpack.c.l.b16 %v1952
      %v2049 = vunpack.c.l.b16 %v1953
      %v2050 = vunpack.c.l.b16 %v1954
      %v2051 = vunpack.c.l.b16 %v1955
      %v2052 = vunpack.c.l.b16 %v1956
      %v2053 = vpack.c.b16 %v2006, %v2005
      %v2054 = vpack.c.b16 %v2008, %v2007
      %v2055 = vpack.c.b16 %v2010, %v2009
      %v2056 = vpack.c.b16 %v2012, %v2011
      %v2057 = vpack.c.b16 %v2014, %v2013
      %v2058 = vpack.c.b16 %v2016, %v2015
      %v2059 = vpack.c.b16 %v2018, %v2017
      %v2060 = vpack.c.b16 %v2020, %v2019
      %v2061 = vpack.c.b16 %v2022, %v2021
      %v2062 = vpack.c.b16 %v2024, %v2023
      %v2063 = vpack.c.b16 %v2026, %v2025
      %v2064 = vpack.c.b16 %v2028, %v2027
      %v2065 = vpack.c.b16 %v2030, %v2029
      %v2066 = vpack.c.b16 %v2032, %v2031
      %v2067 = vpack.c.b16 %v2034, %v2033
      %v2068 = vpack.c.b16 %v2036, %v2035
      %v2069 = vpack.c.b16 %v2038, %v2037
      %v2070 = vpack.c.b16 %v2040, %v2039
      %v2071 = vpack.c.b16 %v2042, %v2041
      %v2072 = vpack.c.b16 %v2044, %v2043
      %v2073 = vpack.c.b16 %v2046, %v2045
      %v2074 = vpack.c.b16 %v2048, %v2047
      %v2075 = vpack.c.b16 %v2050, %v2049
      %v2076 = vpack.c.b16 %v2052, %v2051
      %2101 = vmatprep.subr.bf16.mxu0 0
      %2102 = vmatpush1.bf16.msra.mxu0 %v2053
      %2103 = vmatprep.subr.bf16.mxu0 0
      %2104 = vmatpush1.bf16.msra.mxu0 %v2054
      %2105 = vmatprep.subr.bf16.mxu0 0
      %2106 = vmatpush1.bf16.msra.mxu0 %v2055
      %2107 = vmatprep.subr.bf16.mxu0 0
      %2108 = vmatpush1.bf16.msra.mxu0 %v2056
      %2109 = vmatprep.subr.bf16.mxu0 0
      %2110 = vmatpush1.bf16.msra.mxu0 %v2057
      %2111 = vmatprep.subr.bf16.mxu0 0
      %2112 = vmatpush1.bf16.msra.mxu0 %v2058
      %2113 = vmatprep.subr.bf16.mxu0 0
      %2114 = vmatpush1.bf16.msra.mxu0 %v2059
      %2115 = vmatprep.subr.bf16.mxu0 0
      %2116 = vmatpush1.bf16.msra.mxu0 %v2060
      %2117 = vmatprep.subr.bf16.mxu0 0
      %2118 = vmatpush1.bf16.msra.mxu0 %v2061
      %2119 = vmatprep.subr.bf16.mxu0 0
      %2120 = vmatpush1.bf16.msra.mxu0 %v2062
      %2121 = vmatprep.subr.bf16.mxu0 0
      %2122 = vmatpush1.bf16.msra.mxu0 %v2063
      %2123 = vmatprep.subr.bf16.mxu0 0
      %2124 = vmatpush1.bf16.msra.mxu0 %v2064
      %2125 = vmatprep.subr.bf16.mxu0 0
      %2126 = vmatpush1.bf16.msra.mxu0 %v2065
      %2127 = vmatprep.subr.bf16.mxu0 0
      %2128 = vmatpush1.bf16.msra.mxu0 %v2066
      %2129 = vmatprep.subr.bf16.mxu0 0
      %2130 = vmatpush1.bf16.msra.mxu0 %v2067
      %2131 = vmatprep.subr.bf16.mxu0 0
      %2132 = vmatpush1.bf16.msra.mxu0 %v2068
      %2133 = vmatprep.mubr.bf16.mxu0 %v1861
      %2134 = vmatmul.mubr.bf16.gmra.mrb[0].mxu0 %v1860
      %v2135 = vpop.f32.mrb[0].mxu0
      %v2136 = vadd.f32 0.0, %v2135
      %v2137 = vpop.f32.mrb[0].mxu0
      %v2138 = vpop.f32.mrb[0].mxu0
      %v2139 = vadd.f32 0.0, %v2138
      %v2140 = vpop.f32.mrb[0].mxu0
      %2141 = vmatprep.mubr.bf16.mxu0 %v1864
      %2142 = vmatmul.mubr.bf16.gmra.mrb[0].mxu0 %v1863
      %v2143 = vpop.f32.mrb[0].mxu0
      %v2144 = vadd.f32 0.0, %v2143
      %v2145 = vpop.f32.mrb[0].mxu0
      %v2146 = vpop.f32.mrb[0].mxu0
      %v2147 = vadd.f32 0.0, %v2146
      %v2148 = vpop.f32.mrb[0].mxu0
      %2149 = vmatprep.mubr.bf16.mxu0 %v1867
      %2150 = vmatmul.mubr.bf16.gmra.mrb[0].mxu0 %v1866
      %v2151 = vpop.f32.mrb[0].mxu0
      %v2152 = vadd.f32 0.0, %v2151
      %v2153 = vpop.f32.mrb[0].mxu0
      %v2154 = vpop.f32.mrb[0].mxu0
      %v2155 = vadd.f32 0.0, %v2154
      %v2156 = vpop.f32.mrb[0].mxu0
      %2157 = vmatprep.mubr.bf16.mxu0 %v1870
      %2158 = vmatmul.mubr.bf16.gmra.mrb[0].mxu0 %v1869
      %v2159 = vpop.f32.mrb[0].mxu0
      %v2160 = vadd.f32 0.0, %v2159
      %v2161 = vpop.f32.mrb[0].mxu0
      %v2162 = vpop.f32.mrb[0].mxu0
      %v2163 = vadd.f32 0.0, %v2162
      %v2164 = vpop.f32.mrb[0].mxu0
      %2165 = vmatprep.mubr.bf16.mxu0 %v1873
      %2166 = vmatmul.mubr.bf16.gmra.mrb[0].mxu0 %v1872
      %v2167 = vpop.f32.mrb[0].mxu0
      %v2168 = vadd.f32 0.0, %v2167
      %v2169 = vpop.f32.mrb[0].mxu0
      %v2170 = vpop.f32.mrb[0].mxu0
      %v2171 = vadd.f32 0.0, %v2170
      %v2172 = vpop.f32.mrb[0].mxu0
      %2173 = vmatprep.mubr.bf16.mxu0 %v1876
      %2174 = vmatmul.mubr.bf16.gmra.mrb[0].mxu0 %v1875
      %v2175 = vpop.f32.mrb[0].mxu0
      %v2176 = vadd.f32 0.0, %v2175
      %v2177 = vpop.f32.mrb[0].mxu0
      %v2178 = vpop.f32.mrb[0].mxu0
      %v2179 = vadd.f32 0.0, %v2178
      %v2180 = vpop.f32.mrb[0].mxu0
      %2181 = vmatprep.mubr.bf16.mxu0 %v1879
      %2182 = vmatmul.mubr.bf16.gmra.mrb[0].mxu0 %v1878
      %v2183 = vpop.f32.mrb[0].mxu0
      %v2184 = vadd.f32 0.0, %v2183
      %v2185 = vpop.f32.mrb[0].mxu0
      %v2186 = vpop.f32.mrb[0].mxu0
      %v2187 = vadd.f32 0.0, %v2186
      %v2188 = vpop.f32.mrb[0].mxu0
      %2189 = vmatprep.mubr.bf16.mxu0 %v1882
      %2190 = vmatmul.mubr.bf16.gmra.mrb[0].mxu0 %v1881
      %v2191 = vpop.f32.mrb[0].mxu0
      %v2192 = vadd.f32 0.0, %v2191
      %v2193 = vpop.f32.mrb[0].mxu0
      %v2194 = vpop.f32.mrb[0].mxu0
      %v2195 = vadd.f32 0.0, %v2194
      %v2196 = vpop.f32.mrb[0].mxu0
      %2197 = vmatprep.mubr.bf16.mxu0 %v1885
      %2198 = vmatmul.mubr.bf16.gmra.mrb[0].mxu0 %v1884
      %v2199 = vpop.f32.mrb[0].mxu0
      %v2200 = vadd.f32 0.0, %v2199
      %v2201 = vpop.f32.mrb[0].mxu0
      %v2202 = vpop.f32.mrb[0].mxu0
      %v2203 = vadd.f32 0.0, %v2202
      %v2204 = vpop.f32.mrb[0].mxu0
      %2205 = vmatprep.mubr.bf16.mxu0 %v1888
      %2206 = vmatmul.mubr.bf16.gmra.mrb[0].mxu0 %v1887
      %v2207 = vpop.f32.mrb[0].mxu0
      %v2208 = vadd.f32 0.0, %v2207
      %v2209 = vpop.f32.mrb[0].mxu0
      %v2210 = vpop.f32.mrb[0].mxu0
      %v2211 = vadd.f32 0.0, %v2210
      %v2212 = vpop.f32.mrb[0].mxu0
      %2213 = vmatprep.mubr.bf16.mxu0 %v1891
      %2214 = vmatmul.mubr.bf16.gmra.mrb[0].mxu0 %v1890
      %v2215 = vpop.f32.mrb[0].mxu0
      %v2216 = vadd.f32 0.0, %v2215
      %v2217 = vpop.f32.mrb[0].mxu0
      %v2218 = vpop.f32.mrb[0].mxu0
      %v2219 = vadd.f32 0.0, %v2218
      %v2220 = vpop.f32.mrb[0].mxu0
      %2221 = vmatprep.mubr.bf16.mxu0 %v1894
      %2222 = vmatmul.mubr.bf16.gmra.mrb[0].mxu0 %v1893
      %v2223 = vpop.f32.mrb[0].mxu0
      %v2224 = vadd.f32 0.0, %v2223
      %v2225 = vpop.f32.mrb[0].mxu0
      %v2226 = vpop.f32.mrb[0].mxu0
      %v2227 = vadd.f32 0.0, %v2226
      %v2228 = vpop.f32.mrb[0].mxu0
      %2229 = vmatprep.mubr.bf16.mxu0 %v1897
      %2230 = vmatmul.mubr.bf16.gmra.mrb[0].mxu0 %v1896
      %v2231 = vpop.f32.mrb[0].mxu0
      %v2232 = vadd.f32 0.0, %v2231
      %v2233 = vpop.f32.mrb[0].mxu0
      %v2234 = vpop.f32.mrb[0].mxu0
      %v2235 = vadd.f32 0.0, %v2234
      %v2236 = vpop.f32.mrb[0].mxu0
      %2237 = vmatprep.mubr.bf16.mxu0 %v1900
      %2238 = vmatmul.mubr.bf16.gmra.mrb[0].mxu0 %v1899
      %v2239 = vpop.f32.mrb[0].mxu0
      %v2240 = vadd.f32 0.0, %v2239
      %v2241 = vpop.f32.mrb[0].mxu0
      %v2242 = vpop.f32.mrb[0].mxu0
      %v2243 = vadd.f32 0.0, %v2242
      %v2244 = vpop.f32.mrb[0].mxu0
      %2245 = vmatprep.mubr.bf16.mxu0 %v1903
      %2246 = vmatmul.mubr.bf16.gmra.mrb[0].mxu0 %v1902
      %v2247 = vpop.f32.mrb[0].mxu0
      %v2248 = vadd.f32 0.0, %v2247
      %v2249 = vpop.f32.mrb[0].mxu0
      %v2250 = vpop.f32.mrb[0].mxu0
      %v2251 = vadd.f32 0.0, %v2250
      %v2252 = vpop.f32.mrb[0].mxu0
      %2253 = vmatprep.mubr.bf16.mxu0 %v1906
      %2254 = vmatmul.mubr.bf16.gmra.mrb[0].mxu0 %v1905
      %v2255 = vpop.f32.mrb[0].mxu0
      %v2256 = vadd.f32 0.0, %v2255
      %v2257 = vpop.f32.mrb[0].mxu0
      %v2258 = vpop.f32.mrb[0].mxu0
      %v2259 = vadd.f32 0.0, %v2258
      %v2260 = vpop.f32.mrb[0].mxu0
      %2261 = vdwg.mxu0
      %2262 = vmatprep.subr.bf16.mxu0 0
      %2263 = vmatpush1.bf16.msra.mxu0 %v2069
      %2264 = vmatprep.subr.bf16.mxu0 0
      %2265 = vmatpush1.bf16.msra.mxu0 %v2070
      %2266 = vmatprep.subr.bf16.mxu0 0
      %2267 = vmatpush1.bf16.msra.mxu0 %v2071
      %2268 = vmatprep.subr.bf16.mxu0 0
      %2269 = vmatpush1.bf16.msra.mxu0 %v2072
      %2270 = vmatprep.subr.bf16.mxu0 0
      %2271 = vmatpush1.bf16.msra.mxu0 %v2073
      %2272 = vmatprep.subr.bf16.mxu0 0
      %2273 = vmatpush1.bf16.msra.mxu0 %v2074
      %2274 = vmatprep.subr.bf16.mxu0 0
      %2275 = vmatpush1.bf16.msra.mxu0 %v2075
      %2276 = vmatprep.subr.bf16.mxu0 0
      %2277 = vmatpush1.bf16.msra.mxu0 %v2076
      %2278 = vmatprep.subr.bf16.mxu0 0
      %2279 = vmatpush1.bf16.msra.mxu0 0
      %2280 = vmatprep.subr.bf16.mxu0 0
      %2281 = vmatpush1.bf16.msra.mxu0 0
      %2282 = vmatprep.subr.bf16.mxu0 0
      %2283 = vmatpush1.bf16.msra.mxu0 0
      %2284 = vmatprep.subr.bf16.mxu0 0
      %2285 = vmatpush1.bf16.msra.mxu0 0
      %2286 = vmatprep.subr.bf16.mxu0 0
      %2287 = vmatpush1.bf16.msra.mxu0 0
      %2288 = vmatprep.subr.bf16.mxu0 0
      %2289 = vmatpush1.bf16.msra.mxu0 0
      %2290 = vmatprep.subr.bf16.mxu0 0
      %2291 = vmatpush1.bf16.msra.mxu0 0
      %2292 = vmatprep.subr.bf16.mxu0 0
      %2293 = vmatpush1.bf16.msra.mxu0 0
      %2294 = vmatprep.mubr.bf16.mxu0 0
      %2295 = vmatmul.mubr.bf16.gmra.mrb[0].mxu0 %v1862
      %v2296 = vpop.f32.mrb[0].mxu0
      %v2297 = vadd.f32 %v2136, %v2296
      %v2298 = vpop.f32.mrb[0].mxu0
      %v2299 = vpop.f32.mrb[0].mxu0
      %v2300 = vadd.f32 %v2139, %v2299
      %v2301 = vpop.f32.mrb[0].mxu0
      %2302 = vmatprep.mubr.bf16.mxu0 0
      %2303 = vmatmul.mubr.bf16.gmra.mrb[0].mxu0 %v1865
      %v2304 = vpop.f32.mrb[0].mxu0
      %v2305 = vadd.f32 %v2144, %v2304
      %v2306 = vpop.f32.mrb[0].mxu0
      %v2307 = vpop.f32.mrb[0].mxu0
      %v2308 = vadd.f32 %v2147, %v2307
      %v2309 = vpop.f32.mrb[0].mxu0
      %2310 = vmatprep.mubr.bf16.mxu0 0
      %2311 = vmatmul.mubr.bf16.gmra.mrb[0].mxu0 %v1868
      %v2312 = vpop.f32.mrb[0].mxu0
      %v2313 = vadd.f32 %v2152, %v2312
      %v2314 = vpop.f32.mrb[0].mxu0
      %v2315 = vpop.f32.mrb[0].mxu0
      %v2316 = vadd.f32 %v2155, %v2315
      %v2317 = vpop.f32.mrb[0].mxu0
      %2318 = vmatprep.mubr.bf16.mxu0 0
      %2319 = vmatmul.mubr.bf16.gmra.mrb[0].mxu0 %v1871
      %v2320 = vpop.f32.mrb[0].mxu0
      %v2321 = vadd.f32 %v2160, %v2320
      %v2322 = vpop.f32.mrb[0].mxu0
      %v2323 = vpop.f32.mrb[0].mxu0
      %v2324 = vadd.f32 %v2163, %v2323
      %v2325 = vpop.f32.mrb[0].mxu0
      %2326 = vmatprep.mubr.bf16.mxu0 0
      %2327 = vmatmul.mubr.bf16.gmra.mrb[0].mxu0 %v1874
      %v2328 = vpop.f32.mrb[0].mxu0
      %v2329 = vadd.f32 %v2168, %v2328
      %v2330 = vpop.f32.mrb[0].mxu0
      %v2331 = vpop.f32.mrb[0].mxu0
      %v2332 = vadd.f32 %v2171, %v2331
      %v2333 = vpop.f32.mrb[0].mxu0
      %2334 = vmatprep.mubr.bf16.mxu0 0
      %2335 = vmatmul.mubr.bf16.gmra.mrb[0].mxu0 %v1877
      %v2336 = vpop.f32.mrb[0].mxu0
      %v2337 = vadd.f32 %v2176, %v2336
      %v2338 = vpop.f32.mrb[0].mxu0
      %v2339 = vpop.f32.mrb[0].mxu0
      %v2340 = vadd.f32 %v2179, %v2339
      %v2341 = vpop.f32.mrb[0].mxu0
      %2342 = vmatprep.mubr.bf16.mxu0 0
      %2343 = vmatmul.mubr.bf16.gmra.mrb[0].mxu0 %v1880
      %v2344 = vpop.f32.mrb[0].mxu0
      %v2345 = vadd.f32 %v2184, %v2344
      %v2346 = vpop.f32.mrb[0].mxu0
      %v2347 = vpop.f32.mrb[0].mxu0
      %v2348 = vadd.f32 %v2187, %v2347
      %v2349 = vpop.f32.mrb[0].mxu0
      %2350 = vmatprep.mubr.bf16.mxu0 0
      %2351 = vmatmul.mubr.bf16.gmra.mrb[0].mxu0 %v1883
      %v2352 = vpop.f32.mrb[0].mxu0
      %v2353 = vadd.f32 %v2192, %v2352
      %v2354 = vpop.f32.mrb[0].mxu0
      %v2355 = vpop.f32.mrb[0].mxu0
      %v2356 = vadd.f32 %v2195, %v2355
      %v2357 = vpop.f32.mrb[0].mxu0
      %2358 = vmatprep.mubr.bf16.mxu0 0
      %2359 = vmatmul.mubr.bf16.gmra.mrb[0].mxu0 %v1886
      %v2360 = vpop.f32.mrb[0].mxu0
      %v2361 = vadd.f32 %v2200, %v2360
      %v2362 = vpop.f32.mrb[0].mxu0
      %v2363 = vpop.f32.mrb[0].mxu0
      %v2364 = vadd.f32 %v2203, %v2363
      %v2365 = vpop.f32.mrb[0].mxu0
      %2366 = vmatprep.mubr.bf16.mxu0 0
      %2367 = vmatmul.mubr.bf16.gmra.mrb[0].mxu0 %v1889
      %v2368 = vpop.f32.mrb[0].mxu0
      %v2369 = vadd.f32 %v2208, %v2368
      %v2370 = vpop.f32.mrb[0].mxu0
      %v2371 = vpop.f32.mrb[0].mxu0
      %v2372 = vadd.f32 %v2211, %v2371
      %v2373 = vpop.f32.mrb[0].mxu0
      %2374 = vmatprep.mubr.bf16.mxu0 0
      %2375 = vmatmul.mubr.bf16.gmra.mrb[0].mxu0 %v1892
      %v2376 = vpop.f32.mrb[0].mxu0
      %v2377 = vadd.f32 %v2216, %v2376
      %v2378 = vpop.f32.mrb[0].mxu0
      %v2379 = vpop.f32.mrb[0].mxu0
      %v2380 = vadd.f32 %v2219, %v2379
      %v2381 = vpop.f32.mrb[0].mxu0
      %2382 = vmatprep.mubr.bf16.mxu0 0
      %2383 = vmatmul.mubr.bf16.gmra.mrb[0].mxu0 %v1895
      %v2384 = vpop.f32.mrb[0].mxu0
      %v2385 = vadd.f32 %v2224, %v2384
      %v2386 = vpop.f32.mrb[0].mxu0
      %v2387 = vpop.f32.mrb[0].mxu0
      %v2388 = vadd.f32 %v2227, %v2387
      %v2389 = vpop.f32.mrb[0].mxu0
      %2390 = vmatprep.mubr.bf16.mxu0 0
      %2391 = vmatmul.mubr.bf16.gmra.mrb[0].mxu0 %v1898
      %v2392 = vpop.f32.mrb[0].mxu0
      %v2393 = vadd.f32 %v2232, %v2392
      %v2394 = vpop.f32.mrb[0].mxu0
      %v2395 = vpop.f32.mrb[0].mxu0
      %v2396 = vadd.f32 %v2235, %v2395
      %v2397 = vpop.f32.mrb[0].mxu0
      %2398 = vmatprep.mubr.bf16.mxu0 0
      %2399 = vmatmul.mubr.bf16.gmra.mrb[0].mxu0 %v1901
      %v2400 = vpop.f32.mrb[0].mxu0
      %v2401 = vadd.f32 %v2240, %v2400
      %v2402 = vpop.f32.mrb[0].mxu0
      %v2403 = vpop.f32.mrb[0].mxu0
      %v2404 = vadd.f32 %v2243, %v2403
      %v2405 = vpop.f32.mrb[0].mxu0
      %2406 = vmatprep.mubr.bf16.mxu0 0
      %2407 = vmatmul.mubr.bf16.gmra.mrb[0].mxu0 %v1904
      %v2408 = vpop.f32.mrb[0].mxu0
      %v2409 = vadd.f32 %v2248, %v2408
      %v2410 = vpop.f32.mrb[0].mxu0
      %v2411 = vpop.f32.mrb[0].mxu0
      %v2412 = vadd.f32 %v2251, %v2411
      %v2413 = vpop.f32.mrb[0].mxu0
      %2414 = vmatprep.mubr.bf16.mxu0 0
      %2415 = vmatmul.mubr.bf16.gmra.mrb[0].mxu0 %v1907
      %v2416 = vpop.f32.mrb[0].mxu0
      %v2417 = vadd.f32 %v2256, %v2416
      %v2418 = vpop.f32.mrb[0].mxu0
      %v2419 = vpop.f32.mrb[0].mxu0
      %v2420 = vadd.f32 %v2259, %v2419
      %v2421 = vpop.f32.mrb[0].mxu0
      %2422 = vdwg.mxu0
      %v2423 = vadd.f32 %v1733, %v2297
      %v2424 = vadd.f32 %v1736, %v2300
      %v2425 = vadd.f32 %v1741, %v2305
      %v2426 = vadd.f32 %v1744, %v2308
      %v2427 = vadd.f32 %v1749, %v2313
      %v2428 = vadd.f32 %v1752, %v2316
      %v2429 = vadd.f32 %v1757, %v2321
      %v2430 = vadd.f32 %v1760, %v2324
      %v2431 = vadd.f32 %v1765, %v2329
      %v2432 = vadd.f32 %v1768, %v2332
      %v2433 = vadd.f32 %v1773, %v2337
      %v2434 = vadd.f32 %v1776, %v2340
      %v2435 = vadd.f32 %v1781, %v2345
      %v2436 = vadd.f32 %v1784, %v2348
      %v2437 = vadd.f32 %v1789, %v2353
      %v2438 = vadd.f32 %v1792, %v2356
      %v2439 = vadd.f32 %v1797, %v2361
      %v2440 = vadd.f32 %v1800, %v2364
      %v2441 = vadd.f32 %v1805, %v2369
      %v2442 = vadd.f32 %v1808, %v2372
      %v2443 = vadd.f32 %v1813, %v2377
      %v2444 = vadd.f32 %v1816, %v2380
      %v2445 = vadd.f32 %v1821, %v2385
      %v2446 = vadd.f32 %v1824, %v2388
      %v2447 = vadd.f32 %v1829, %v2393
      %v2448 = vadd.f32 %v1832, %v2396
      %v2449 = vadd.f32 %v1837, %v2401
      %v2450 = vadd.f32 %v1840, %v2404
      %v2451 = vadd.f32 %v1845, %v2409
      %v2452 = vadd.f32 %v1848, %v2412
      %v2453 = vadd.f32 %v1853, %v2417
      %v2454 = vadd.f32 %v1856, %v2420
      %v2455 = vadd.f32 %v2423, %v2424
      %v2456 = vadd.f32 %v2455, %v2425
      %v2457 = vadd.f32 %v2456, %v2426
      %v2458 = vadd.f32 %v2457, %v2427
      %v2459 = vadd.f32 %v2458, %v2428
      %v2460 = vadd.f32 %v2459, %v2429
      %v2461 = vadd.f32 %v2460, %v2430
      %v2462 = vadd.f32 %v2461, %v2431
      %v2463 = vadd.f32 %v2462, %v2432
      %v2464 = vadd.f32 %v2463, %v2433
      %v2465 = vadd.f32 %v2464, %v2434
      %v2466 = vadd.f32 %v2465, %v2435
      %v2467 = vadd.f32 %v2466, %v2436
      %v2468 = vadd.f32 %v2467, %v2437
      %v2469 = vadd.f32 %v2468, %v2438
      %v2470 = vadd.f32 %v2469, %v2439
      %v2471 = vadd.f32 %v2470, %v2440
      %v2472 = vadd.f32 %v2471, %v2441
      %v2473 = vadd.f32 %v2472, %v2442
      %v2474 = vadd.f32 %v2473, %v2443
      %v2475 = vadd.f32 %v2474, %v2444
      %v2476 = vadd.f32 %v2475, %v2445
      %v2477 = vadd.f32 %v2476, %v2446
      %v2478 = vadd.f32 %v2477, %v2447
      %v2479 = vadd.f32 %v2478, %v2448
      %v2480 = vadd.f32 %v2479, %v2449
      %v2481 = vadd.f32 %v2480, %v2450
      %v2482 = vadd.f32 %v2481, %v2451
      %v2483 = vadd.f32 %v2482, %v2452
      %v2484 = vadd.f32 %v2483, %v2453
      %v2485 = vadd.f32 %v2484, %v2454
      %v2486 = vrot.slane %v2485, 4
      %v2487 = vadd.f32 %v2485, %v2486
      %v2488 = vrot.slane %v2487, 2
      %v2489 = vadd.f32 %v2487, %v2488
      %v2490 = vrot.slane %v2489, 1
      %v2491 = vadd.f32 %v2489, %v2490
      %v2492 = vmul.f32 %v2423, %v2423
      %v2493 = vmul.f32 %v2424, %v2424
      %v2494 = vmul.f32 %v2425, %v2425
      %v2495 = vmul.f32 %v2426, %v2426
      %v2496 = vmul.f32 %v2427, %v2427
      %v2497 = vmul.f32 %v2428, %v2428
      %v2498 = vmul.f32 %v2429, %v2429
      %v2499 = vmul.f32 %v2430, %v2430
      %v2500 = vmul.f32 %v2431, %v2431
      %v2501 = vmul.f32 %v2432, %v2432
      %v2502 = vmul.f32 %v2433, %v2433
      %v2503 = vmul.f32 %v2434, %v2434
      %v2504 = vmul.f32 %v2435, %v2435
      %v2505 = vmul.f32 %v2436, %v2436
      %v2506 = vmul.f32 %v2437, %v2437
      %v2507 = vmul.f32 %v2438, %v2438
      %v2508 = vmul.f32 %v2439, %v2439
      %v2509 = vmul.f32 %v2440, %v2440
      %v2510 = vmul.f32 %v2441, %v2441
      %v2511 = vmul.f32 %v2442, %v2442
      %v2512 = vmul.f32 %v2443, %v2443
      %v2513 = vmul.f32 %v2444, %v2444
      %v2514 = vmul.f32 %v2445, %v2445
      %v2515 = vmul.f32 %v2446, %v2446
      %v2516 = vmul.f32 %v2447, %v2447
      %v2517 = vmul.f32 %v2448, %v2448
      %v2518 = vmul.f32 %v2449, %v2449
      %v2519 = vmul.f32 %v2450, %v2450
      %v2520 = vmul.f32 %v2451, %v2451
      %v2521 = vmul.f32 %v2452, %v2452
      %v2522 = vmul.f32 %v2453, %v2453
      %v2523 = vmul.f32 %v2454, %v2454
      %v2524 = vadd.f32 %v2492, %v2493
      %v2525 = vadd.f32 %v2524, %v2494
      %v2526 = vadd.f32 %v2525, %v2495
      %v2527 = vadd.f32 %v2526, %v2496
      %v2528 = vadd.f32 %v2527, %v2497
      %v2529 = vadd.f32 %v2528, %v2498
      %v2530 = vadd.f32 %v2529, %v2499
      %v2531 = vadd.f32 %v2530, %v2500
      %v2532 = vadd.f32 %v2531, %v2501
      %v2533 = vadd.f32 %v2532, %v2502
      %v2534 = vadd.f32 %v2533, %v2503
      %v2535 = vadd.f32 %v2534, %v2504
      %v2536 = vadd.f32 %v2535, %v2505
      %v2537 = vadd.f32 %v2536, %v2506
      %v2538 = vadd.f32 %v2537, %v2507
      %v2539 = vadd.f32 %v2538, %v2508
      %v2540 = vadd.f32 %v2539, %v2509
      %v2541 = vadd.f32 %v2540, %v2510
      %v2542 = vadd.f32 %v2541, %v2511
      %v2543 = vadd.f32 %v2542, %v2512
      %v2544 = vadd.f32 %v2543, %v2513
      %v2545 = vadd.f32 %v2544, %v2514
      %v2546 = vadd.f32 %v2545, %v2515
      %v2547 = vadd.f32 %v2546, %v2516
      %v2548 = vadd.f32 %v2547, %v2517
      %v2549 = vadd.f32 %v2548, %v2518
      %v2550 = vadd.f32 %v2549, %v2519
      %v2551 = vadd.f32 %v2550, %v2520
      %v2552 = vadd.f32 %v2551, %v2521
      %v2553 = vadd.f32 %v2552, %v2522
      %v2554 = vadd.f32 %v2553, %v2523
      %v2555 = vrot.slane %v2554, 4
      %v2556 = vadd.f32 %v2554, %v2555
      %v2557 = vrot.slane %v2556, 2
      %v2558 = vadd.f32 %v2556, %v2557
      %v2559 = vrot.slane %v2558, 1
      %v2560 = vadd.f32 %v2558, %v2559
      %v2561 = vmul.f32 %v2491, 0.00390625
      %v2562 = vmul.f32 %v2560, 0.00390625
      %v2563 = vmul.f32 %v2561, %v2561
      %v2564 = vsub.f32 %v2562, %v2563
      %v2565 = vmax.f32 %v2564, 0.0
      %v2566 = vsub.f32 %v2423, %v2561
      %v2567 = vsub.f32 %v2424, %v2561
      %v2568 = vsub.f32 %v2425, %v2561
      %v2569 = vsub.f32 %v2426, %v2561
      %v2570 = vsub.f32 %v2427, %v2561
      %v2571 = vsub.f32 %v2428, %v2561
      %v2572 = vsub.f32 %v2429, %v2561
      %v2573 = vsub.f32 %v2430, %v2561
      %v2574 = vsub.f32 %v2431, %v2561
      %v2575 = vsub.f32 %v2432, %v2561
      %v2576 = vsub.f32 %v2433, %v2561
      %v2577 = vsub.f32 %v2434, %v2561
      %v2578 = vsub.f32 %v2435, %v2561
      %v2579 = vsub.f32 %v2436, %v2561
      %v2580 = vsub.f32 %v2437, %v2561
      %v2581 = vsub.f32 %v2438, %v2561
      %v2582 = vsub.f32 %v2439, %v2561
      %v2583 = vsub.f32 %v2440, %v2561
      %v2584 = vsub.f32 %v2441, %v2561
      %v2585 = vsub.f32 %v2442, %v2561
      %v2586 = vsub.f32 %v2443, %v2561
      %v2587 = vsub.f32 %v2444, %v2561
      %v2588 = vsub.f32 %v2445, %v2561
      %v2589 = vsub.f32 %v2446, %v2561
      %v2590 = vsub.f32 %v2447, %v2561
      %v2591 = vsub.f32 %v2448, %v2561
      %v2592 = vsub.f32 %v2449, %v2561
      %v2593 = vsub.f32 %v2450, %v2561
      %v2594 = vsub.f32 %v2451, %v2561
      %v2595 = vsub.f32 %v2452, %v2561
      %v2596 = vsub.f32 %v2453, %v2561
      %v2597 = vsub.f32 %v2454, %v2561
      %v2598 = vadd.f32 %v2565, 1e-05
      %v2599 = vrsqrt.pop %v2598
      %v2600 = vmul.f32 %v2566, %v2599
      %v2601 = vmul.f32 %v2567, %v2599
      %v2602 = vmul.f32 %v2568, %v2599
      %v2603 = vmul.f32 %v2569, %v2599
      %v2604 = vmul.f32 %v2570, %v2599
      %v2605 = vmul.f32 %v2571, %v2599
      %v2606 = vmul.f32 %v2572, %v2599
      %v2607 = vmul.f32 %v2573, %v2599
      %v2608 = vmul.f32 %v2574, %v2599
      %v2609 = vmul.f32 %v2575, %v2599
      %v2610 = vmul.f32 %v2576, %v2599
      %v2611 = vmul.f32 %v2577, %v2599
      %v2612 = vmul.f32 %v2578, %v2599
      %v2613 = vmul.f32 %v2579, %v2599
      %v2614 = vmul.f32 %v2580, %v2599
      %v2615 = vmul.f32 %v2581, %v2599
      %v2616 = vmul.f32 %v2582, %v2599
      %v2617 = vmul.f32 %v2583, %v2599
      %v2618 = vmul.f32 %v2584, %v2599
      %v2619 = vmul.f32 %v2585, %v2599
      %v2620 = vmul.f32 %v2586, %v2599
      %v2621 = vmul.f32 %v2587, %v2599
      %v2622 = vmul.f32 %v2588, %v2599
      %v2623 = vmul.f32 %v2589, %v2599
      %v2624 = vmul.f32 %v2590, %v2599
      %v2625 = vmul.f32 %v2591, %v2599
      %v2626 = vmul.f32 %v2592, %v2599
      %v2627 = vmul.f32 %v2593, %v2599
      %v2628 = vmul.f32 %v2594, %v2599
      %v2629 = vmul.f32 %v2595, %v2599
      %v2630 = vmul.f32 %v2596, %v2599
      %v2631 = vmul.f32 %v2597, %v2599
      %v2632 = vmax.f32 %v2600, 0.0
      %v2633 = vmax.f32 %v2601, 0.0
      %v2634 = vmax.f32 %v2602, 0.0
      %v2635 = vmax.f32 %v2603, 0.0
      %v2636 = vmax.f32 %v2604, 0.0
      %v2637 = vmax.f32 %v2605, 0.0
      %v2638 = vmax.f32 %v2606, 0.0
      %v2639 = vmax.f32 %v2607, 0.0
      %v2640 = vmax.f32 %v2608, 0.0
      %v2641 = vmax.f32 %v2609, 0.0
      %v2642 = vmax.f32 %v2610, 0.0
      %v2643 = vmax.f32 %v2611, 0.0
      %v2644 = vmax.f32 %v2612, 0.0
      %v2645 = vmax.f32 %v2613, 0.0
      %v2646 = vmax.f32 %v2614, 0.0
      %v2647 = vmax.f32 %v2615, 0.0
      %v2648 = vmax.f32 %v2616, 0.0
      %v2649 = vmax.f32 %v2617, 0.0
      %v2650 = vmax.f32 %v2618, 0.0
      %v2651 = vmax.f32 %v2619, 0.0
      %v2652 = vmax.f32 %v2620, 0.0
      %v2653 = vmax.f32 %v2621, 0.0
      %v2654 = vmax.f32 %v2622, 0.0
      %v2655 = vmax.f32 %v2623, 0.0
      %v2656 = vmax.f32 %v2624, 0.0
      %v2657 = vmax.f32 %v2625, 0.0
      %v2658 = vmax.f32 %v2626, 0.0
      %v2659 = vmax.f32 %v2627, 0.0
      %v2660 = vmax.f32 %v2628, 0.0
      %v2661 = vmax.f32 %v2629, 0.0
      %v2662 = vmax.f32 %v2630, 0.0
      %v2663 = vmax.f32 %v2631, 0.0
      %v2664 = vrot.slane %v2632, 7
      %v2665 = vrot.slane %v2634, 7
      %v2666 = vrot.slane %v2636, 7
      %v2667 = vrot.slane %v2638, 7
      %v2668 = vrot.slane %v2640, 7
      %v2669 = vrot.slane %v2642, 7
      %v2670 = vrot.slane %v2644, 7
      %v2671 = vrot.slane %v2646, 7
      %v2672 = vrot.slane %v2648, 7
      %v2673 = vrot.slane %v2650, 7
      %v2674 = vrot.slane %v2652, 7
      %v2675 = vrot.slane %v2654, 7
      %v2676 = vrot.slane %v2656, 7
      %v2677 = vrot.slane %v2658, 7
      %v2678 = vrot.slane %v2660, 7
      %v2679 = vrot.slane %v2662, 7
      %v2680 = vrot.slane %v2633, 7
      %v2681 = vrot.slane %v2635, 7
      %v2682 = vrot.slane %v2637, 7
      %v2683 = vrot.slane %v2639, 7
      %v2684 = vrot.slane %v2641, 7
      %v2685 = vrot.slane %v2643, 7
      %v2686 = vrot.slane %v2645, 7
      %v2687 = vrot.slane %v2647, 7
      %v2688 = vrot.slane %v2649, 7
      %v2689 = vrot.slane %v2651, 7
      %v2690 = vrot.slane %v2653, 7
      %v2691 = vrot.slane %v2655, 7
      %v2692 = vrot.slane %v2657, 7
      %v2693 = vrot.slane %v2659, 7
      %v2694 = vrot.slane %v2661, 7
      %v2695 = vrot.slane %v2663, 7
      %v2696 = vsel %vm238, %v2664, %v2680
      %v2697 = vsel %vm238, %v2665, %v2681
      %v2698 = vsel %vm238, %v2666, %v2682
      %v2699 = vsel %vm238, %v2667, %v2683
      %v2700 = vsel %vm238, %v2668, %v2684
      %v2701 = vsel %vm238, %v2669, %v2685
      %v2702 = vsel %vm238, %v2670, %v2686
      %v2703 = vsel %vm238, %v2671, %v2687
      %v2704 = vsel %vm238, %v2672, %v2688
      %v2705 = vsel %vm238, %v2673, %v2689
      %v2706 = vsel %vm238, %v2674, %v2690
      %v2707 = vsel %vm238, %v2675, %v2691
      %v2708 = vsel %vm238, %v2676, %v2692
      %v2709 = vsel %vm238, %v2677, %v2693
      %v2710 = vsel %vm238, %v2678, %v2694
      %v2711 = vsel %vm238, %v2679, %v2695
      %v2712 = vsel %vm238, %v2680, %v2664
      %v2713 = vsel %vm238, %v2681, %v2665
      %v2714 = vsel %vm238, %v2682, %v2666
      %v2715 = vsel %vm238, %v2683, %v2667
      %v2716 = vsel %vm238, %v2684, %v2668
      %v2717 = vsel %vm238, %v2685, %v2669
      %v2718 = vsel %vm238, %v2686, %v2670
      %v2719 = vsel %vm238, %v2687, %v2671
      %v2720 = vsel %vm238, %v2688, %v2672
      %v2721 = vsel %vm238, %v2689, %v2673
      %v2722 = vsel %vm238, %v2690, %v2674
      %v2723 = vsel %vm238, %v2691, %v2675
      %v2724 = vsel %vm238, %v2692, %v2676
      %v2725 = vsel %vm238, %v2693, %v2677
      %v2726 = vsel %vm238, %v2694, %v2678
      %v2727 = vsel %vm238, %v2695, %v2679
      %v2728 = vrot.slane %v2632, 1
      %v2729 = vrot.slane %v2634, 1
      %v2730 = vrot.slane %v2636, 1
      %v2731 = vrot.slane %v2638, 1
      %v2732 = vrot.slane %v2640, 1
      %v2733 = vrot.slane %v2642, 1
      %v2734 = vrot.slane %v2644, 1
      %v2735 = vrot.slane %v2646, 1
      %v2736 = vrot.slane %v2648, 1
      %v2737 = vrot.slane %v2650, 1
      %v2738 = vrot.slane %v2652, 1
      %v2739 = vrot.slane %v2654, 1
      %v2740 = vrot.slane %v2656, 1
      %v2741 = vrot.slane %v2658, 1
      %v2742 = vrot.slane %v2660, 1
      %v2743 = vrot.slane %v2662, 1
      %v2744 = vrot.slane %v2633, 1
      %v2745 = vrot.slane %v2635, 1
      %v2746 = vrot.slane %v2637, 1
      %v2747 = vrot.slane %v2639, 1
      %v2748 = vrot.slane %v2641, 1
      %v2749 = vrot.slane %v2643, 1
      %v2750 = vrot.slane %v2645, 1
      %v2751 = vrot.slane %v2647, 1
      %v2752 = vrot.slane %v2649, 1
      %v2753 = vrot.slane %v2651, 1
      %v2754 = vrot.slane %v2653, 1
      %v2755 = vrot.slane %v2655, 1
      %v2756 = vrot.slane %v2657, 1
      %v2757 = vrot.slane %v2659, 1
      %v2758 = vrot.slane %v2661, 1
      %v2759 = vrot.slane %v2663, 1
      %v2760 = vsel %vm303, %v2728, %v2744
      %v2761 = vsel %vm303, %v2729, %v2745
      %v2762 = vsel %vm303, %v2730, %v2746
      %v2763 = vsel %vm303, %v2731, %v2747
      %v2764 = vsel %vm303, %v2732, %v2748
      %v2765 = vsel %vm303, %v2733, %v2749
      %v2766 = vsel %vm303, %v2734, %v2750
      %v2767 = vsel %vm303, %v2735, %v2751
      %v2768 = vsel %vm303, %v2736, %v2752
      %v2769 = vsel %vm303, %v2737, %v2753
      %v2770 = vsel %vm303, %v2738, %v2754
      %v2771 = vsel %vm303, %v2739, %v2755
      %v2772 = vsel %vm303, %v2740, %v2756
      %v2773 = vsel %vm303, %v2741, %v2757
      %v2774 = vsel %vm303, %v2742, %v2758
      %v2775 = vsel %vm303, %v2743, %v2759
      %v2776 = vsel %vm303, %v2744, %v2728
      %v2777 = vsel %vm303, %v2745, %v2729
      %v2778 = vsel %vm303, %v2746, %v2730
      %v2779 = vsel %vm303, %v2747, %v2731
      %v2780 = vsel %vm303, %v2748, %v2732
      %v2781 = vsel %vm303, %v2749, %v2733
      %v2782 = vsel %vm303, %v2750, %v2734
      %v2783 = vsel %vm303, %v2751, %v2735
      %v2784 = vsel %vm303, %v2752, %v2736
      %v2785 = vsel %vm303, %v2753, %v2737
      %v2786 = vsel %vm303, %v2754, %v2738
      %v2787 = vsel %vm303, %v2755, %v2739
      %v2788 = vsel %vm303, %v2756, %v2740
      %v2789 = vsel %vm303, %v2757, %v2741
      %v2790 = vsel %vm303, %v2758, %v2742
      %v2791 = vsel %vm303, %v2759, %v2743
      %v2792 = vpack.c.bf16 %v2696, %v2712
      %v2793 = vpack.c.bf16 %v2697, %v2713
      %v2794 = vpack.c.bf16 %v2698, %v2714
      %v2795 = vpack.c.bf16 %v2699, %v2715
      %v2796 = vpack.c.bf16 %v2700, %v2716
      %v2797 = vpack.c.bf16 %v2701, %v2717
      %v2798 = vpack.c.bf16 %v2702, %v2718
      %v2799 = vpack.c.bf16 %v2703, %v2719
      %v2800 = vpack.c.bf16 %v2704, %v2720
      %v2801 = vpack.c.bf16 %v2705, %v2721
      %v2802 = vpack.c.bf16 %v2706, %v2722
      %v2803 = vpack.c.bf16 %v2707, %v2723
      %v2804 = vpack.c.bf16 %v2708, %v2724
      %v2805 = vpack.c.bf16 %v2709, %v2725
      %v2806 = vpack.c.bf16 %v2710, %v2726
      %v2807 = vpack.c.bf16 %v2711, %v2727
      %2808 = vst [vmem:[%s352] sm:$0xff] %v2792
      %2809 = vst [vmem:[%s352 + $0x18] sm:$0xff] %v2793
      %2810 = vst [vmem:[%s352 + $0x30] sm:$0xff] %v2794
      %2811 = vst [vmem:[%s352 + $0x48] sm:$0xff] %v2795
      %2812 = vst [vmem:[%s352 + $0x60] sm:$0xff] %v2796
      %2813 = vst [vmem:[%s352 + $0x78] sm:$0xff] %v2797
      %2814 = vst [vmem:[%s352 + $0x90] sm:$0xff] %v2798
      %2815 = vst [vmem:[%s352 + $0xa8] sm:$0xff] %v2799
      %2816 = vst [vmem:[%s352 + $0xc0] sm:$0xff] %v2800
      %2817 = vst [vmem:[%s352 + $0xd8] sm:$0xff] %v2801
      %2818 = vst [vmem:[%s352 + $0xf0] sm:$0xff] %v2802
      %2819 = vst [vmem:[%s352 + $0x108] sm:$0xff] %v2803
      %2820 = vst [vmem:[%s352 + $0x120] sm:$0xff] %v2804
      %2821 = vst [vmem:[%s352 + $0x138] sm:$0xff] %v2805
      %2822 = vst [vmem:[%s352 + $0x150] sm:$0xff] %v2806
      %2823 = vst [vmem:[%s352 + $0x168] sm:$0xff] %v2807
      %2824 = vst [vmem:[#allocation2] sm:$0xff] %v2793
      %2825 = vst [vmem:[%s370] sm:$0xff] %v2806
      %v2826 = vpack.c.bf16 %v2633, %v2632
      %v2827 = vpack.c.bf16 %v2635, %v2634
      %v2828 = vpack.c.bf16 %v2637, %v2636
      %v2829 = vpack.c.bf16 %v2639, %v2638
      %v2830 = vpack.c.bf16 %v2641, %v2640
      %v2831 = vpack.c.bf16 %v2643, %v2642
      %v2832 = vpack.c.bf16 %v2645, %v2644
      %v2833 = vpack.c.bf16 %v2647, %v2646
      %v2834 = vpack.c.bf16 %v2649, %v2648
      %v2835 = vpack.c.bf16 %v2651, %v2650
      %v2836 = vpack.c.bf16 %v2653, %v2652
      %v2837 = vpack.c.bf16 %v2655, %v2654
      %v2838 = vpack.c.bf16 %v2657, %v2656
      %v2839 = vpack.c.bf16 %v2659, %v2658
      %v2840 = vpack.c.bf16 %v2661, %v2660
      %v2841 = vpack.c.bf16 %v2663, %v2662
      %2842 = vst [vmem:[%s352 + $0x8] sm:$0xff] %v2826
      %2843 = vst [vmem:[%s352 + $0x20] sm:$0xff] %v2827
      %2844 = vst [vmem:[%s352 + $0x38] sm:$0xff] %v2828
      %2845 = vst [vmem:[%s352 + $0x50] sm:$0xff] %v2829
      %2846 = vst [vmem:[%s352 + $0x68] sm:$0xff] %v2830
      %2847 = vst [vmem:[%s352 + $0x80] sm:$0xff] %v2831
      %2848 = vst [vmem:[%s352 + $0x98] sm:$0xff] %v2832
      %2849 = vst [vmem:[%s352 + $0xb0] sm:$0xff] %v2833
      %2850 = vst [vmem:[%s352 + $0xc8] sm:$0xff] %v2834
      %2851 = vst [vmem:[%s352 + $0xe0] sm:$0xff] %v2835
      %2852 = vst [vmem:[%s352 + $0xf8] sm:$0xff] %v2836
      %2853 = vst [vmem:[%s352 + $0x110] sm:$0xff] %v2837
      %2854 = vst [vmem:[%s352 + $0x128] sm:$0xff] %v2838
      %2855 = vst [vmem:[%s352 + $0x140] sm:$0xff] %v2839
      %2856 = vst [vmem:[%s352 + $0x158] sm:$0xff] %v2840
      %2857 = vst [vmem:[%s352 + $0x170] sm:$0xff] %v2841
      %2858 = vst [vmem:[#allocation2 + $0x8] sm:$0xff] %v2827
      %2859 = vst [vmem:[%s370 + $0x8] sm:$0xff] %v2840
      %v2860 = vpack.c.bf16 %v2776, %v2760
      %v2861 = vpack.c.bf16 %v2777, %v2761
      %v2862 = vpack.c.bf16 %v2778, %v2762
      %v2863 = vpack.c.bf16 %v2779, %v2763
      %v2864 = vpack.c.bf16 %v2780, %v2764
      %v2865 = vpack.c.bf16 %v2781, %v2765
      %v2866 = vpack.c.bf16 %v2782, %v2766
      %v2867 = vpack.c.bf16 %v2783, %v2767
      %v2868 = vpack.c.bf16 %v2784, %v2768
      %v2869 = vpack.c.bf16 %v2785, %v2769
      %v2870 = vpack.c.bf16 %v2786, %v2770
      %v2871 = vpack.c.bf16 %v2787, %v2771
      %v2872 = vpack.c.bf16 %v2788, %v2772
      %v2873 = vpack.c.bf16 %v2789, %v2773
      %v2874 = vpack.c.bf16 %v2790, %v2774
      %v2875 = vpack.c.bf16 %v2791, %v2775
      %2876 = vst [vmem:[%s352 + $0x10] sm:$0xff] %v2860
      %2877 = vst [vmem:[%s352 + $0x28] sm:$0xff] %v2861
      %2878 = vst [vmem:[%s352 + $0x40] sm:$0xff] %v2862
      %2879 = vst [vmem:[%s352 + $0x58] sm:$0xff] %v2863
      %2880 = vst [vmem:[%s352 + $0x70] sm:$0xff] %v2864
      %2881 = vst [vmem:[%s352 + $0x88] sm:$0xff] %v2865
      %2882 = vst [vmem:[%s352 + $0xa0] sm:$0xff] %v2866
      %2883 = vst [vmem:[%s352 + $0xb8] sm:$0xff] %v2867
      %2884 = vst [vmem:[%s352 + $0xd0] sm:$0xff] %v2868
      %2885 = vst [vmem:[%s352 + $0xe8] sm:$0xff] %v2869
      %2886 = vst [vmem:[%s352 + $0x100] sm:$0xff] %v2870
      %2887 = vst [vmem:[%s352 + $0x118] sm:$0xff] %v2871
      %2888 = vst [vmem:[%s352 + $0x130] sm:$0xff] %v2872
      %2889 = vst [vmem:[%s352 + $0x148] sm:$0xff] %v2873
      %2890 = vst [vmem:[%s352 + $0x160] sm:$0xff] %v2874
      %2891 = vst [vmem:[%s352 + $0x178] sm:$0xff] %v2875
      %2892 = vst [vmem:[#allocation2 + $0x10] sm:$0xff] %v2861
      %2893 = vst [vmem:[%s370 + $0x10] sm:$0xff] %v2874
      %v2894 = vld [vmem:[#allocation2 + $0x8] sm:$0x1]
      %v2895 = vld [vmem:[#allocation2 + $0x20] sm:$0x1]
      %v2896 = vld [vmem:[#allocation2 + $0x38] sm:$0x1]
      %v2897 = vld [vmem:[#allocation2 + $0x50] sm:$0x1]
      %v2898 = vld [vmem:[#allocation2 + $0x68] sm:$0x1]
      %v2899 = vld [vmem:[#allocation2 + $0x80] sm:$0x1]
      %v2900 = vld [vmem:[#allocation2 + $0x98] sm:$0x1]
      %v2901 = vld [vmem:[#allocation2 + $0xb0] sm:$0x1]
      %v2902 = vld [vmem:[#allocation2 + $0xc8] sm:$0x1]
      %v2903 = vld [vmem:[#allocation2 + $0xe0] sm:$0x1]
      %v2904 = vld [vmem:[#allocation2 + $0xf8] sm:$0x1]
      %v2905 = vld [vmem:[#allocation2 + $0x110] sm:$0x1]
      %v2906 = vld [vmem:[#allocation2 + $0x128] sm:$0x1]
      %v2907 = vld [vmem:[#allocation2 + $0x140] sm:$0x1]
      %v2908 = vld [vmem:[#allocation2 + $0x158] sm:$0x1]
      %v2909 = vld [vmem:[#allocation2 + $0x170] sm:$0x1]
      %v2910 = vld [vmem:[#allocation2 + $0x188] sm:$0x1]
      %v2911 = vld [vmem:[#allocation2 + $0x1a0] sm:$0x1]
      %v2913 = vshrl.u32 %v2894, 16
      %v2916 = vshrl.u32 %v2895, 16
      %v2919 = vshrl.u32 %v2896, 16
      %v2922 = vshrl.u32 %v2897, 16
      %v2925 = vshrl.u32 %v2898, 16
      %v2928 = vshrl.u32 %v2899, 16
      %v2931 = vshrl.u32 %v2900, 16
      %v2934 = vshrl.u32 %v2901, 16
      %v2937 = vshrl.u32 %v2902, 16
      %v2940 = vshrl.u32 %v2903, 16
      %v2943 = vshrl.u32 %v2904, 16
      %v2946 = vshrl.u32 %v2905, 16
      %v2949 = vshrl.u32 %v2906, 16
      %v2952 = vshrl.u32 %v2907, 16
      %v2955 = vshrl.u32 %v2908, 16
      %v2958 = vshrl.u32 %v2909, 16
      %v2961 = vshrl.u32 %v2910, 16
      %v2964 = vshrl.u32 %v2911, 16
      %v2984 = vld [vmem:[#allocation2] sm:$0x1]
      %v2985 = vsel %vm532, %v2913, %v2984
      %2986 = vst [vmem:[#allocation2] sm:$0x1] %v2985
      %v2987 = vld [vmem:[#allocation2 + $0x18] sm:$0x1]
      %v2988 = vsel %vm532, %v2916, %v2987
      %2989 = vst [vmem:[#allocation2 + $0x18] sm:$0x1] %v2988
      %v2990 = vld [vmem:[#allocation2 + $0x30] sm:$0x1]
      %v2991 = vsel %vm532, %v2919, %v2990
      %2992 = vst [vmem:[#allocation2 + $0x30] sm:$0x1] %v2991
      %v2993 = vld [vmem:[#allocation2 + $0x48] sm:$0x1]
      %v2994 = vsel %vm532, %v2922, %v2993
      %2995 = vst [vmem:[#allocation2 + $0x48] sm:$0x1] %v2994
      %v2996 = vld [vmem:[#allocation2 + $0x60] sm:$0x1]
      %v2997 = vsel %vm532, %v2925, %v2996
      %2998 = vst [vmem:[#allocation2 + $0x60] sm:$0x1] %v2997
      %v2999 = vld [vmem:[#allocation2 + $0x78] sm:$0x1]
      %v3000 = vsel %vm532, %v2928, %v2999
      %3001 = vst [vmem:[#allocation2 + $0x78] sm:$0x1] %v3000
      %v3002 = vld [vmem:[#allocation2 + $0x90] sm:$0x1]
      %v3003 = vsel %vm532, %v2931, %v3002
      %3004 = vst [vmem:[#allocation2 + $0x90] sm:$0x1] %v3003
      %v3005 = vld [vmem:[#allocation2 + $0xa8] sm:$0x1]
      %v3006 = vsel %vm532, %v2934, %v3005
      %3007 = vst [vmem:[#allocation2 + $0xa8] sm:$0x1] %v3006
      %v3008 = vld [vmem:[#allocation2 + $0xc0] sm:$0x1]
      %v3009 = vsel %vm532, %v2937, %v3008
      %3010 = vst [vmem:[#allocation2 + $0xc0] sm:$0x1] %v3009
      %v3011 = vld [vmem:[#allocation2 + $0xd8] sm:$0x1]
      %v3012 = vsel %vm532, %v2940, %v3011
      %3013 = vst [vmem:[#allocation2 + $0xd8] sm:$0x1] %v3012
      %v3014 = vld [vmem:[#allocation2 + $0xf0] sm:$0x1]
      %v3015 = vsel %vm532, %v2943, %v3014
      %3016 = vst [vmem:[#allocation2 + $0xf0] sm:$0x1] %v3015
      %v3017 = vld [vmem:[#allocation2 + $0x108] sm:$0x1]
      %v3018 = vsel %vm532, %v2946, %v3017
      %3019 = vst [vmem:[#allocation2 + $0x108] sm:$0x1] %v3018
      %v3020 = vld [vmem:[#allocation2 + $0x120] sm:$0x1]
      %v3021 = vsel %vm532, %v2949, %v3020
      %3022 = vst [vmem:[#allocation2 + $0x120] sm:$0x1] %v3021
      %v3023 = vld [vmem:[#allocation2 + $0x138] sm:$0x1]
      %v3024 = vsel %vm532, %v2952, %v3023
      %3025 = vst [vmem:[#allocation2 + $0x138] sm:$0x1] %v3024
      %v3026 = vld [vmem:[#allocation2 + $0x150] sm:$0x1]
      %v3027 = vsel %vm532, %v2955, %v3026
      %3028 = vst [vmem:[#allocation2 + $0x150] sm:$0x1] %v3027
      %v3029 = vld [vmem:[#allocation2 + $0x168] sm:$0x1]
      %v3030 = vsel %vm532, %v2958, %v3029
      %3031 = vst [vmem:[#allocation2 + $0x168] sm:$0x1] %v3030
      %v3032 = vld [vmem:[#allocation2 + $0x180] sm:$0x1]
      %v3033 = vsel %vm532, %v2961, %v3032
      %3034 = vst [vmem:[#allocation2 + $0x180] sm:$0x1] %v3033
      %v3035 = vld [vmem:[#allocation2 + $0x198] sm:$0x1]
      %v3036 = vsel %vm532, %v2964, %v3035
      %3037 = vst [vmem:[#allocation2 + $0x198] sm:$0x1] %v3036
      %v3038 = vld [vmem:[#allocation2 + $0x8] sm:$0x80]
      %v3039 = vld [vmem:[#allocation2 + $0x20] sm:$0x80]
      %v3040 = vld [vmem:[#allocation2 + $0x38] sm:$0x80]
      %v3041 = vld [vmem:[#allocation2 + $0x50] sm:$0x80]
      %v3042 = vld [vmem:[#allocation2 + $0x68] sm:$0x80]
      %v3043 = vld [vmem:[#allocation2 + $0x80] sm:$0x80]
      %v3044 = vld [vmem:[#allocation2 + $0x98] sm:$0x80]
      %v3045 = vld [vmem:[#allocation2 + $0xb0] sm:$0x80]
      %v3046 = vld [vmem:[#allocation2 + $0xc8] sm:$0x80]
      %v3047 = vld [vmem:[#allocation2 + $0xe0] sm:$0x80]
      %v3048 = vld [vmem:[#allocation2 + $0xf8] sm:$0x80]
      %v3049 = vld [vmem:[#allocation2 + $0x110] sm:$0x80]
      %v3050 = vld [vmem:[#allocation2 + $0x128] sm:$0x80]
      %v3051 = vld [vmem:[#allocation2 + $0x140] sm:$0x80]
      %v3052 = vld [vmem:[#allocation2 + $0x158] sm:$0x80]
      %v3053 = vld [vmem:[#allocation2 + $0x170] sm:$0x80]
      %v3054 = vld [vmem:[#allocation2 + $0x188] sm:$0x80]
      %v3055 = vld [vmem:[#allocation2 + $0x1a0] sm:$0x80]
      %v3057 = vshll.u32 %v3038, 16
      %v3060 = vshll.u32 %v3039, 16
      %v3063 = vshll.u32 %v3040, 16
      %v3066 = vshll.u32 %v3041, 16
      %v3069 = vshll.u32 %v3042, 16
      %v3072 = vshll.u32 %v3043, 16
      %v3075 = vshll.u32 %v3044, 16
      %v3078 = vshll.u32 %v3045, 16
      %v3081 = vshll.u32 %v3046, 16
      %v3084 = vshll.u32 %v3047, 16
      %v3087 = vshll.u32 %v3048, 16
      %v3090 = vshll.u32 %v3049, 16
      %v3093 = vshll.u32 %v3050, 16
      %v3096 = vshll.u32 %v3051, 16
      %v3099 = vshll.u32 %v3052, 16
      %v3102 = vshll.u32 %v3053, 16
      %v3105 = vshll.u32 %v3054, 16
      %v3108 = vshll.u32 %v3055, 16
      %v3128 = vld [vmem:[#allocation2 + $0x10] sm:$0x80]
      %v3129 = vsel %vm679, %v3057, %v3128
      %3130 = vst [vmem:[#allocation2 + $0x10] sm:$0x80] %v3129
      %v3131 = vld [vmem:[#allocation2 + $0x28] sm:$0x80]
      %v3132 = vsel %vm679, %v3060, %v3131
      %3133 = vst [vmem:[#allocation2 + $0x28] sm:$0x80] %v3132
      %v3134 = vld [vmem:[#allocation2 + $0x40] sm:$0x80]
      %v3135 = vsel %vm679, %v3063, %v3134
      %3136 = vst [vmem:[#allocation2 + $0x40] sm:$0x80] %v3135
      %v3137 = vld [vmem:[#allocation2 + $0x58] sm:$0x80]
      %v3138 = vsel %vm679, %v3066, %v3137
      %3139 = vst [vmem:[#allocation2 + $0x58] sm:$0x80] %v3138
      %v3140 = vld [vmem:[#allocation2 + $0x70] sm:$0x80]
      %v3141 = vsel %vm679, %v3069, %v3140
      %3142 = vst [vmem:[#allocation2 + $0x70] sm:$0x80] %v3141
      %v3143 = vld [vmem:[#allocation2 + $0x88] sm:$0x80]
      %v3144 = vsel %vm679, %v3072, %v3143
      %3145 = vst [vmem:[#allocation2 + $0x88] sm:$0x80] %v3144
      %v3146 = vld [vmem:[#allocation2 + $0xa0] sm:$0x80]
      %v3147 = vsel %vm679, %v3075, %v3146
      %3148 = vst [vmem:[#allocation2 + $0xa0] sm:$0x80] %v3147
      %v3149 = vld [vmem:[#allocation2 + $0xb8] sm:$0x80]
      %v3150 = vsel %vm679, %v3078, %v3149
      %3151 = vst [vmem:[#allocation2 + $0xb8] sm:$0x80] %v3150
      %v3152 = vld [vmem:[#allocation2 + $0xd0] sm:$0x80]
      %v3153 = vsel %vm679, %v3081, %v3152
      %3154 = vst [vmem:[#allocation2 + $0xd0] sm:$0x80] %v3153
      %v3155 = vld [vmem:[#allocation2 + $0xe8] sm:$0x80]
      %v3156 = vsel %vm679, %v3084, %v3155
      %3157 = vst [vmem:[#allocation2 + $0xe8] sm:$0x80] %v3156
      %v3158 = vld [vmem:[#allocation2 + $0x100] sm:$0x80]
      %v3159 = vsel %vm679, %v3087, %v3158
      %3160 = vst [vmem:[#allocation2 + $0x100] sm:$0x80] %v3159
      %v3161 = vld [vmem:[#allocation2 + $0x118] sm:$0x80]
      %v3162 = vsel %vm679, %v3090, %v3161
      %3163 = vst [vmem:[#allocation2 + $0x118] sm:$0x80] %v3162
      %v3164 = vld [vmem:[#allocation2 + $0x130] sm:$0x80]
      %v3165 = vsel %vm679, %v3093, %v3164
      %3166 = vst [vmem:[#allocation2 + $0x130] sm:$0x80] %v3165
      %v3167 = vld [vmem:[#allocation2 + $0x148] sm:$0x80]
      %v3168 = vsel %vm679, %v3096, %v3167
      %3169 = vst [vmem:[#allocation2 + $0x148] sm:$0x80] %v3168
      %v3170 = vld [vmem:[#allocation2 + $0x160] sm:$0x80]
      %v3171 = vsel %vm679, %v3099, %v3170
      %3172 = vst [vmem:[#allocation2 + $0x160] sm:$0x80] %v3171
      %v3173 = vld [vmem:[#allocation2 + $0x178] sm:$0x80]
      %v3174 = vsel %vm679, %v3102, %v3173
      %3175 = vst [vmem:[#allocation2 + $0x178] sm:$0x80] %v3174
      %v3176 = vld [vmem:[#allocation2 + $0x190] sm:$0x80]
      %v3177 = vsel %vm679, %v3105, %v3176
      %3178 = vst [vmem:[#allocation2 + $0x190] sm:$0x80] %v3177
      %v3179 = vld [vmem:[#allocation2 + $0x1a8] sm:$0x80]
      %v3180 = vsel %vm679, %v3108, %v3179
      %3181 = vst [vmem:[#allocation2 + $0x1a8] sm:$0x80] %v3180
      %v3182 = vld [vmem:[#allocation2] sm:$0xff]
      %v3183 = vld [vmem:[#allocation2 + $0x8] sm:$0xff]
      %v3184 = vld [vmem:[#allocation2 + $0x10] sm:$0xff]
      %v3185 = vld [vmem:[#allocation2 + $0x18] sm:$0xff]
      %v3186 = vld [vmem:[#allocation2 + $0x20] sm:$0xff]
      %v3187 = vld [vmem:[#allocation2 + $0x28] sm:$0xff]
      %v3188 = vld [vmem:[#allocation2 + $0x30] sm:$0xff]
      %v3189 = vld [vmem:[#allocation2 + $0x38] sm:$0xff]
      %v3190 = vld [vmem:[#allocation2 + $0x40] sm:$0xff]
      %v3191 = vld [vmem:[#allocation2 + $0x48] sm:$0xff]
      %v3192 = vld [vmem:[#allocation2 + $0x50] sm:$0xff]
      %v3193 = vld [vmem:[#allocation2 + $0x58] sm:$0xff]
      %v3194 = vld [vmem:[#allocation2 + $0x60] sm:$0xff]
      %v3195 = vld [vmem:[#allocation2 + $0x68] sm:$0xff]
      %v3196 = vld [vmem:[#allocation2 + $0x70] sm:$0xff]
      %v3197 = vld [vmem:[#allocation2 + $0x78] sm:$0xff]
      %v3198 = vld [vmem:[#allocation2 + $0x80] sm:$0xff]
      %v3199 = vld [vmem:[#allocation2 + $0x88] sm:$0xff]
      %v3200 = vld [vmem:[#allocation2 + $0x90] sm:$0xff]
      %v3201 = vld [vmem:[#allocation2 + $0x98] sm:$0xff]
      %v3202 = vld [vmem:[#allocation2 + $0xa0] sm:$0xff]
      %v3203 = vld [vmem:[#allocation2 + $0xa8] sm:$0xff]
      %v3204 = vld [vmem:[#allocation2 + $0xb0] sm:$0xff]
      %v3205 = vld [vmem:[#allocation2 + $0xb8] sm:$0xff]
      %v3206 = vld [vmem:[#allocation2 + $0xc0] sm:$0xff]
      %v3207 = vld [vmem:[#allocation2 + $0xc8] sm:$0xff]
      %v3208 = vld [vmem:[#allocation2 + $0xd0] sm:$0xff]
      %v3209 = vld [vmem:[#allocation2 + $0xd8] sm:$0xff]
      %v3210 = vld [vmem:[#allocation2 + $0xe0] sm:$0xff]
      %v3211 = vld [vmem:[#allocation2 + $0xe8] sm:$0xff]
      %v3212 = vld [vmem:[#allocation2 + $0xf0] sm:$0xff]
      %v3213 = vld [vmem:[#allocation2 + $0xf8] sm:$0xff]
      %v3214 = vld [vmem:[#allocation2 + $0x100] sm:$0xff]
      %v3215 = vld [vmem:[#allocation2 + $0x108] sm:$0xff]
      %v3216 = vld [vmem:[#allocation2 + $0x110] sm:$0xff]
      %v3217 = vld [vmem:[#allocation2 + $0x118] sm:$0xff]
      %v3218 = vld [vmem:[#allocation2 + $0x120] sm:$0xff]
      %v3219 = vld [vmem:[#allocation2 + $0x128] sm:$0xff]
      %v3220 = vld [vmem:[#allocation2 + $0x130] sm:$0xff]
      %v3221 = vld [vmem:[#allocation2 + $0x138] sm:$0xff]
      %v3222 = vld [vmem:[#allocation2 + $0x140] sm:$0xff]
      %v3223 = vld [vmem:[#allocation2 + $0x148] sm:$0xff]
      %v3224 = vld [vmem:[#allocation2 + $0x150] sm:$0xff]
      %v3225 = vld [vmem:[#allocation2 + $0x158] sm:$0xff]
      %v3226 = vld [vmem:[#allocation2 + $0x160] sm:$0xff]
      %v3227 = vld [vmem:[#allocation2 + $0x168] sm:$0xff]
      %v3228 = vld [vmem:[#allocation2 + $0x170] sm:$0xff]
      %v3229 = vld [vmem:[#allocation2 + $0x178] sm:$0xff]
      %v3230 = vld [vmem:[%s2] sm:$0xf]
      %v3231 = vld [vmem:[%s2 + $0x4] sm:$0xf]
      %v3232 = vld [vmem:[%s2 + $0x8] sm:$0xf]
      %v3233 = vld [vmem:[%s2 + $0xc] sm:$0xf]
      %v3234 = vld [vmem:[%s2 + $0x10] sm:$0xf]
      %v3235 = vld [vmem:[%s2 + $0x14] sm:$0xf]
      %v3236 = vld [vmem:[%s2 + $0x18] sm:$0xf]
      %v3237 = vld [vmem:[%s2 + $0x1c] sm:$0xf]
      %v3238 = vld [vmem:[%s2 + $0x20] sm:$0xf]
      %v3239 = vld [vmem:[%s2 + $0x24] sm:$0xf]
      %v3240 = vld [vmem:[%s2 + $0x28] sm:$0xf]
      %v3241 = vld [vmem:[%s2 + $0x2c] sm:$0xf]
      %v3242 = vld [vmem:[%s2 + $0x30] sm:$0xf]
      %v3243 = vld [vmem:[%s2 + $0x34] sm:$0xf]
      %v3244 = vld [vmem:[%s2 + $0x38] sm:$0xf]
      %v3245 = vld [vmem:[%s2 + $0x3c] sm:$0xf]
      %v3246 = vld [vmem:[%s2 + $0x40] sm:$0xf]
      %v3247 = vld [vmem:[%s2 + $0x44] sm:$0xf]
      %v3248 = vld [vmem:[%s2 + $0x48] sm:$0xf]
      %v3249 = vld [vmem:[%s2 + $0x4c] sm:$0xf]
      %v3250 = vld [vmem:[%s2 + $0x50] sm:$0xf]
      %v3251 = vld [vmem:[%s2 + $0x54] sm:$0xf]
      %v3252 = vld [vmem:[%s2 + $0x58] sm:$0xf]
      %v3253 = vld [vmem:[%s2 + $0x5c] sm:$0xf]
      %v3254 = vld [vmem:[%s2 + $0x60] sm:$0xf]
      %v3255 = vld [vmem:[%s2 + $0x64] sm:$0xf]
      %v3256 = vld [vmem:[%s2 + $0x68] sm:$0xf]
      %v3257 = vld [vmem:[%s2 + $0x6c] sm:$0xf]
      %v3258 = vld [vmem:[%s2 + $0x70] sm:$0xf]
      %v3259 = vld [vmem:[%s2 + $0x74] sm:$0xf]
      %v3260 = vld [vmem:[%s2 + $0x78] sm:$0xf]
      %v3261 = vld [vmem:[%s2 + $0x7c] sm:$0xf]
      %v3262 = vld [vmem:[%s2 + $0x80] sm:$0xf]
      %v3263 = vld [vmem:[%s2 + $0x84] sm:$0xf]
      %v3264 = vld [vmem:[%s2 + $0x88] sm:$0xf]
      %v3265 = vld [vmem:[%s2 + $0x8c] sm:$0xf]
      %v3266 = vld [vmem:[%s2 + $0x90] sm:$0xf]
      %v3267 = vld [vmem:[%s2 + $0x94] sm:$0xf]
      %v3268 = vld [vmem:[%s2 + $0x98] sm:$0xf]
      %v3269 = vld [vmem:[%s2 + $0x9c] sm:$0xf]
      %v3270 = vld [vmem:[%s2 + $0xa0] sm:$0xf]
      %v3271 = vld [vmem:[%s2 + $0xa4] sm:$0xf]
      %v3272 = vld [vmem:[%s2 + $0xa8] sm:$0xf]
      %v3273 = vld [vmem:[%s2 + $0xac] sm:$0xf]
      %v3274 = vld [vmem:[%s2 + $0xb0] sm:$0xf]
      %v3275 = vld [vmem:[%s2 + $0xb4] sm:$0xf]
      %v3276 = vld [vmem:[%s2 + $0xb8] sm:$0xf]
      %v3277 = vld [vmem:[%s2 + $0xbc] sm:$0xf]
      %v3278 = vld [vmem:[%s352] sm:$0xff]
      %v3279 = vld [vmem:[%s352 + $0x8] sm:$0xff]
      %v3280 = vld [vmem:[%s352 + $0x10] sm:$0xff]
      %v3281 = vld [vmem:[%s352 + $0x18] sm:$0xff]
      %v3282 = vld [vmem:[%s352 + $0x20] sm:$0xff]
      %v3283 = vld [vmem:[%s352 + $0x28] sm:$0xff]
      %v3284 = vld [vmem:[%s352 + $0x30] sm:$0xff]
      %v3285 = vld [vmem:[%s352 + $0x38] sm:$0xff]
      %v3286 = vld [vmem:[%s352 + $0x40] sm:$0xff]
      %v3287 = vld [vmem:[%s352 + $0x48] sm:$0xff]
      %v3288 = vld [vmem:[%s352 + $0x50] sm:$0xff]
      %v3289 = vld [vmem:[%s352 + $0x58] sm:$0xff]
      %v3290 = vld [vmem:[%s352 + $0x60] sm:$0xff]
      %v3291 = vld [vmem:[%s352 + $0x68] sm:$0xff]
      %v3292 = vld [vmem:[%s352 + $0x70] sm:$0xff]
      %v3293 = vld [vmem:[%s352 + $0x78] sm:$0xff]
      %v3294 = vld [vmem:[%s352 + $0x80] sm:$0xff]
      %v3295 = vld [vmem:[%s352 + $0x88] sm:$0xff]
      %v3296 = vld [vmem:[%s352 + $0x90] sm:$0xff]
      %v3297 = vld [vmem:[%s352 + $0x98] sm:$0xff]
      %v3298 = vld [vmem:[%s352 + $0xa0] sm:$0xff]
      %v3299 = vld [vmem:[%s352 + $0xa8] sm:$0xff]
      %v3300 = vld [vmem:[%s352 + $0xb0] sm:$0xff]
      %v3301 = vld [vmem:[%s352 + $0xb8] sm:$0xff]
      %v3302 = vld [vmem:[%s352 + $0xc0] sm:$0xff]
      %v3303 = vld [vmem:[%s352 + $0xc8] sm:$0xff]
      %v3304 = vld [vmem:[%s352 + $0xd0] sm:$0xff]
      %v3305 = vld [vmem:[%s352 + $0xd8] sm:$0xff]
      %v3306 = vld [vmem:[%s352 + $0xe0] sm:$0xff]
      %v3307 = vld [vmem:[%s352 + $0xe8] sm:$0xff]
      %v3308 = vld [vmem:[%s352 + $0xf0] sm:$0xff]
      %v3309 = vld [vmem:[%s352 + $0xf8] sm:$0xff]
      %v3310 = vld [vmem:[%s352 + $0x100] sm:$0xff]
      %v3311 = vld [vmem:[%s352 + $0x108] sm:$0xff]
      %v3312 = vld [vmem:[%s352 + $0x110] sm:$0xff]
      %v3313 = vld [vmem:[%s352 + $0x118] sm:$0xff]
      %v3314 = vld [vmem:[%s352 + $0x120] sm:$0xff]
      %v3315 = vld [vmem:[%s352 + $0x128] sm:$0xff]
      %v3316 = vld [vmem:[%s352 + $0x130] sm:$0xff]
      %v3317 = vld [vmem:[%s352 + $0x138] sm:$0xff]
      %v3318 = vld [vmem:[%s352 + $0x140] sm:$0xff]
      %v3319 = vld [vmem:[%s352 + $0x148] sm:$0xff]
      %v3320 = vld [vmem:[%s352 + $0x150] sm:$0xff]
      %v3321 = vld [vmem:[%s352 + $0x158] sm:$0xff]
      %v3322 = vld [vmem:[%s352 + $0x160] sm:$0xff]
      %v3323 = vld [vmem:[%s352 + $0x168] sm:$0xff]
      %v3324 = vld [vmem:[%s352 + $0x170] sm:$0xff]
      %v3325 = vld [vmem:[%s352 + $0x178] sm:$0xff]
      %s3326 = scalar_lea.vmem %s2, 192
      %v3327 = vld [vmem:[%s3326] sm:$0xf]
      %v3328 = vld [vmem:[%s3326 + $0x4] sm:$0xf]
      %v3329 = vld [vmem:[%s3326 + $0x8] sm:$0xf]
      %v3330 = vld [vmem:[%s3326 + $0xc] sm:$0xf]
      %v3331 = vld [vmem:[%s3326 + $0x10] sm:$0xf]
      %v3332 = vld [vmem:[%s3326 + $0x14] sm:$0xf]
      %v3333 = vld [vmem:[%s3326 + $0x18] sm:$0xf]
      %v3334 = vld [vmem:[%s3326 + $0x1c] sm:$0xf]
      %v3335 = vld [vmem:[%s3326 + $0x20] sm:$0xf]
      %v3336 = vld [vmem:[%s3326 + $0x24] sm:$0xf]
      %v3337 = vld [vmem:[%s3326 + $0x28] sm:$0xf]
      %v3338 = vld [vmem:[%s3326 + $0x2c] sm:$0xf]
      %v3339 = vld [vmem:[%s3326 + $0x30] sm:$0xf]
      %v3340 = vld [vmem:[%s3326 + $0x34] sm:$0xf]
      %v3341 = vld [vmem:[%s3326 + $0x38] sm:$0xf]
      %v3342 = vld [vmem:[%s3326 + $0x3c] sm:$0xf]
      %v3343 = vld [vmem:[%s3326 + $0x40] sm:$0xf]
      %v3344 = vld [vmem:[%s3326 + $0x44] sm:$0xf]
      %v3345 = vld [vmem:[%s3326 + $0x48] sm:$0xf]
      %v3346 = vld [vmem:[%s3326 + $0x4c] sm:$0xf]
      %v3347 = vld [vmem:[%s3326 + $0x50] sm:$0xf]
      %v3348 = vld [vmem:[%s3326 + $0x54] sm:$0xf]
      %v3349 = vld [vmem:[%s3326 + $0x58] sm:$0xf]
      %v3350 = vld [vmem:[%s3326 + $0x5c] sm:$0xf]
      %v3351 = vld [vmem:[%s3326 + $0x60] sm:$0xf]
      %v3352 = vld [vmem:[%s3326 + $0x64] sm:$0xf]
      %v3353 = vld [vmem:[%s3326 + $0x68] sm:$0xf]
      %v3354 = vld [vmem:[%s3326 + $0x6c] sm:$0xf]
      %v3355 = vld [vmem:[%s3326 + $0x70] sm:$0xf]
      %v3356 = vld [vmem:[%s3326 + $0x74] sm:$0xf]
      %v3357 = vld [vmem:[%s3326 + $0x78] sm:$0xf]
      %v3358 = vld [vmem:[%s3326 + $0x7c] sm:$0xf]
      %v3359 = vld [vmem:[%s3326 + $0x80] sm:$0xf]
      %v3360 = vld [vmem:[%s3326 + $0x84] sm:$0xf]
      %v3361 = vld [vmem:[%s3326 + $0x88] sm:$0xf]
      %v3362 = vld [vmem:[%s3326 + $0x8c] sm:$0xf]
      %v3363 = vld [vmem:[%s3326 + $0x90] sm:$0xf]
      %v3364 = vld [vmem:[%s3326 + $0x94] sm:$0xf]
      %v3365 = vld [vmem:[%s3326 + $0x98] sm:$0xf]
      %v3366 = vld [vmem:[%s3326 + $0x9c] sm:$0xf]
      %v3367 = vld [vmem:[%s3326 + $0xa0] sm:$0xf]
      %v3368 = vld [vmem:[%s3326 + $0xa4] sm:$0xf]
      %v3369 = vld [vmem:[%s3326 + $0xa8] sm:$0xf]
      %v3370 = vld [vmem:[%s3326 + $0xac] sm:$0xf]
      %v3371 = vld [vmem:[%s3326 + $0xb0] sm:$0xf]
      %v3372 = vld [vmem:[%s3326 + $0xb4] sm:$0xf]
      %v3373 = vld [vmem:[%s3326 + $0xb8] sm:$0xf]
      %v3374 = vld [vmem:[%s3326 + $0xbc] sm:$0xf]
      %v3423 = vunpack.c.l.b16 %v3327
      %v3424 = vunpack.c.l.b16 %v3328
      %v3425 = vunpack.c.l.b16 %v3329
      %v3426 = vunpack.c.l.b16 %v3330
      %v3427 = vunpack.c.l.b16 %v3331
      %v3428 = vunpack.c.l.b16 %v3332
      %v3429 = vunpack.c.l.b16 %v3333
      %v3430 = vunpack.c.l.b16 %v3334
      %v3431 = vunpack.c.l.b16 %v3335
      %v3432 = vunpack.c.l.b16 %v3336
      %v3433 = vunpack.c.l.b16 %v3337
      %v3434 = vunpack.c.l.b16 %v3338
      %v3435 = vunpack.c.l.b16 %v3339
      %v3436 = vunpack.c.l.b16 %v3340
      %v3437 = vunpack.c.l.b16 %v3341
      %v3438 = vunpack.c.l.b16 %v3342
      %v3439 = vunpack.c.l.b16 %v3343
      %v3440 = vunpack.c.l.b16 %v3344
      %v3441 = vunpack.c.l.b16 %v3345
      %v3442 = vunpack.c.l.b16 %v3346
      %v3443 = vunpack.c.l.b16 %v3347
      %v3444 = vunpack.c.l.b16 %v3348
      %v3445 = vunpack.c.l.b16 %v3349
      %v3446 = vunpack.c.l.b16 %v3350
      %v3447 = vunpack.c.l.b16 %v3351
      %v3448 = vunpack.c.l.b16 %v3352
      %v3449 = vunpack.c.l.b16 %v3353
      %v3450 = vunpack.c.l.b16 %v3354
      %v3451 = vunpack.c.l.b16 %v3355
      %v3452 = vunpack.c.l.b16 %v3356
      %v3453 = vunpack.c.l.b16 %v3357
      %v3454 = vunpack.c.l.b16 %v3358
      %v3455 = vunpack.c.l.b16 %v3359
      %v3456 = vunpack.c.l.b16 %v3360
      %v3457 = vunpack.c.l.b16 %v3361
      %v3458 = vunpack.c.l.b16 %v3362
      %v3459 = vunpack.c.l.b16 %v3363
      %v3460 = vunpack.c.l.b16 %v3364
      %v3461 = vunpack.c.l.b16 %v3365
      %v3462 = vunpack.c.l.b16 %v3366
      %v3463 = vunpack.c.l.b16 %v3367
      %v3464 = vunpack.c.l.b16 %v3368
      %v3465 = vunpack.c.l.b16 %v3369
      %v3466 = vunpack.c.l.b16 %v3370
      %v3467 = vunpack.c.l.b16 %v3371
      %v3468 = vunpack.c.l.b16 %v3372
      %v3469 = vunpack.c.l.b16 %v3373
      %v3470 = vunpack.c.l.b16 %v3374
      %v3471 = vpack.c.b16 %v3424, %v3423
      %v3472 = vpack.c.b16 %v3426, %v3425
      %v3473 = vpack.c.b16 %v3428, %v3427
      %v3474 = vpack.c.b16 %v3430, %v3429
      %v3475 = vpack.c.b16 %v3432, %v3431
      %v3476 = vpack.c.b16 %v3434, %v3433
      %v3477 = vpack.c.b16 %v3436, %v3435
      %v3478 = vpack.c.b16 %v3438, %v3437
      %v3479 = vpack.c.b16 %v3440, %v3439
      %v3480 = vpack.c.b16 %v3442, %v3441
      %v3481 = vpack.c.b16 %v3444, %v3443
      %v3482 = vpack.c.b16 %v3446, %v3445
      %v3483 = vpack.c.b16 %v3448, %v3447
      %v3484 = vpack.c.b16 %v3450, %v3449
      %v3485 = vpack.c.b16 %v3452, %v3451
      %v3486 = vpack.c.b16 %v3454, %v3453
      %v3487 = vpack.c.b16 %v3456, %v3455
      %v3488 = vpack.c.b16 %v3458, %v3457
      %v3489 = vpack.c.b16 %v3460, %v3459
      %v3490 = vpack.c.b16 %v3462, %v3461
      %v3491 = vpack.c.b16 %v3464, %v3463
      %v3492 = vpack.c.b16 %v3466, %v3465
      %v3493 = vpack.c.b16 %v3468, %v3467
      %v3494 = vpack.c.b16 %v3470, %v3469
      %3519 = vmatprep.subr.bf16.mxu0 0
      %3520 = vmatpush1.bf16.msra.mxu0 %v3471
      %3521 = vmatprep.subr.bf16.mxu0 0
      %3522 = vmatpush1.bf16.msra.mxu0 %v3472
      %3523 = vmatprep.subr.bf16.mxu0 0
      %3524 = vmatpush1.bf16.msra.mxu0 %v3473
      %3525 = vmatprep.subr.bf16.mxu0 0
      %3526 = vmatpush1.bf16.msra.mxu0 %v3474
      %3527 = vmatprep.subr.bf16.mxu0 0
      %3528 = vmatpush1.bf16.msra.mxu0 %v3475
      %3529 = vmatprep.subr.bf16.mxu0 0
      %3530 = vmatpush1.bf16.msra.mxu0 %v3476
      %3531 = vmatprep.subr.bf16.mxu0 0
      %3532 = vmatpush1.bf16.msra.mxu0 %v3477
      %3533 = vmatprep.subr.bf16.mxu0 0
      %3534 = vmatpush1.bf16.msra.mxu0 %v3478
      %3535 = vmatprep.subr.bf16.mxu0 0
      %3536 = vmatpush1.bf16.msra.mxu0 %v3479
      %3537 = vmatprep.subr.bf16.mxu0 0
      %3538 = vmatpush1.bf16.msra.mxu0 %v3480
      %3539 = vmatprep.subr.bf16.mxu0 0
      %3540 = vmatpush1.bf16.msra.mxu0 %v3481
      %3541 = vmatprep.subr.bf16.mxu0 0
      %3542 = vmatpush1.bf16.msra.mxu0 %v3482
      %3543 = vmatprep.subr.bf16.mxu0 0
      %3544 = vmatpush1.bf16.msra.mxu0 %v3483
      %3545 = vmatprep.subr.bf16.mxu0 0
      %3546 = vmatpush1.bf16.msra.mxu0 %v3484
      %3547 = vmatprep.subr.bf16.mxu0 0
      %3548 = vmatpush1.bf16.msra.mxu0 %v3485
      %3549 = vmatprep.subr.bf16.mxu0 0
      %3550 = vmatpush1.bf16.msra.mxu0 %v3486
      %3551 = vmatprep.mubr.bf16.mxu0 %v3279
      %3552 = vmatmul.mubr.bf16.gmra.mrb[0].mxu0 %v3278
      %v3553 = vpop.f32.mrb[0].mxu0
      %v3554 = vadd.f32 0.0, %v3553
      %v3555 = vpop.f32.mrb[0].mxu0
      %v3556 = vpop.f32.mrb[0].mxu0
      %v3557 = vadd.f32 0.0, %v3556
      %v3558 = vpop.f32.mrb[0].mxu0
      %3559 = vmatprep.mubr.bf16.mxu0 %v3282
      %3560 = vmatmul.mubr.bf16.gmra.mrb[0].mxu0 %v3281
      %v3561 = vpop.f32.mrb[0].mxu0
      %v3562 = vadd.f32 0.0, %v3561
      %v3563 = vpop.f32.mrb[0].mxu0
      %v3564 = vpop.f32.mrb[0].mxu0
      %v3565 = vadd.f32 0.0, %v3564
      %v3566 = vpop.f32.mrb[0].mxu0
      %3567 = vmatprep.mubr.bf16.mxu0 %v3285
      %3568 = vmatmul.mubr.bf16.gmra.mrb[0].mxu0 %v3284
      %v3569 = vpop.f32.mrb[0].mxu0
      %v3570 = vadd.f32 0.0, %v3569
      %v3571 = vpop.f32.mrb[0].mxu0
      %v3572 = vpop.f32.mrb[0].mxu0
      %v3573 = vadd.f32 0.0, %v3572
      %v3574 = vpop.f32.mrb[0].mxu0
      %3575 = vmatprep.mubr.bf16.mxu0 %v3288
      %3576 = vmatmul.mubr.bf16.gmra.mrb[0].mxu0 %v3287
      %v3577 = vpop.f32.mrb[0].mxu0
      %v3578 = vadd.f32 0.0, %v3577
      %v3579 = vpop.f32.mrb[0].mxu0
      %v3580 = vpop.f32.mrb[0].mxu0
      %v3581 = vadd.f32 0.0, %v3580
      %v3582 = vpop.f32.mrb[0].mxu0
      %3583 = vmatprep.mubr.bf16.mxu0 %v3291
      %3584 = vmatmul.mubr.bf16.gmra.mrb[0].mxu0 %v3290
      %v3585 = vpop.f32.mrb[0].mxu0
      %v3586 = vadd.f32 0.0, %v3585
      %v3587 = vpop.f32.mrb[0].mxu0
      %v3588 = vpop.f32.mrb[0].mxu0
      %v3589 = vadd.f32 0.0, %v3588
      %v3590 = vpop.f32.mrb[0].mxu0
      %3591 = vmatprep.mubr.bf16.mxu0 %v3294
      %3592 = vmatmul.mubr.bf16.gmra.mrb[0].mxu0 %v3293
      %v3593 = vpop.f32.mrb[0].mxu0
      %v3594 = vadd.f32 0.0, %v3593
      %v3595 = vpop.f32.mrb[0].mxu0
      %v3596 = vpop.f32.mrb[0].mxu0
      %v3597 = vadd.f32 0.0, %v3596
      %v3598 = vpop.f32.mrb[0].mxu0
      %3599 = vmatprep.mubr.bf16.mxu0 %v3297
      %3600 = vmatmul.mubr.bf16.gmra.mrb[0].mxu0 %v3296
      %v3601 = vpop.f32.mrb[0].mxu0
      %v3602 = vadd.f32 0.0, %v3601
      %v3603 = vpop.f32.mrb[0].mxu0
      %v3604 = vpop.f32.mrb[0].mxu0
      %v3605 = vadd.f32 0.0, %v3604
      %v3606 = vpop.f32.mrb[0].mxu0
      %3607 = vmatprep.mubr.bf16.mxu0 %v3300
      %3608 = vmatmul.mubr.bf16.gmra.mrb[0].mxu0 %v3299
      %v3609 = vpop.f32.mrb[0].mxu0
      %v3610 = vadd.f32 0.0, %v3609
      %v3611 = vpop.f32.mrb[0].mxu0
      %v3612 = vpop.f32.mrb[0].mxu0
      %v3613 = vadd.f32 0.0, %v3612
      %v3614 = vpop.f32.mrb[0].mxu0
      %3615 = vmatprep.mubr.bf16.mxu0 %v3303
      %3616 = vmatmul.mubr.bf16.gmra.mrb[0].mxu0 %v3302
      %v3617 = vpop.f32.mrb[0].mxu0
      %v3618 = vadd.f32 0.0, %v3617
      %v3619 = vpop.f32.mrb[0].mxu0
      %v3620 = vpop.f32.mrb[0].mxu0
      %v3621 = vadd.f32 0.0, %v3620
      %v3622 = vpop.f32.mrb[0].mxu0
      %3623 = vmatprep.mubr.bf16.mxu0 %v3306
      %3624 = vmatmul.mubr.bf16.gmra.mrb[0].mxu0 %v3305
      %v3625 = vpop.f32.mrb[0].mxu0
      %v3626 = vadd.f32 0.0, %v3625
      %v3627 = vpop.f32.mrb[0].mxu0
      %v3628 = vpop.f32.mrb[0].mxu0
      %v3629 = vadd.f32 0.0, %v3628
      %v3630 = vpop.f32.mrb[0].mxu0
      %3631 = vmatprep.mubr.bf16.mxu0 %v3309
      %3632 = vmatmul.mubr.bf16.gmra.mrb[0].mxu0 %v3308
      %v3633 = vpop.f32.mrb[0].mxu0
      %v3634 = vadd.f32 0.0, %v3633
      %v3635 = vpop.f32.mrb[0].mxu0
      %v3636 = vpop.f32.mrb[0].mxu0
      %v3637 = vadd.f32 0.0, %v3636
      %v3638 = vpop.f32.mrb[0].mxu0
      %3639 = vmatprep.mubr.bf16.mxu0 %v3312
      %3640 = vmatmul.mubr.bf16.gmra.mrb[0].mxu0 %v3311
      %v3641 = vpop.f32.mrb[0].mxu0
      %v3642 = vadd.f32 0.0, %v3641
      %v3643 = vpop.f32.mrb[0].mxu0
      %v3644 = vpop.f32.mrb[0].mxu0
      %v3645 = vadd.f32 0.0, %v3644
      %v3646 = vpop.f32.mrb[0].mxu0
      %3647 = vmatprep.mubr.bf16.mxu0 %v3315
      %3648 = vmatmul.mubr.bf16.gmra.mrb[0].mxu0 %v3314
      %v3649 = vpop.f32.mrb[0].mxu0
      %v3650 = vadd.f32 0.0, %v3649
      %v3651 = vpop.f32.mrb[0].mxu0
      %v3652 = vpop.f32.mrb[0].mxu0
      %v3653 = vadd.f32 0.0, %v3652
      %v3654 = vpop.f32.mrb[0].mxu0
      %3655 = vmatprep.mubr.bf16.mxu0 %v3318
      %3656 = vmatmul.mubr.bf16.gmra.mrb[0].mxu0 %v3317
      %v3657 = vpop.f32.mrb[0].mxu0
      %v3658 = vadd.f32 0.0, %v3657
      %v3659 = vpop.f32.mrb[0].mxu0
      %v3660 = vpop.f32.mrb[0].mxu0
      %v3661 = vadd.f32 0.0, %v3660
      %v3662 = vpop.f32.mrb[0].mxu0
      %3663 = vmatprep.mubr.bf16.mxu0 %v3321
      %3664 = vmatmul.mubr.bf16.gmra.mrb[0].mxu0 %v3320
      %v3665 = vpop.f32.mrb[0].mxu0
      %v3666 = vadd.f32 0.0, %v3665
      %v3667 = vpop.f32.mrb[0].mxu0
      %v3668 = vpop.f32.mrb[0].mxu0
      %v3669 = vadd.f32 0.0, %v3668
      %v3670 = vpop.f32.mrb[0].mxu0
      %3671 = vmatprep.mubr.bf16.mxu0 %v3324
      %3672 = vmatmul.mubr.bf16.gmra.mrb[0].mxu0 %v3323
      %v3673 = vpop.f32.mrb[0].mxu0
      %v3674 = vadd.f32 0.0, %v3673
      %v3675 = vpop.f32.mrb[0].mxu0
      %v3676 = vpop.f32.mrb[0].mxu0
      %v3677 = vadd.f32 0.0, %v3676
      %v3678 = vpop.f32.mrb[0].mxu0
      %3679 = vdwg.mxu0
      %3680 = vmatprep.subr.bf16.mxu0 0
      %3681 = vmatpush1.bf16.msra.mxu0 %v3487
      %3682 = vmatprep.subr.bf16.mxu0 0
      %3683 = vmatpush1.bf16.msra.mxu0 %v3488
      %3684 = vmatprep.subr.bf16.mxu0 0
      %3685 = vmatpush1.bf16.msra.mxu0 %v3489
      %3686 = vmatprep.subr.bf16.mxu0 0
      %3687 = vmatpush1.bf16.msra.mxu0 %v3490
      %3688 = vmatprep.subr.bf16.mxu0 0
      %3689 = vmatpush1.bf16.msra.mxu0 %v3491
      %3690 = vmatprep.subr.bf16.mxu0 0
      %3691 = vmatpush1.bf16.msra.mxu0 %v3492
      %3692 = vmatprep.subr.bf16.mxu0 0
      %3693 = vmatpush1.bf16.msra.mxu0 %v3493
      %3694 = vmatprep.subr.bf16.mxu0 0
      %3695 = vmatpush1.bf16.msra.mxu0 %v3494
      %3696 = vmatprep.subr.bf16.mxu0 0
      %3697 = vmatpush1.bf16.msra.mxu0 0
      %3698 = vmatprep.subr.bf16.mxu0 0
      %3699 = vmatpush1.bf16.msra.mxu0 0
      %3700 = vmatprep.subr.bf16.mxu0 0
      %3701 = vmatpush1.bf16.msra.mxu0 0
      %3702 = vmatprep.subr.bf16.mxu0 0
      %3703 = vmatpush1.bf16.msra.mxu0 0
      %3704 = vmatprep.subr.bf16.mxu0 0
      %3705 = vmatpush1.bf16.msra.mxu0 0
      %3706 = vmatprep.subr.bf16.mxu0 0
      %3707 = vmatpush1.bf16.msra.mxu0 0
      %3708 = vmatprep.subr.bf16.mxu0 0
      %3709 = vmatpush1.bf16.msra.mxu0 0
      %3710 = vmatprep.subr.bf16.mxu0 0
      %3711 = vmatpush1.bf16.msra.mxu0 0
      %3712 = vmatprep.mubr.bf16.mxu0 0
      %3713 = vmatmul.mubr.bf16.gmra.mrb[0].mxu0 %v3280
      %v3714 = vpop.f32.mrb[0].mxu0
      %v3715 = vadd.f32 %v3554, %v3714
      %v3716 = vpop.f32.mrb[0].mxu0
      %v3717 = vpop.f32.mrb[0].mxu0
      %v3718 = vadd.f32 %v3557, %v3717
      %v3719 = vpop.f32.mrb[0].mxu0
      %3720 = vmatprep.mubr.bf16.mxu0 0
      %3721 = vmatmul.mubr.bf16.gmra.mrb[0].mxu0 %v3283
      %v3722 = vpop.f32.mrb[0].mxu0
      %v3723 = vadd.f32 %v3562, %v3722
      %v3724 = vpop.f32.mrb[0].mxu0
      %v3725 = vpop.f32.mrb[0].mxu0
      %v3726 = vadd.f32 %v3565, %v3725
      %v3727 = vpop.f32.mrb[0].mxu0
      %3728 = vmatprep.mubr.bf16.mxu0 0
      %3729 = vmatmul.mubr.bf16.gmra.mrb[0].mxu0 %v3286
      %v3730 = vpop.f32.mrb[0].mxu0
      %v3731 = vadd.f32 %v3570, %v3730
      %v3732 = vpop.f32.mrb[0].mxu0
      %v3733 = vpop.f32.mrb[0].mxu0
      %v3734 = vadd.f32 %v3573, %v3733
      %v3735 = vpop.f32.mrb[0].mxu0
      %3736 = vmatprep.mubr.bf16.mxu0 0
      %3737 = vmatmul.mubr.bf16.gmra.mrb[0].mxu0 %v3289
      %v3738 = vpop.f32.mrb[0].mxu0
      %v3739 = vadd.f32 %v3578, %v3738
      %v3740 = vpop.f32.mrb[0].mxu0
      %v3741 = vpop.f32.mrb[0].mxu0
      %v3742 = vadd.f32 %v3581, %v3741
      %v3743 = vpop.f32.mrb[0].mxu0
      %3744 = vmatprep.mubr.bf16.mxu0 0
      %3745 = vmatmul.mubr.bf16.gmra.mrb[0].mxu0 %v3292
      %v3746 = vpop.f32.mrb[0].mxu0
      %v3747 = vadd.f32 %v3586, %v3746
      %v3748 = vpop.f32.mrb[0].mxu0
      %v3749 = vpop.f32.mrb[0].mxu0
      %v3750 = vadd.f32 %v3589, %v3749
      %v3751 = vpop.f32.mrb[0].mxu0
      %3752 = vmatprep.mubr.bf16.mxu0 0
      %3753 = vmatmul.mubr.bf16.gmra.mrb[0].mxu0 %v3295
      %v3754 = vpop.f32.mrb[0].mxu0
      %v3755 = vadd.f32 %v3594, %v3754
      %v3756 = vpop.f32.mrb[0].mxu0
      %v3757 = vpop.f32.mrb[0].mxu0
      %v3758 = vadd.f32 %v3597, %v3757
      %v3759 = vpop.f32.mrb[0].mxu0
      %3760 = vmatprep.mubr.bf16.mxu0 0
      %3761 = vmatmul.mubr.bf16.gmra.mrb[0].mxu0 %v3298
      %v3762 = vpop.f32.mrb[0].mxu0
      %v3763 = vadd.f32 %v3602, %v3762
      %v3764 = vpop.f32.mrb[0].mxu0
      %v3765 = vpop.f32.mrb[0].mxu0
      %v3766 = vadd.f32 %v3605, %v3765
      %v3767 = vpop.f32.mrb[0].mxu0
      %3768 = vmatprep.mubr.bf16.mxu0 0
      %3769 = vmatmul.mubr.bf16.gmra.mrb[0].mxu0 %v3301
      %v3770 = vpop.f32.mrb[0].mxu0
      %v3771 = vadd.f32 %v3610, %v3770
      %v3772 = vpop.f32.mrb[0].mxu0
      %v3773 = vpop.f32.mrb[0].mxu0
      %v3774 = vadd.f32 %v3613, %v3773
      %v3775 = vpop.f32.mrb[0].mxu0
      %3776 = vmatprep.mubr.bf16.mxu0 0
      %3777 = vmatmul.mubr.bf16.gmra.mrb[0].mxu0 %v3304
      %v3778 = vpop.f32.mrb[0].mxu0
      %v3779 = vadd.f32 %v3618, %v3778
      %v3780 = vpop.f32.mrb[0].mxu0
      %v3781 = vpop.f32.mrb[0].mxu0
      %v3782 = vadd.f32 %v3621, %v3781
      %v3783 = vpop.f32.mrb[0].mxu0
      %3784 = vmatprep.mubr.bf16.mxu0 0
      %3785 = vmatmul.mubr.bf16.gmra.mrb[0].mxu0 %v3307
      %v3786 = vpop.f32.mrb[0].mxu0
      %v3787 = vadd.f32 %v3626, %v3786
      %v3788 = vpop.f32.mrb[0].mxu0
      %v3789 = vpop.f32.mrb[0].mxu0
      %v3790 = vadd.f32 %v3629, %v3789
      %v3791 = vpop.f32.mrb[0].mxu0
      %3792 = vmatprep.mubr.bf16.mxu0 0
      %3793 = vmatmul.mubr.bf16.gmra.mrb[0].mxu0 %v3310
      %v3794 = vpop.f32.mrb[0].mxu0
      %v3795 = vadd.f32 %v3634, %v3794
      %v3796 = vpop.f32.mrb[0].mxu0
      %v3797 = vpop.f32.mrb[0].mxu0
      %v3798 = vadd.f32 %v3637, %v3797
      %v3799 = vpop.f32.mrb[0].mxu0
      %3800 = vmatprep.mubr.bf16.mxu0 0
      %3801 = vmatmul.mubr.bf16.gmra.mrb[0].mxu0 %v3313
      %v3802 = vpop.f32.mrb[0].mxu0
      %v3803 = vadd.f32 %v3642, %v3802
      %v3804 = vpop.f32.mrb[0].mxu0
      %v3805 = vpop.f32.mrb[0].mxu0
      %v3806 = vadd.f32 %v3645, %v3805
      %v3807 = vpop.f32.mrb[0].mxu0
      %3808 = vmatprep.mubr.bf16.mxu0 0
      %3809 = vmatmul.mubr.bf16.gmra.mrb[0].mxu0 %v3316
      %v3810 = vpop.f32.mrb[0].mxu0
      %v3811 = vadd.f32 %v3650, %v3810
      %v3812 = vpop.f32.mrb[0].mxu0
      %v3813 = vpop.f32.mrb[0].mxu0
      %v3814 = vadd.f32 %v3653, %v3813
      %v3815 = vpop.f32.mrb[0].mxu0
      %3816 = vmatprep.mubr.bf16.mxu0 0
      %3817 = vmatmul.mubr.bf16.gmra.mrb[0].mxu0 %v3319
      %v3818 = vpop.f32.mrb[0].mxu0
      %v3819 = vadd.f32 %v3658, %v3818
      %v3820 = vpop.f32.mrb[0].mxu0
      %v3821 = vpop.f32.mrb[0].mxu0
      %v3822 = vadd.f32 %v3661, %v3821
      %v3823 = vpop.f32.mrb[0].mxu0
      %3824 = vmatprep.mubr.bf16.mxu0 0
      %3825 = vmatmul.mubr.bf16.gmra.mrb[0].mxu0 %v3322
      %v3826 = vpop.f32.mrb[0].mxu0
      %v3827 = vadd.f32 %v3666, %v3826
      %v3828 = vpop.f32.mrb[0].mxu0
      %v3829 = vpop.f32.mrb[0].mxu0
      %v3830 = vadd.f32 %v3669, %v3829
      %v3831 = vpop.f32.mrb[0].mxu0
      %3832 = vmatprep.mubr.bf16.mxu0 0
      %3833 = vmatmul.mubr.bf16.gmra.mrb[0].mxu0 %v3325
      %v3834 = vpop.f32.mrb[0].mxu0
      %v3835 = vadd.f32 %v3674, %v3834
      %v3836 = vpop.f32.mrb[0].mxu0
      %v3837 = vpop.f32.mrb[0].mxu0
      %v3838 = vadd.f32 %v3677, %v3837
      %v3839 = vpop.f32.mrb[0].mxu0
      %3840 = vdwg.mxu0
      %v3889 = vunpack.c.l.b16 %v3230
      %v3890 = vunpack.c.l.b16 %v3231
      %v3891 = vunpack.c.l.b16 %v3232
      %v3892 = vunpack.c.l.b16 %v3233
      %v3893 = vunpack.c.l.b16 %v3234
      %v3894 = vunpack.c.l.b16 %v3235
      %v3895 = vunpack.c.l.b16 %v3236
      %v3896 = vunpack.c.l.b16 %v3237
      %v3897 = vunpack.c.l.b16 %v3238
      %v3898 = vunpack.c.l.b16 %v3239
      %v3899 = vunpack.c.l.b16 %v3240
      %v3900 = vunpack.c.l.b16 %v3241
      %v3901 = vunpack.c.l.b16 %v3242
      %v3902 = vunpack.c.l.b16 %v3243
      %v3903 = vunpack.c.l.b16 %v3244
      %v3904 = vunpack.c.l.b16 %v3245
      %v3905 = vunpack.c.l.b16 %v3246
      %v3906 = vunpack.c.l.b16 %v3247
      %v3907 = vunpack.c.l.b16 %v3248
      %v3908 = vunpack.c.l.b16 %v3249
      %v3909 = vunpack.c.l.b16 %v3250
      %v3910 = vunpack.c.l.b16 %v3251
      %v3911 = vunpack.c.l.b16 %v3252
      %v3912 = vunpack.c.l.b16 %v3253
      %v3913 = vunpack.c.l.b16 %v3254
      %v3914 = vunpack.c.l.b16 %v3255
      %v3915 = vunpack.c.l.b16 %v3256
      %v3916 = vunpack.c.l.b16 %v3257
      %v3917 = vunpack.c.l.b16 %v3258
      %v3918 = vunpack.c.l.b16 %v3259
      %v3919 = vunpack.c.l.b16 %v3260
      %v3920 = vunpack.c.l.b16 %v3261
      %v3921 = vunpack.c.l.b16 %v3262
      %v3922 = vunpack.c.l.b16 %v3263
      %v3923 = vunpack.c.l.b16 %v3264
      %v3924 = vunpack.c.l.b16 %v3265
      %v3925 = vunpack.c.l.b16 %v3266
      %v3926 = vunpack.c.l.b16 %v3267
      %v3927 = vunpack.c.l.b16 %v3268
      %v3928 = vunpack.c.l.b16 %v3269
      %v3929 = vunpack.c.l.b16 %v3270
      %v3930 = vunpack.c.l.b16 %v3271
      %v3931 = vunpack.c.l.b16 %v3272
      %v3932 = vunpack.c.l.b16 %v3273
      %v3933 = vunpack.c.l.b16 %v3274
      %v3934 = vunpack.c.l.b16 %v3275
      %v3935 = vunpack.c.l.b16 %v3276
      %v3936 = vunpack.c.l.b16 %v3277
      %v3937 = vpack.c.b16 %v3890, %v3889
      %v3938 = vpack.c.b16 %v3892, %v3891
      %v3939 = vpack.c.b16 %v3894, %v3893
      %v3940 = vpack.c.b16 %v3896, %v3895
      %v3941 = vpack.c.b16 %v3898, %v3897
      %v3942 = vpack.c.b16 %v3900, %v3899
      %v3943 = vpack.c.b16 %v3902, %v3901
      %v3944 = vpack.c.b16 %v3904, %v3903
      %v3945 = vpack.c.b16 %v3906, %v3905
      %v3946 = vpack.c.b16 %v3908, %v3907
      %v3947 = vpack.c.b16 %v3910, %v3909
      %v3948 = vpack.c.b16 %v3912, %v3911
      %v3949 = vpack.c.b16 %v3914, %v3913
      %v3950 = vpack.c.b16 %v3916, %v3915
      %v3951 = vpack.c.b16 %v3918, %v3917
      %v3952 = vpack.c.b16 %v3920, %v3919
      %v3953 = vpack.c.b16 %v3922, %v3921
      %v3954 = vpack.c.b16 %v3924, %v3923
      %v3955 = vpack.c.b16 %v3926, %v3925
      %v3956 = vpack.c.b16 %v3928, %v3927
      %v3957 = vpack.c.b16 %v3930, %v3929
      %v3958 = vpack.c.b16 %v3932, %v3931
      %v3959 = vpack.c.b16 %v3934, %v3933
      %v3960 = vpack.c.b16 %v3936, %v3935
      %3985 = vmatprep.subr.bf16.mxu0 0
      %3986 = vmatpush1.bf16.msra.mxu0 %v3937
      %3987 = vmatprep.subr.bf16.mxu0 0
      %3988 = vmatpush1.bf16.msra.mxu0 %v3938
      %3989 = vmatprep.subr.bf16.mxu0 0
      %3990 = vmatpush1.bf16.msra.mxu0 %v3939
      %3991 = vmatprep.subr.bf16.mxu0 0
      %3992 = vmatpush1.bf16.msra.mxu0 %v3940
      %3993 = vmatprep.subr.bf16.mxu0 0
      %3994 = vmatpush1.bf16.msra.mxu0 %v3941
      %3995 = vmatprep.subr.bf16.mxu0 0
      %3996 = vmatpush1.bf16.msra.mxu0 %v3942
      %3997 = vmatprep.subr.bf16.mxu0 0
      %3998 = vmatpush1.bf16.msra.mxu0 %v3943
      %3999 = vmatprep.subr.bf16.mxu0 0
      %4000 = vmatpush1.bf16.msra.mxu0 %v3944
      %4001 = vmatprep.subr.bf16.mxu0 0
      %4002 = vmatpush1.bf16.msra.mxu0 %v3945
      %4003 = vmatprep.subr.bf16.mxu0 0
      %4004 = vmatpush1.bf16.msra.mxu0 %v3946
      %4005 = vmatprep.subr.bf16.mxu0 0
      %4006 = vmatpush1.bf16.msra.mxu0 %v3947
      %4007 = vmatprep.subr.bf16.mxu0 0
      %4008 = vmatpush1.bf16.msra.mxu0 %v3948
      %4009 = vmatprep.subr.bf16.mxu0 0
      %4010 = vmatpush1.bf16.msra.mxu0 %v3949
      %4011 = vmatprep.subr.bf16.mxu0 0
      %4012 = vmatpush1.bf16.msra.mxu0 %v3950
      %4013 = vmatprep.subr.bf16.mxu0 0
      %4014 = vmatpush1.bf16.msra.mxu0 %v3951
      %4015 = vmatprep.subr.bf16.mxu0 0
      %4016 = vmatpush1.bf16.msra.mxu0 %v3952
      %4017 = vmatprep.mubr.bf16.mxu0 %v3183
      %4018 = vmatmul.mubr.bf16.gmra.mrb[0].mxu0 %v3182
      %v4019 = vpop.f32.mrb[0].mxu0
      %v4020 = vadd.f32 %v3715, %v4019
      %v4021 = vpop.f32.mrb[0].mxu0
      %v4022 = vpop.f32.mrb[0].mxu0
      %v4023 = vadd.f32 %v3718, %v4022
      %v4024 = vpop.f32.mrb[0].mxu0
      %4025 = vmatprep.mubr.bf16.mxu0 %v3186
      %4026 = vmatmul.mubr.bf16.gmra.mrb[0].mxu0 %v3185
      %v4027 = vpop.f32.mrb[0].mxu0
      %v4028 = vadd.f32 %v3723, %v4027
      %v4029 = vpop.f32.mrb[0].mxu0
      %v4030 = vpop.f32.mrb[0].mxu0
      %v4031 = vadd.f32 %v3726, %v4030
      %v4032 = vpop.f32.mrb[0].mxu0
      %4033 = vmatprep.mubr.bf16.mxu0 %v3189
      %4034 = vmatmul.mubr.bf16.gmra.mrb[0].mxu0 %v3188
      %v4035 = vpop.f32.mrb[0].mxu0
      %v4036 = vadd.f32 %v3731, %v4035
      %v4037 = vpop.f32.mrb[0].mxu0
      %v4038 = vpop.f32.mrb[0].mxu0
      %v4039 = vadd.f32 %v3734, %v4038
      %v4040 = vpop.f32.mrb[0].mxu0
      %4041 = vmatprep.mubr.bf16.mxu0 %v3192
      %4042 = vmatmul.mubr.bf16.gmra.mrb[0].mxu0 %v3191
      %v4043 = vpop.f32.mrb[0].mxu0
      %v4044 = vadd.f32 %v3739, %v4043
      %v4045 = vpop.f32.mrb[0].mxu0
      %v4046 = vpop.f32.mrb[0].mxu0
      %v4047 = vadd.f32 %v3742, %v4046
      %v4048 = vpop.f32.mrb[0].mxu0
      %4049 = vmatprep.mubr.bf16.mxu0 %v3195
      %4050 = vmatmul.mubr.bf16.gmra.mrb[0].mxu0 %v3194
      %v4051 = vpop.f32.mrb[0].mxu0
      %v4052 = vadd.f32 %v3747, %v4051
      %v4053 = vpop.f32.mrb[0].mxu0
      %v4054 = vpop.f32.mrb[0].mxu0
      %v4055 = vadd.f32 %v3750, %v4054
      %v4056 = vpop.f32.mrb[0].mxu0
      %4057 = vmatprep.mubr.bf16.mxu0 %v3198
      %4058 = vmatmul.mubr.bf16.gmra.mrb[0].mxu0 %v3197
      %v4059 = vpop.f32.mrb[0].mxu0
      %v4060 = vadd.f32 %v3755, %v4059
      %v4061 = vpop.f32.mrb[0].mxu0
      %v4062 = vpop.f32.mrb[0].mxu0
      %v4063 = vadd.f32 %v3758, %v4062
      %v4064 = vpop.f32.mrb[0].mxu0
      %4065 = vmatprep.mubr.bf16.mxu0 %v3201
      %4066 = vmatmul.mubr.bf16.gmra.mrb[0].mxu0 %v3200
      %v4067 = vpop.f32.mrb[0].mxu0
      %v4068 = vadd.f32 %v3763, %v4067
      %v4069 = vpop.f32.mrb[0].mxu0
      %v4070 = vpop.f32.mrb[0].mxu0
      %v4071 = vadd.f32 %v3766, %v4070
      %v4072 = vpop.f32.mrb[0].mxu0
      %4073 = vmatprep.mubr.bf16.mxu0 %v3204
      %4074 = vmatmul.mubr.bf16.gmra.mrb[0].mxu0 %v3203
      %v4075 = vpop.f32.mrb[0].mxu0
      %v4076 = vadd.f32 %v3771, %v4075
      %v4077 = vpop.f32.mrb[0].mxu0
      %v4078 = vpop.f32.mrb[0].mxu0
      %v4079 = vadd.f32 %v3774, %v4078
      %v4080 = vpop.f32.mrb[0].mxu0
      %4081 = vmatprep.mubr.bf16.mxu0 %v3207
      %4082 = vmatmul.mubr.bf16.gmra.mrb[0].mxu0 %v3206
      %v4083 = vpop.f32.mrb[0].mxu0
      %v4084 = vadd.f32 %v3779, %v4083
      %v4085 = vpop.f32.mrb[0].mxu0
      %v4086 = vpop.f32.mrb[0].mxu0
      %v4087 = vadd.f32 %v3782, %v4086
      %v4088 = vpop.f32.mrb[0].mxu0
      %4089 = vmatprep.mubr.bf16.mxu0 %v3210
      %4090 = vmatmul.mubr.bf16.gmra.mrb[0].mxu0 %v3209
      %v4091 = vpop.f32.mrb[0].mxu0
      %v4092 = vadd.f32 %v3787, %v4091
      %v4093 = vpop.f32.mrb[0].mxu0
      %v4094 = vpop.f32.mrb[0].mxu0
      %v4095 = vadd.f32 %v3790, %v4094
      %v4096 = vpop.f32.mrb[0].mxu0
      %4097 = vmatprep.mubr.bf16.mxu0 %v3213
      %4098 = vmatmul.mubr.bf16.gmra.mrb[0].mxu0 %v3212
      %v4099 = vpop.f32.mrb[0].mxu0
      %v4100 = vadd.f32 %v3795, %v4099
      %v4101 = vpop.f32.mrb[0].mxu0
      %v4102 = vpop.f32.mrb[0].mxu0
      %v4103 = vadd.f32 %v3798, %v4102
      %v4104 = vpop.f32.mrb[0].mxu0
      %4105 = vmatprep.mubr.bf16.mxu0 %v3216
      %4106 = vmatmul.mubr.bf16.gmra.mrb[0].mxu0 %v3215
      %v4107 = vpop.f32.mrb[0].mxu0
      %v4108 = vadd.f32 %v3803, %v4107
      %v4109 = vpop.f32.mrb[0].mxu0
      %v4110 = vpop.f32.mrb[0].mxu0
      %v4111 = vadd.f32 %v3806, %v4110
      %v4112 = vpop.f32.mrb[0].mxu0
      %4113 = vmatprep.mubr.bf16.mxu0 %v3219
      %4114 = vmatmul.mubr.bf16.gmra.mrb[0].mxu0 %v3218
      %v4115 = vpop.f32.mrb[0].mxu0
      %v4116 = vadd.f32 %v3811, %v4115
      %v4117 = vpop.f32.mrb[0].mxu0
      %v4118 = vpop.f32.mrb[0].mxu0
      %v4119 = vadd.f32 %v3814, %v4118
      %v4120 = vpop.f32.mrb[0].mxu0
      %4121 = vmatprep.mubr.bf16.mxu0 %v3222
      %4122 = vmatmul.mubr.bf16.gmra.mrb[0].mxu0 %v3221
      %v4123 = vpop.f32.mrb[0].mxu0
      %v4124 = vadd.f32 %v3819, %v4123
      %v4125 = vpop.f32.mrb[0].mxu0
      %v4126 = vpop.f32.mrb[0].mxu0
      %v4127 = vadd.f32 %v3822, %v4126
      %v4128 = vpop.f32.mrb[0].mxu0
      %4129 = vmatprep.mubr.bf16.mxu0 %v3225
      %4130 = vmatmul.mubr.bf16.gmra.mrb[0].mxu0 %v3224
      %v4131 = vpop.f32.mrb[0].mxu0
      %v4132 = vadd.f32 %v3827, %v4131
      %v4133 = vpop.f32.mrb[0].mxu0
      %v4134 = vpop.f32.mrb[0].mxu0
      %v4135 = vadd.f32 %v3830, %v4134
      %v4136 = vpop.f32.mrb[0].mxu0
      %4137 = vmatprep.mubr.bf16.mxu0 %v3228
      %4138 = vmatmul.mubr.bf16.gmra.mrb[0].mxu0 %v3227
      %v4139 = vpop.f32.mrb[0].mxu0
      %v4140 = vadd.f32 %v3835, %v4139
      %v4141 = vpop.f32.mrb[0].mxu0
      %v4142 = vpop.f32.mrb[0].mxu0
      %v4143 = vadd.f32 %v3838, %v4142
      %v4144 = vpop.f32.mrb[0].mxu0
      %4145 = vdwg.mxu0
      %4146 = vmatprep.subr.bf16.mxu0 0
      %4147 = vmatpush1.bf16.msra.mxu0 %v3953
      %4148 = vmatprep.subr.bf16.mxu0 0
      %4149 = vmatpush1.bf16.msra.mxu0 %v3954
      %4150 = vmatprep.subr.bf16.mxu0 0
      %4151 = vmatpush1.bf16.msra.mxu0 %v3955
      %4152 = vmatprep.subr.bf16.mxu0 0
      %4153 = vmatpush1.bf16.msra.mxu0 %v3956
      %4154 = vmatprep.subr.bf16.mxu0 0
      %4155 = vmatpush1.bf16.msra.mxu0 %v3957
      %4156 = vmatprep.subr.bf16.mxu0 0
      %4157 = vmatpush1.bf16.msra.mxu0 %v3958
      %4158 = vmatprep.subr.bf16.mxu0 0
      %4159 = vmatpush1.bf16.msra.mxu0 %v3959
      %4160 = vmatprep.subr.bf16.mxu0 0
      %4161 = vmatpush1.bf16.msra.mxu0 %v3960
      %4162 = vmatprep.subr.bf16.mxu0 0
      %4163 = vmatpush1.bf16.msra.mxu0 0
      %4164 = vmatprep.subr.bf16.mxu0 0
      %4165 = vmatpush1.bf16.msra.mxu0 0
      %4166 = vmatprep.subr.bf16.mxu0 0
      %4167 = vmatpush1.bf16.msra.mxu0 0
      %4168 = vmatprep.subr.bf16.mxu0 0
      %4169 = vmatpush1.bf16.msra.mxu0 0
      %4170 = vmatprep.subr.bf16.mxu0 0
      %4171 = vmatpush1.bf16.msra.mxu0 0
      %4172 = vmatprep.subr.bf16.mxu0 0
      %4173 = vmatpush1.bf16.msra.mxu0 0
      %4174 = vmatprep.subr.bf16.mxu0 0
      %4175 = vmatpush1.bf16.msra.mxu0 0
      %4176 = vmatprep.subr.bf16.mxu0 0
      %4177 = vmatpush1.bf16.msra.mxu0 0
      %4178 = vmatprep.mubr.bf16.mxu0 0
      %4179 = vmatmul.mubr.bf16.gmra.mrb[0].mxu0 %v3184
      %v4180 = vpop.f32.mrb[0].mxu0
      %v4181 = vadd.f32 %v4020, %v4180
      %v4182 = vpop.f32.mrb[0].mxu0
      %v4183 = vpop.f32.mrb[0].mxu0
      %v4184 = vadd.f32 %v4023, %v4183
      %v4185 = vpop.f32.mrb[0].mxu0
      %4186 = vmatprep.mubr.bf16.mxu0 0
      %4187 = vmatmul.mubr.bf16.gmra.mrb[0].mxu0 %v3187
      %v4188 = vpop.f32.mrb[0].mxu0
      %v4189 = vadd.f32 %v4028, %v4188
      %v4190 = vpop.f32.mrb[0].mxu0
      %v4191 = vpop.f32.mrb[0].mxu0
      %v4192 = vadd.f32 %v4031, %v4191
      %v4193 = vpop.f32.mrb[0].mxu0
      %4194 = vmatprep.mubr.bf16.mxu0 0
      %4195 = vmatmul.mubr.bf16.gmra.mrb[0].mxu0 %v3190
      %v4196 = vpop.f32.mrb[0].mxu0
      %v4197 = vadd.f32 %v4036, %v4196
      %v4198 = vpop.f32.mrb[0].mxu0
      %v4199 = vpop.f32.mrb[0].mxu0
      %v4200 = vadd.f32 %v4039, %v4199
      %v4201 = vpop.f32.mrb[0].mxu0
      %4202 = vmatprep.mubr.bf16.mxu0 0
      %4203 = vmatmul.mubr.bf16.gmra.mrb[0].mxu0 %v3193
      %v4204 = vpop.f32.mrb[0].mxu0
      %v4205 = vadd.f32 %v4044, %v4204
      %v4206 = vpop.f32.mrb[0].mxu0
      %v4207 = vpop.f32.mrb[0].mxu0
      %v4208 = vadd.f32 %v4047, %v4207
      %v4209 = vpop.f32.mrb[0].mxu0
      %4210 = vmatprep.mubr.bf16.mxu0 0
      %4211 = vmatmul.mubr.bf16.gmra.mrb[0].mxu0 %v3196
      %v4212 = vpop.f32.mrb[0].mxu0
      %v4213 = vadd.f32 %v4052, %v4212
      %v4214 = vpop.f32.mrb[0].mxu0
      %v4215 = vpop.f32.mrb[0].mxu0
      %v4216 = vadd.f32 %v4055, %v4215
      %v4217 = vpop.f32.mrb[0].mxu0
      %4218 = vmatprep.mubr.bf16.mxu0 0
      %4219 = vmatmul.mubr.bf16.gmra.mrb[0].mxu0 %v3199
      %v4220 = vpop.f32.mrb[0].mxu0
      %v4221 = vadd.f32 %v4060, %v4220
      %v4222 = vpop.f32.mrb[0].mxu0
      %v4223 = vpop.f32.mrb[0].mxu0
      %v4224 = vadd.f32 %v4063, %v4223
      %v4225 = vpop.f32.mrb[0].mxu0
      %4226 = vmatprep.mubr.bf16.mxu0 0
      %4227 = vmatmul.mubr.bf16.gmra.mrb[0].mxu0 %v3202
      %v4228 = vpop.f32.mrb[0].mxu0
      %v4229 = vadd.f32 %v4068, %v4228
      %v4230 = vpop.f32.mrb[0].mxu0
      %v4231 = vpop.f32.mrb[0].mxu0
      %v4232 = vadd.f32 %v4071, %v4231
      %v4233 = vpop.f32.mrb[0].mxu0
      %4234 = vmatprep.mubr.bf16.mxu0 0
      %4235 = vmatmul.mubr.bf16.gmra.mrb[0].mxu0 %v3205
      %v4236 = vpop.f32.mrb[0].mxu0
      %v4237 = vadd.f32 %v4076, %v4236
      %v4238 = vpop.f32.mrb[0].mxu0
      %v4239 = vpop.f32.mrb[0].mxu0
      %v4240 = vadd.f32 %v4079, %v4239
      %v4241 = vpop.f32.mrb[0].mxu0
      %4242 = vmatprep.mubr.bf16.mxu0 0
      %4243 = vmatmul.mubr.bf16.gmra.mrb[0].mxu0 %v3208
      %v4244 = vpop.f32.mrb[0].mxu0
      %v4245 = vadd.f32 %v4084, %v4244
      %v4246 = vpop.f32.mrb[0].mxu0
      %v4247 = vpop.f32.mrb[0].mxu0
      %v4248 = vadd.f32 %v4087, %v4247
      %v4249 = vpop.f32.mrb[0].mxu0
      %4250 = vmatprep.mubr.bf16.mxu0 0
      %4251 = vmatmul.mubr.bf16.gmra.mrb[0].mxu0 %v3211
      %v4252 = vpop.f32.mrb[0].mxu0
      %v4253 = vadd.f32 %v4092, %v4252
      %v4254 = vpop.f32.mrb[0].mxu0
      %v4255 = vpop.f32.mrb[0].mxu0
      %v4256 = vadd.f32 %v4095, %v4255
      %v4257 = vpop.f32.mrb[0].mxu0
      %4258 = vmatprep.mubr.bf16.mxu0 0
      %4259 = vmatmul.mubr.bf16.gmra.mrb[0].mxu0 %v3214
      %v4260 = vpop.f32.mrb[0].mxu0
      %v4261 = vadd.f32 %v4100, %v4260
      %v4262 = vpop.f32.mrb[0].mxu0
      %v4263 = vpop.f32.mrb[0].mxu0
      %v4264 = vadd.f32 %v4103, %v4263
      %v4265 = vpop.f32.mrb[0].mxu0
      %4266 = vmatprep.mubr.bf16.mxu0 0
      %4267 = vmatmul.mubr.bf16.gmra.mrb[0].mxu0 %v3217
      %v4268 = vpop.f32.mrb[0].mxu0
      %v4269 = vadd.f32 %v4108, %v4268
      %v4270 = vpop.f32.mrb[0].mxu0
      %v4271 = vpop.f32.mrb[0].mxu0
      %v4272 = vadd.f32 %v4111, %v4271
      %v4273 = vpop.f32.mrb[0].mxu0
      %4274 = vmatprep.mubr.bf16.mxu0 0
      %4275 = vmatmul.mubr.bf16.gmra.mrb[0].mxu0 %v3220
      %v4276 = vpop.f32.mrb[0].mxu0
      %v4277 = vadd.f32 %v4116, %v4276
      %v4278 = vpop.f32.mrb[0].mxu0
      %v4279 = vpop.f32.mrb[0].mxu0
      %v4280 = vadd.f32 %v4119, %v4279
      %v4281 = vpop.f32.mrb[0].mxu0
      %4282 = vmatprep.mubr.bf16.mxu0 0
      %4283 = vmatmul.mubr.bf16.gmra.mrb[0].mxu0 %v3223
      %v4284 = vpop.f32.mrb[0].mxu0
      %v4285 = vadd.f32 %v4124, %v4284
      %v4286 = vpop.f32.mrb[0].mxu0
      %v4287 = vpop.f32.mrb[0].mxu0
      %v4288 = vadd.f32 %v4127, %v4287
      %v4289 = vpop.f32.mrb[0].mxu0
      %4290 = vmatprep.mubr.bf16.mxu0 0
      %4291 = vmatmul.mubr.bf16.gmra.mrb[0].mxu0 %v3226
      %v4292 = vpop.f32.mrb[0].mxu0
      %v4293 = vadd.f32 %v4132, %v4292
      %v4294 = vpop.f32.mrb[0].mxu0
      %v4295 = vpop.f32.mrb[0].mxu0
      %v4296 = vadd.f32 %v4135, %v4295
      %v4297 = vpop.f32.mrb[0].mxu0
      %4298 = vmatprep.mubr.bf16.mxu0 0
      %4299 = vmatmul.mubr.bf16.gmra.mrb[0].mxu0 %v3229
      %v4300 = vpop.f32.mrb[0].mxu0
      %v4301 = vadd.f32 %v4140, %v4300
      %v4302 = vpop.f32.mrb[0].mxu0
      %v4303 = vpop.f32.mrb[0].mxu0
      %v4304 = vadd.f32 %v4143, %v4303
      %v4305 = vpop.f32.mrb[0].mxu0
      %4306 = vdwg.mxu0
      %v4307 = vld [vmem:[%s1859] sm:$0xff]
      %v4308 = vld [vmem:[%s1859 + $0x8] sm:$0xff]
      %v4309 = vld [vmem:[%s1859 + $0x10] sm:$0xff]
      %v4310 = vld [vmem:[%s1859 + $0x18] sm:$0xff]
      %v4311 = vld [vmem:[%s1859 + $0x20] sm:$0xff]
      %v4312 = vld [vmem:[%s1859 + $0x28] sm:$0xff]
      %v4313 = vld [vmem:[%s1859 + $0x30] sm:$0xff]
      %v4314 = vld [vmem:[%s1859 + $0x38] sm:$0xff]
      %v4315 = vld [vmem:[%s1859 + $0x40] sm:$0xff]
      %v4316 = vld [vmem:[%s1859 + $0x48] sm:$0xff]
      %v4317 = vld [vmem:[%s1859 + $0x50] sm:$0xff]
      %v4318 = vld [vmem:[%s1859 + $0x58] sm:$0xff]
      %v4319 = vld [vmem:[%s1859 + $0x60] sm:$0xff]
      %v4320 = vld [vmem:[%s1859 + $0x68] sm:$0xff]
      %v4321 = vld [vmem:[%s1859 + $0x70] sm:$0xff]
      %v4322 = vld [vmem:[%s1859 + $0x78] sm:$0xff]
      %v4323 = vld [vmem:[%s1859 + $0x80] sm:$0xff]
      %v4324 = vld [vmem:[%s1859 + $0x88] sm:$0xff]
      %v4325 = vld [vmem:[%s1859 + $0x90] sm:$0xff]
      %v4326 = vld [vmem:[%s1859 + $0x98] sm:$0xff]
      %v4327 = vld [vmem:[%s1859 + $0xa0] sm:$0xff]
      %v4328 = vld [vmem:[%s1859 + $0xa8] sm:$0xff]
      %v4329 = vld [vmem:[%s1859 + $0xb0] sm:$0xff]
      %v4330 = vld [vmem:[%s1859 + $0xb8] sm:$0xff]
      %v4331 = vld [vmem:[%s1859 + $0xc0] sm:$0xff]
      %v4332 = vld [vmem:[%s1859 + $0xc8] sm:$0xff]
      %v4333 = vld [vmem:[%s1859 + $0xd0] sm:$0xff]
      %v4334 = vld [vmem:[%s1859 + $0xd8] sm:$0xff]
      %v4335 = vld [vmem:[%s1859 + $0xe0] sm:$0xff]
      %v4336 = vld [vmem:[%s1859 + $0xe8] sm:$0xff]
      %v4337 = vld [vmem:[%s1859 + $0xf0] sm:$0xff]
      %v4338 = vld [vmem:[%s1859 + $0xf8] sm:$0xff]
      %v4339 = vld [vmem:[%s1859 + $0x100] sm:$0xff]
      %v4340 = vld [vmem:[%s1859 + $0x108] sm:$0xff]
      %v4341 = vld [vmem:[%s1859 + $0x110] sm:$0xff]
      %v4342 = vld [vmem:[%s1859 + $0x118] sm:$0xff]
      %v4343 = vld [vmem:[%s1859 + $0x120] sm:$0xff]
      %v4344 = vld [vmem:[%s1859 + $0x128] sm:$0xff]
      %v4345 = vld [vmem:[%s1859 + $0x130] sm:$0xff]
      %v4346 = vld [vmem:[%s1859 + $0x138] sm:$0xff]
      %v4347 = vld [vmem:[%s1859 + $0x140] sm:$0xff]
      %v4348 = vld [vmem:[%s1859 + $0x148] sm:$0xff]
      %v4349 = vld [vmem:[%s1859 + $0x150] sm:$0xff]
      %v4350 = vld [vmem:[%s1859 + $0x158] sm:$0xff]
      %v4351 = vld [vmem:[%s1859 + $0x160] sm:$0xff]
      %v4352 = vld [vmem:[%s1859 + $0x168] sm:$0xff]
      %v4353 = vld [vmem:[%s1859 + $0x170] sm:$0xff]
      %v4354 = vld [vmem:[%s1859 + $0x178] sm:$0xff]
      %s4355 = scalar_lea.vmem %s2, 384
      %v4356 = vld [vmem:[%s4355] sm:$0xf]
      %v4357 = vld [vmem:[%s4355 + $0x4] sm:$0xf]
      %v4358 = vld [vmem:[%s4355 + $0x8] sm:$0xf]
      %v4359 = vld [vmem:[%s4355 + $0xc] sm:$0xf]
      %v4360 = vld [vmem:[%s4355 + $0x10] sm:$0xf]
      %v4361 = vld [vmem:[%s4355 + $0x14] sm:$0xf]
      %v4362 = vld [vmem:[%s4355 + $0x18] sm:$0xf]
      %v4363 = vld [vmem:[%s4355 + $0x1c] sm:$0xf]
      %v4364 = vld [vmem:[%s4355 + $0x20] sm:$0xf]
      %v4365 = vld [vmem:[%s4355 + $0x24] sm:$0xf]
      %v4366 = vld [vmem:[%s4355 + $0x28] sm:$0xf]
      %v4367 = vld [vmem:[%s4355 + $0x2c] sm:$0xf]
      %v4368 = vld [vmem:[%s4355 + $0x30] sm:$0xf]
      %v4369 = vld [vmem:[%s4355 + $0x34] sm:$0xf]
      %v4370 = vld [vmem:[%s4355 + $0x38] sm:$0xf]
      %v4371 = vld [vmem:[%s4355 + $0x3c] sm:$0xf]
      %v4372 = vld [vmem:[%s4355 + $0x40] sm:$0xf]
      %v4373 = vld [vmem:[%s4355 + $0x44] sm:$0xf]
      %v4374 = vld [vmem:[%s4355 + $0x48] sm:$0xf]
      %v4375 = vld [vmem:[%s4355 + $0x4c] sm:$0xf]
      %v4376 = vld [vmem:[%s4355 + $0x50] sm:$0xf]
      %v4377 = vld [vmem:[%s4355 + $0x54] sm:$0xf]
      %v4378 = vld [vmem:[%s4355 + $0x58] sm:$0xf]
      %v4379 = vld [vmem:[%s4355 + $0x5c] sm:$0xf]
      %v4380 = vld [vmem:[%s4355 + $0x60] sm:$0xf]
      %v4381 = vld [vmem:[%s4355 + $0x64] sm:$0xf]
      %v4382 = vld [vmem:[%s4355 + $0x68] sm:$0xf]
      %v4383 = vld [vmem:[%s4355 + $0x6c] sm:$0xf]
      %v4384 = vld [vmem:[%s4355 + $0x70] sm:$0xf]
      %v4385 = vld [vmem:[%s4355 + $0x74] sm:$0xf]
      %v4386 = vld [vmem:[%s4355 + $0x78] sm:$0xf]
      %v4387 = vld [vmem:[%s4355 + $0x7c] sm:$0xf]
      %v4388 = vld [vmem:[%s4355 + $0x80] sm:$0xf]
      %v4389 = vld [vmem:[%s4355 + $0x84] sm:$0xf]
      %v4390 = vld [vmem:[%s4355 + $0x88] sm:$0xf]
      %v4391 = vld [vmem:[%s4355 + $0x8c] sm:$0xf]
      %v4392 = vld [vmem:[%s4355 + $0x90] sm:$0xf]
      %v4393 = vld [vmem:[%s4355 + $0x94] sm:$0xf]
      %v4394 = vld [vmem:[%s4355 + $0x98] sm:$0xf]
      %v4395 = vld [vmem:[%s4355 + $0x9c] sm:$0xf]
      %v4396 = vld [vmem:[%s4355 + $0xa0] sm:$0xf]
      %v4397 = vld [vmem:[%s4355 + $0xa4] sm:$0xf]
      %v4398 = vld [vmem:[%s4355 + $0xa8] sm:$0xf]
      %v4399 = vld [vmem:[%s4355 + $0xac] sm:$0xf]
      %v4400 = vld [vmem:[%s4355 + $0xb0] sm:$0xf]
      %v4401 = vld [vmem:[%s4355 + $0xb4] sm:$0xf]
      %v4402 = vld [vmem:[%s4355 + $0xb8] sm:$0xf]
      %v4403 = vld [vmem:[%s4355 + $0xbc] sm:$0xf]
      %v4452 = vunpack.c.l.b16 %v4356
      %v4453 = vunpack.c.l.b16 %v4357
      %v4454 = vunpack.c.l.b16 %v4358
      %v4455 = vunpack.c.l.b16 %v4359
      %v4456 = vunpack.c.l.b16 %v4360
      %v4457 = vunpack.c.l.b16 %v4361
      %v4458 = vunpack.c.l.b16 %v4362
      %v4459 = vunpack.c.l.b16 %v4363
      %v4460 = vunpack.c.l.b16 %v4364
      %v4461 = vunpack.c.l.b16 %v4365
      %v4462 = vunpack.c.l.b16 %v4366
      %v4463 = vunpack.c.l.b16 %v4367
      %v4464 = vunpack.c.l.b16 %v4368
      %v4465 = vunpack.c.l.b16 %v4369
      %v4466 = vunpack.c.l.b16 %v4370
      %v4467 = vunpack.c.l.b16 %v4371
      %v4468 = vunpack.c.l.b16 %v4372
      %v4469 = vunpack.c.l.b16 %v4373
      %v4470 = vunpack.c.l.b16 %v4374
      %v4471 = vunpack.c.l.b16 %v4375
      %v4472 = vunpack.c.l.b16 %v4376
      %v4473 = vunpack.c.l.b16 %v4377
      %v4474 = vunpack.c.l.b16 %v4378
      %v4475 = vunpack.c.l.b16 %v4379
      %v4476 = vunpack.c.l.b16 %v4380
      %v4477 = vunpack.c.l.b16 %v4381
      %v4478 = vunpack.c.l.b16 %v4382
      %v4479 = vunpack.c.l.b16 %v4383
      %v4480 = vunpack.c.l.b16 %v4384
      %v4481 = vunpack.c.l.b16 %v4385
      %v4482 = vunpack.c.l.b16 %v4386
      %v4483 = vunpack.c.l.b16 %v4387
      %v4484 = vunpack.c.l.b16 %v4388
      %v4485 = vunpack.c.l.b16 %v4389
      %v4486 = vunpack.c.l.b16 %v4390
      %v4487 = vunpack.c.l.b16 %v4391
      %v4488 = vunpack.c.l.b16 %v4392
      %v4489 = vunpack.c.l.b16 %v4393
      %v4490 = vunpack.c.l.b16 %v4394
      %v4491 = vunpack.c.l.b16 %v4395
      %v4492 = vunpack.c.l.b16 %v4396
      %v4493 = vunpack.c.l.b16 %v4397
      %v4494 = vunpack.c.l.b16 %v4398
      %v4495 = vunpack.c.l.b16 %v4399
      %v4496 = vunpack.c.l.b16 %v4400
      %v4497 = vunpack.c.l.b16 %v4401
      %v4498 = vunpack.c.l.b16 %v4402
      %v4499 = vunpack.c.l.b16 %v4403
      %v4500 = vpack.c.b16 %v4453, %v4452
      %v4501 = vpack.c.b16 %v4455, %v4454
      %v4502 = vpack.c.b16 %v4457, %v4456
      %v4503 = vpack.c.b16 %v4459, %v4458
      %v4504 = vpack.c.b16 %v4461, %v4460
      %v4505 = vpack.c.b16 %v4463, %v4462
      %v4506 = vpack.c.b16 %v4465, %v4464
      %v4507 = vpack.c.b16 %v4467, %v4466
      %v4508 = vpack.c.b16 %v4469, %v4468
      %v4509 = vpack.c.b16 %v4471, %v4470
      %v4510 = vpack.c.b16 %v4473, %v4472
      %v4511 = vpack.c.b16 %v4475, %v4474
      %v4512 = vpack.c.b16 %v4477, %v4476
      %v4513 = vpack.c.b16 %v4479, %v4478
      %v4514 = vpack.c.b16 %v4481, %v4480
      %v4515 = vpack.c.b16 %v4483, %v4482
      %v4516 = vpack.c.b16 %v4485, %v4484
      %v4517 = vpack.c.b16 %v4487, %v4486
      %v4518 = vpack.c.b16 %v4489, %v4488
      %v4519 = vpack.c.b16 %v4491, %v4490
      %v4520 = vpack.c.b16 %v4493, %v4492
      %v4521 = vpack.c.b16 %v4495, %v4494
      %v4522 = vpack.c.b16 %v4497, %v4496
      %v4523 = vpack.c.b16 %v4499, %v4498
      %4548 = vmatprep.subr.bf16.mxu0 0
      %4549 = vmatpush1.bf16.msra.mxu0 %v4500
      %4550 = vmatprep.subr.bf16.mxu0 0
      %4551 = vmatpush1.bf16.msra.mxu0 %v4501
      %4552 = vmatprep.subr.bf16.mxu0 0
      %4553 = vmatpush1.bf16.msra.mxu0 %v4502
      %4554 = vmatprep.subr.bf16.mxu0 0
      %4555 = vmatpush1.bf16.msra.mxu0 %v4503
      %4556 = vmatprep.subr.bf16.mxu0 0
      %4557 = vmatpush1.bf16.msra.mxu0 %v4504
      %4558 = vmatprep.subr.bf16.mxu0 0
      %4559 = vmatpush1.bf16.msra.mxu0 %v4505
      %4560 = vmatprep.subr.bf16.mxu0 0
      %4561 = vmatpush1.bf16.msra.mxu0 %v4506
      %4562 = vmatprep.subr.bf16.mxu0 0
      %4563 = vmatpush1.bf16.msra.mxu0 %v4507
      %4564 = vmatprep.subr.bf16.mxu0 0
      %4565 = vmatpush1.bf16.msra.mxu0 %v4508
      %4566 = vmatprep.subr.bf16.mxu0 0
      %4567 = vmatpush1.bf16.msra.mxu0 %v4509
      %4568 = vmatprep.subr.bf16.mxu0 0
      %4569 = vmatpush1.bf16.msra.mxu0 %v4510
      %4570 = vmatprep.subr.bf16.mxu0 0
      %4571 = vmatpush1.bf16.msra.mxu0 %v4511
      %4572 = vmatprep.subr.bf16.mxu0 0
      %4573 = vmatpush1.bf16.msra.mxu0 %v4512
      %4574 = vmatprep.subr.bf16.mxu0 0
      %4575 = vmatpush1.bf16.msra.mxu0 %v4513
      %4576 = vmatprep.subr.bf16.mxu0 0
      %4577 = vmatpush1.bf16.msra.mxu0 %v4514
      %4578 = vmatprep.subr.bf16.mxu0 0
      %4579 = vmatpush1.bf16.msra.mxu0 %v4515
      %4580 = vmatprep.mubr.bf16.mxu0 %v4308
      %4581 = vmatmul.mubr.bf16.gmra.mrb[0].mxu0 %v4307
      %v4582 = vpop.f32.mrb[0].mxu0
      %v4583 = vadd.f32 0.0, %v4582
      %v4584 = vpop.f32.mrb[0].mxu0
      %v4585 = vpop.f32.mrb[0].mxu0
      %v4586 = vadd.f32 0.0, %v4585
      %v4587 = vpop.f32.mrb[0].mxu0
      %4588 = vmatprep.mubr.bf16.mxu0 %v4311
      %4589 = vmatmul.mubr.bf16.gmra.mrb[0].mxu0 %v4310
      %v4590 = vpop.f32.mrb[0].mxu0
      %v4591 = vadd.f32 0.0, %v4590
      %v4592 = vpop.f32.mrb[0].mxu0
      %v4593 = vpop.f32.mrb[0].mxu0
      %v4594 = vadd.f32 0.0, %v4593
      %v4595 = vpop.f32.mrb[0].mxu0
      %4596 = vmatprep.mubr.bf16.mxu0 %v4314
      %4597 = vmatmul.mubr.bf16.gmra.mrb[0].mxu0 %v4313
      %v4598 = vpop.f32.mrb[0].mxu0
      %v4599 = vadd.f32 0.0, %v4598
      %v4600 = vpop.f32.mrb[0].mxu0
      %v4601 = vpop.f32.mrb[0].mxu0
      %v4602 = vadd.f32 0.0, %v4601
      %v4603 = vpop.f32.mrb[0].mxu0
      %4604 = vmatprep.mubr.bf16.mxu0 %v4317
      %4605 = vmatmul.mubr.bf16.gmra.mrb[0].mxu0 %v4316
      %v4606 = vpop.f32.mrb[0].mxu0
      %v4607 = vadd.f32 0.0, %v4606
      %v4608 = vpop.f32.mrb[0].mxu0
      %v4609 = vpop.f32.mrb[0].mxu0
      %v4610 = vadd.f32 0.0, %v4609
      %v4611 = vpop.f32.mrb[0].mxu0
      %4612 = vmatprep.mubr.bf16.mxu0 %v4320
      %4613 = vmatmul.mubr.bf16.gmra.mrb[0].mxu0 %v4319
      %v4614 = vpop.f32.mrb[0].mxu0
      %v4615 = vadd.f32 0.0, %v4614
      %v4616 = vpop.f32.mrb[0].mxu0
      %v4617 = vpop.f32.mrb[0].mxu0
      %v4618 = vadd.f32 0.0, %v4617
      %v4619 = vpop.f32.mrb[0].mxu0
      %4620 = vmatprep.mubr.bf16.mxu0 %v4323
      %4621 = vmatmul.mubr.bf16.gmra.mrb[0].mxu0 %v4322
      %v4622 = vpop.f32.mrb[0].mxu0
      %v4623 = vadd.f32 0.0, %v4622
      %v4624 = vpop.f32.mrb[0].mxu0
      %v4625 = vpop.f32.mrb[0].mxu0
      %v4626 = vadd.f32 0.0, %v4625
      %v4627 = vpop.f32.mrb[0].mxu0
      %4628 = vmatprep.mubr.bf16.mxu0 %v4326
      %4629 = vmatmul.mubr.bf16.gmra.mrb[0].mxu0 %v4325
      %v4630 = vpop.f32.mrb[0].mxu0
      %v4631 = vadd.f32 0.0, %v4630
      %v4632 = vpop.f32.mrb[0].mxu0
      %v4633 = vpop.f32.mrb[0].mxu0
      %v4634 = vadd.f32 0.0, %v4633
      %v4635 = vpop.f32.mrb[0].mxu0
      %4636 = vmatprep.mubr.bf16.mxu0 %v4329
      %4637 = vmatmul.mubr.bf16.gmra.mrb[0].mxu0 %v4328
      %v4638 = vpop.f32.mrb[0].mxu0
      %v4639 = vadd.f32 0.0, %v4638
      %v4640 = vpop.f32.mrb[0].mxu0
      %v4641 = vpop.f32.mrb[0].mxu0
      %v4642 = vadd.f32 0.0, %v4641
      %v4643 = vpop.f32.mrb[0].mxu0
      %4644 = vmatprep.mubr.bf16.mxu0 %v4332
      %4645 = vmatmul.mubr.bf16.gmra.mrb[0].mxu0 %v4331
      %v4646 = vpop.f32.mrb[0].mxu0
      %v4647 = vadd.f32 0.0, %v4646
      %v4648 = vpop.f32.mrb[0].mxu0
      %v4649 = vpop.f32.mrb[0].mxu0
      %v4650 = vadd.f32 0.0, %v4649
      %v4651 = vpop.f32.mrb[0].mxu0
      %4652 = vmatprep.mubr.bf16.mxu0 %v4335
      %4653 = vmatmul.mubr.bf16.gmra.mrb[0].mxu0 %v4334
      %v4654 = vpop.f32.mrb[0].mxu0
      %v4655 = vadd.f32 0.0, %v4654
      %v4656 = vpop.f32.mrb[0].mxu0
      %v4657 = vpop.f32.mrb[0].mxu0
      %v4658 = vadd.f32 0.0, %v4657
      %v4659 = vpop.f32.mrb[0].mxu0
      %4660 = vmatprep.mubr.bf16.mxu0 %v4338
      %4661 = vmatmul.mubr.bf16.gmra.mrb[0].mxu0 %v4337
      %v4662 = vpop.f32.mrb[0].mxu0
      %v4663 = vadd.f32 0.0, %v4662
      %v4664 = vpop.f32.mrb[0].mxu0
      %v4665 = vpop.f32.mrb[0].mxu0
      %v4666 = vadd.f32 0.0, %v4665
      %v4667 = vpop.f32.mrb[0].mxu0
      %4668 = vmatprep.mubr.bf16.mxu0 %v4341
      %4669 = vmatmul.mubr.bf16.gmra.mrb[0].mxu0 %v4340
      %v4670 = vpop.f32.mrb[0].mxu0
      %v4671 = vadd.f32 0.0, %v4670
      %v4672 = vpop.f32.mrb[0].mxu0
      %v4673 = vpop.f32.mrb[0].mxu0
      %v4674 = vadd.f32 0.0, %v4673
      %v4675 = vpop.f32.mrb[0].mxu0
      %4676 = vmatprep.mubr.bf16.mxu0 %v4344
      %4677 = vmatmul.mubr.bf16.gmra.mrb[0].mxu0 %v4343
      %v4678 = vpop.f32.mrb[0].mxu0
      %v4679 = vadd.f32 0.0, %v4678
      %v4680 = vpop.f32.mrb[0].mxu0
      %v4681 = vpop.f32.mrb[0].mxu0
      %v4682 = vadd.f32 0.0, %v4681
      %v4683 = vpop.f32.mrb[0].mxu0
      %4684 = vmatprep.mubr.bf16.mxu0 %v4347
      %4685 = vmatmul.mubr.bf16.gmra.mrb[0].mxu0 %v4346
      %v4686 = vpop.f32.mrb[0].mxu0
      %v4687 = vadd.f32 0.0, %v4686
      %v4688 = vpop.f32.mrb[0].mxu0
      %v4689 = vpop.f32.mrb[0].mxu0
      %v4690 = vadd.f32 0.0, %v4689
      %v4691 = vpop.f32.mrb[0].mxu0
      %4692 = vmatprep.mubr.bf16.mxu0 %v4350
      %4693 = vmatmul.mubr.bf16.gmra.mrb[0].mxu0 %v4349
      %v4694 = vpop.f32.mrb[0].mxu0
      %v4695 = vadd.f32 0.0, %v4694
      %v4696 = vpop.f32.mrb[0].mxu0
      %v4697 = vpop.f32.mrb[0].mxu0
      %v4698 = vadd.f32 0.0, %v4697
      %v4699 = vpop.f32.mrb[0].mxu0
      %4700 = vmatprep.mubr.bf16.mxu0 %v4353
      %4701 = vmatmul.mubr.bf16.gmra.mrb[0].mxu0 %v4352
      %v4702 = vpop.f32.mrb[0].mxu0
      %v4703 = vadd.f32 0.0, %v4702
      %v4704 = vpop.f32.mrb[0].mxu0
      %v4705 = vpop.f32.mrb[0].mxu0
      %v4706 = vadd.f32 0.0, %v4705
      %v4707 = vpop.f32.mrb[0].mxu0
      %4708 = vdwg.mxu0
      %4709 = vmatprep.subr.bf16.mxu0 0
      %4710 = vmatpush1.bf16.msra.mxu0 %v4516
      %4711 = vmatprep.subr.bf16.mxu0 0
      %4712 = vmatpush1.bf16.msra.mxu0 %v4517
      %4713 = vmatprep.subr.bf16.mxu0 0
      %4714 = vmatpush1.bf16.msra.mxu0 %v4518
      %4715 = vmatprep.subr.bf16.mxu0 0
      %4716 = vmatpush1.bf16.msra.mxu0 %v4519
      %4717 = vmatprep.subr.bf16.mxu0 0
      %4718 = vmatpush1.bf16.msra.mxu0 %v4520
      %4719 = vmatprep.subr.bf16.mxu0 0
      %4720 = vmatpush1.bf16.msra.mxu0 %v4521
      %4721 = vmatprep.subr.bf16.mxu0 0
      %4722 = vmatpush1.bf16.msra.mxu0 %v4522
      %4723 = vmatprep.subr.bf16.mxu0 0
      %4724 = vmatpush1.bf16.msra.mxu0 %v4523
      %4725 = vmatprep.subr.bf16.mxu0 0
      %4726 = vmatpush1.bf16.msra.mxu0 0
      %4727 = vmatprep.subr.bf16.mxu0 0
      %4728 = vmatpush1.bf16.msra.mxu0 0
      %4729 = vmatprep.subr.bf16.mxu0 0
      %4730 = vmatpush1.bf16.msra.mxu0 0
      %4731 = vmatprep.subr.bf16.mxu0 0
      %4732 = vmatpush1.bf16.msra.mxu0 0
      %4733 = vmatprep.subr.bf16.mxu0 0
      %4734 = vmatpush1.bf16.msra.mxu0 0
      %4735 = vmatprep.subr.bf16.mxu0 0
      %4736 = vmatpush1.bf16.msra.mxu0 0
      %4737 = vmatprep.subr.bf16.mxu0 0
      %4738 = vmatpush1.bf16.msra.mxu0 0
      %4739 = vmatprep.subr.bf16.mxu0 0
      %4740 = vmatpush1.bf16.msra.mxu0 0
      %4741 = vmatprep.mubr.bf16.mxu0 0
      %4742 = vmatmul.mubr.bf16.gmra.mrb[0].mxu0 %v4309
      %v4743 = vpop.f32.mrb[0].mxu0
      %v4744 = vadd.f32 %v4583, %v4743
      %v4745 = vpop.f32.mrb[0].mxu0
      %v4746 = vpop.f32.mrb[0].mxu0
      %v4747 = vadd.f32 %v4586, %v4746
      %v4748 = vpop.f32.mrb[0].mxu0
      %4749 = vmatprep.mubr.bf16.mxu0 0
      %4750 = vmatmul.mubr.bf16.gmra.mrb[0].mxu0 %v4312
      %v4751 = vpop.f32.mrb[0].mxu0
      %v4752 = vadd.f32 %v4591, %v4751
      %v4753 = vpop.f32.mrb[0].mxu0
      %v4754 = vpop.f32.mrb[0].mxu0
      %v4755 = vadd.f32 %v4594, %v4754
      %v4756 = vpop.f32.mrb[0].mxu0
      %4757 = vmatprep.mubr.bf16.mxu0 0
      %4758 = vmatmul.mubr.bf16.gmra.mrb[0].mxu0 %v4315
      %v4759 = vpop.f32.mrb[0].mxu0
      %v4760 = vadd.f32 %v4599, %v4759
      %v4761 = vpop.f32.mrb[0].mxu0
      %v4762 = vpop.f32.mrb[0].mxu0
      %v4763 = vadd.f32 %v4602, %v4762
      %v4764 = vpop.f32.mrb[0].mxu0
      %4765 = vmatprep.mubr.bf16.mxu0 0
      %4766 = vmatmul.mubr.bf16.gmra.mrb[0].mxu0 %v4318
      %v4767 = vpop.f32.mrb[0].mxu0
      %v4768 = vadd.f32 %v4607, %v4767
      %v4769 = vpop.f32.mrb[0].mxu0
      %v4770 = vpop.f32.mrb[0].mxu0
      %v4771 = vadd.f32 %v4610, %v4770
      %v4772 = vpop.f32.mrb[0].mxu0
      %4773 = vmatprep.mubr.bf16.mxu0 0
      %4774 = vmatmul.mubr.bf16.gmra.mrb[0].mxu0 %v4321
      %v4775 = vpop.f32.mrb[0].mxu0
      %v4776 = vadd.f32 %v4615, %v4775
      %v4777 = vpop.f32.mrb[0].mxu0
      %v4778 = vpop.f32.mrb[0].mxu0
      %v4779 = vadd.f32 %v4618, %v4778
      %v4780 = vpop.f32.mrb[0].mxu0
      %4781 = vmatprep.mubr.bf16.mxu0 0
      %4782 = vmatmul.mubr.bf16.gmra.mrb[0].mxu0 %v4324
      %v4783 = vpop.f32.mrb[0].mxu0
      %v4784 = vadd.f32 %v4623, %v4783
      %v4785 = vpop.f32.mrb[0].mxu0
      %v4786 = vpop.f32.mrb[0].mxu0
      %v4787 = vadd.f32 %v4626, %v4786
      %v4788 = vpop.f32.mrb[0].mxu0
      %4789 = vmatprep.mubr.bf16.mxu0 0
      %4790 = vmatmul.mubr.bf16.gmra.mrb[0].mxu0 %v4327
      %v4791 = vpop.f32.mrb[0].mxu0
      %v4792 = vadd.f32 %v4631, %v4791
      %v4793 = vpop.f32.mrb[0].mxu0
      %v4794 = vpop.f32.mrb[0].mxu0
      %v4795 = vadd.f32 %v4634, %v4794
      %v4796 = vpop.f32.mrb[0].mxu0
      %4797 = vmatprep.mubr.bf16.mxu0 0
      %4798 = vmatmul.mubr.bf16.gmra.mrb[0].mxu0 %v4330
      %v4799 = vpop.f32.mrb[0].mxu0
      %v4800 = vadd.f32 %v4639, %v4799
      %v4801 = vpop.f32.mrb[0].mxu0
      %v4802 = vpop.f32.mrb[0].mxu0
      %v4803 = vadd.f32 %v4642, %v4802
      %v4804 = vpop.f32.mrb[0].mxu0
      %4805 = vmatprep.mubr.bf16.mxu0 0
      %4806 = vmatmul.mubr.bf16.gmra.mrb[0].mxu0 %v4333
      %v4807 = vpop.f32.mrb[0].mxu0
      %v4808 = vadd.f32 %v4647, %v4807
      %v4809 = vpop.f32.mrb[0].mxu0
      %v4810 = vpop.f32.mrb[0].mxu0
      %v4811 = vadd.f32 %v4650, %v4810
      %v4812 = vpop.f32.mrb[0].mxu0
      %4813 = vmatprep.mubr.bf16.mxu0 0
      %4814 = vmatmul.mubr.bf16.gmra.mrb[0].mxu0 %v4336
      %v4815 = vpop.f32.mrb[0].mxu0
      %v4816 = vadd.f32 %v4655, %v4815
      %v4817 = vpop.f32.mrb[0].mxu0
      %v4818 = vpop.f32.mrb[0].mxu0
      %v4819 = vadd.f32 %v4658, %v4818
      %v4820 = vpop.f32.mrb[0].mxu0
      %4821 = vmatprep.mubr.bf16.mxu0 0
      %4822 = vmatmul.mubr.bf16.gmra.mrb[0].mxu0 %v4339
      %v4823 = vpop.f32.mrb[0].mxu0
      %v4824 = vadd.f32 %v4663, %v4823
      %v4825 = vpop.f32.mrb[0].mxu0
      %v4826 = vpop.f32.mrb[0].mxu0
      %v4827 = vadd.f32 %v4666, %v4826
      %v4828 = vpop.f32.mrb[0].mxu0
      %4829 = vmatprep.mubr.bf16.mxu0 0
      %4830 = vmatmul.mubr.bf16.gmra.mrb[0].mxu0 %v4342
      %v4831 = vpop.f32.mrb[0].mxu0
      %v4832 = vadd.f32 %v4671, %v4831
      %v4833 = vpop.f32.mrb[0].mxu0
      %v4834 = vpop.f32.mrb[0].mxu0
      %v4835 = vadd.f32 %v4674, %v4834
      %v4836 = vpop.f32.mrb[0].mxu0
      %4837 = vmatprep.mubr.bf16.mxu0 0
      %4838 = vmatmul.mubr.bf16.gmra.mrb[0].mxu0 %v4345
      %v4839 = vpop.f32.mrb[0].mxu0
      %v4840 = vadd.f32 %v4679, %v4839
      %v4841 = vpop.f32.mrb[0].mxu0
      %v4842 = vpop.f32.mrb[0].mxu0
      %v4843 = vadd.f32 %v4682, %v4842
      %v4844 = vpop.f32.mrb[0].mxu0
      %4845 = vmatprep.mubr.bf16.mxu0 0
      %4846 = vmatmul.mubr.bf16.gmra.mrb[0].mxu0 %v4348
      %v4847 = vpop.f32.mrb[0].mxu0
      %v4848 = vadd.f32 %v4687, %v4847
      %v4849 = vpop.f32.mrb[0].mxu0
      %v4850 = vpop.f32.mrb[0].mxu0
      %v4851 = vadd.f32 %v4690, %v4850
      %v4852 = vpop.f32.mrb[0].mxu0
      %4853 = vmatprep.mubr.bf16.mxu0 0
      %4854 = vmatmul.mubr.bf16.gmra.mrb[0].mxu0 %v4351
      %v4855 = vpop.f32.mrb[0].mxu0
      %v4856 = vadd.f32 %v4695, %v4855
      %v4857 = vpop.f32.mrb[0].mxu0
      %v4858 = vpop.f32.mrb[0].mxu0
      %v4859 = vadd.f32 %v4698, %v4858
      %v4860 = vpop.f32.mrb[0].mxu0
      %4861 = vmatprep.mubr.bf16.mxu0 0
      %4862 = vmatmul.mubr.bf16.gmra.mrb[0].mxu0 %v4354
      %v4863 = vpop.f32.mrb[0].mxu0
      %v4864 = vadd.f32 %v4703, %v4863
      %v4865 = vpop.f32.mrb[0].mxu0
      %v4866 = vpop.f32.mrb[0].mxu0
      %v4867 = vadd.f32 %v4706, %v4866
      %v4868 = vpop.f32.mrb[0].mxu0
      %4869 = vdwg.mxu0
      %v4870 = vadd.f32 %v4181, %v4744
      %v4871 = vadd.f32 %v4184, %v4747
      %v4872 = vadd.f32 %v4189, %v4752
      %v4873 = vadd.f32 %v4192, %v4755
      %v4874 = vadd.f32 %v4197, %v4760
      %v4875 = vadd.f32 %v4200, %v4763
      %v4876 = vadd.f32 %v4205, %v4768
      %v4877 = vadd.f32 %v4208, %v4771
      %v4878 = vadd.f32 %v4213, %v4776
      %v4879 = vadd.f32 %v4216, %v4779
      %v4880 = vadd.f32 %v4221, %v4784
      %v4881 = vadd.f32 %v4224, %v4787
      %v4882 = vadd.f32 %v4229, %v4792
      %v4883 = vadd.f32 %v4232, %v4795
      %v4884 = vadd.f32 %v4237, %v4800
      %v4885 = vadd.f32 %v4240, %v4803
      %v4886 = vadd.f32 %v4245, %v4808
      %v4887 = vadd.f32 %v4248, %v4811
      %v4888 = vadd.f32 %v4253, %v4816
      %v4889 = vadd.f32 %v4256, %v4819
      %v4890 = vadd.f32 %v4261, %v4824
      %v4891 = vadd.f32 %v4264, %v4827
      %v4892 = vadd.f32 %v4269, %v4832
      %v4893 = vadd.f32 %v4272, %v4835
      %v4894 = vadd.f32 %v4277, %v4840
      %v4895 = vadd.f32 %v4280, %v4843
      %v4896 = vadd.f32 %v4285, %v4848
      %v4897 = vadd.f32 %v4288, %v4851
      %v4898 = vadd.f32 %v4293, %v4856
      %v4899 = vadd.f32 %v4296, %v4859
      %v4900 = vadd.f32 %v4301, %v4864
      %v4901 = vadd.f32 %v4304, %v4867
      %v4902 = vadd.f32 %v4870, %v4871
      %v4903 = vadd.f32 %v4902, %v4872
      %v4904 = vadd.f32 %v4903, %v4873
      %v4905 = vadd.f32 %v4904, %v4874
      %v4906 = vadd.f32 %v4905, %v4875
      %v4907 = vadd.f32 %v4906, %v4876
      %v4908 = vadd.f32 %v4907, %v4877
      %v4909 = vadd.f32 %v4908, %v4878
      %v4910 = vadd.f32 %v4909, %v4879
      %v4911 = vadd.f32 %v4910, %v4880
      %v4912 = vadd.f32 %v4911, %v4881
      %v4913 = vadd.f32 %v4912, %v4882
      %v4914 = vadd.f32 %v4913, %v4883
      %v4915 = vadd.f32 %v4914, %v4884
      %v4916 = vadd.f32 %v4915, %v4885
      %v4917 = vadd.f32 %v4916, %v4886
      %v4918 = vadd.f32 %v4917, %v4887
      %v4919 = vadd.f32 %v4918, %v4888
      %v4920 = vadd.f32 %v4919, %v4889
      %v4921 = vadd.f32 %v4920, %v4890
      %v4922 = vadd.f32 %v4921, %v4891
      %v4923 = vadd.f32 %v4922, %v4892
      %v4924 = vadd.f32 %v4923, %v4893
      %v4925 = vadd.f32 %v4924, %v4894
      %v4926 = vadd.f32 %v4925, %v4895
      %v4927 = vadd.f32 %v4926, %v4896
      %v4928 = vadd.f32 %v4927, %v4897
      %v4929 = vadd.f32 %v4928, %v4898
      %v4930 = vadd.f32 %v4929, %v4899
      %v4931 = vadd.f32 %v4930, %v4900
      %v4932 = vadd.f32 %v4931, %v4901
      %v4933 = vrot.slane %v4932, 4
      %v4934 = vadd.f32 %v4932, %v4933
      %v4935 = vrot.slane %v4934, 2
      %v4936 = vadd.f32 %v4934, %v4935
      %v4937 = vrot.slane %v4936, 1
      %v4938 = vadd.f32 %v4936, %v4937
      %v4939 = vmul.f32 %v4870, %v4870
      %v4940 = vmul.f32 %v4871, %v4871
      %v4941 = vmul.f32 %v4872, %v4872
      %v4942 = vmul.f32 %v4873, %v4873
      %v4943 = vmul.f32 %v4874, %v4874
      %v4944 = vmul.f32 %v4875, %v4875
      %v4945 = vmul.f32 %v4876, %v4876
      %v4946 = vmul.f32 %v4877, %v4877
      %v4947 = vmul.f32 %v4878, %v4878
      %v4948 = vmul.f32 %v4879, %v4879
      %v4949 = vmul.f32 %v4880, %v4880
      %v4950 = vmul.f32 %v4881, %v4881
      %v4951 = vmul.f32 %v4882, %v4882
      %v4952 = vmul.f32 %v4883, %v4883
      %v4953 = vmul.f32 %v4884, %v4884
      %v4954 = vmul.f32 %v4885, %v4885
      %v4955 = vmul.f32 %v4886, %v4886
      %v4956 = vmul.f32 %v4887, %v4887
      %v4957 = vmul.f32 %v4888, %v4888
      %v4958 = vmul.f32 %v4889, %v4889
      %v4959 = vmul.f32 %v4890, %v4890
      %v4960 = vmul.f32 %v4891, %v4891
      %v4961 = vmul.f32 %v4892, %v4892
      %v4962 = vmul.f32 %v4893, %v4893
      %v4963 = vmul.f32 %v4894, %v4894
      %v4964 = vmul.f32 %v4895, %v4895
      %v4965 = vmul.f32 %v4896, %v4896
      %v4966 = vmul.f32 %v4897, %v4897
      %v4967 = vmul.f32 %v4898, %v4898
      %v4968 = vmul.f32 %v4899, %v4899
      %v4969 = vmul.f32 %v4900, %v4900
      %v4970 = vmul.f32 %v4901, %v4901
      %v4971 = vadd.f32 %v4939, %v4940
      %v4972 = vadd.f32 %v4971, %v4941
      %v4973 = vadd.f32 %v4972, %v4942
      %v4974 = vadd.f32 %v4973, %v4943
      %v4975 = vadd.f32 %v4974, %v4944
      %v4976 = vadd.f32 %v4975, %v4945
      %v4977 = vadd.f32 %v4976, %v4946
      %v4978 = vadd.f32 %v4977, %v4947
      %v4979 = vadd.f32 %v4978, %v4948
      %v4980 = vadd.f32 %v4979, %v4949
      %v4981 = vadd.f32 %v4980, %v4950
      %v4982 = vadd.f32 %v4981, %v4951
      %v4983 = vadd.f32 %v4982, %v4952
      %v4984 = vadd.f32 %v4983, %v4953
      %v4985 = vadd.f32 %v4984, %v4954
      %v4986 = vadd.f32 %v4985, %v4955
      %v4987 = vadd.f32 %v4986, %v4956
      %v4988 = vadd.f32 %v4987, %v4957
      %v4989 = vadd.f32 %v4988, %v4958
      %v4990 = vadd.f32 %v4989, %v4959
      %v4991 = vadd.f32 %v4990, %v4960
      %v4992 = vadd.f32 %v4991, %v4961
      %v4993 = vadd.f32 %v4992, %v4962
      %v4994 = vadd.f32 %v4993, %v4963
      %v4995 = vadd.f32 %v4994, %v4964
      %v4996 = vadd.f32 %v4995, %v4965
      %v4997 = vadd.f32 %v4996, %v4966
      %v4998 = vadd.f32 %v4997, %v4967
      %v4999 = vadd.f32 %v4998, %v4968
      %v5000 = vadd.f32 %v4999, %v4969
      %v5001 = vadd.f32 %v5000, %v4970
      %v5002 = vrot.slane %v5001, 4
      %v5003 = vadd.f32 %v5001, %v5002
      %v5004 = vrot.slane %v5003, 2
      %v5005 = vadd.f32 %v5003, %v5004
      %v5006 = vrot.slane %v5005, 1
      %v5007 = vadd.f32 %v5005, %v5006
      %v5008 = vmul.f32 %v4938, 0.00390625
      %v5009 = vmul.f32 %v5007, 0.00390625
      %v5010 = vmul.f32 %v5008, %v5008
      %v5011 = vsub.f32 %v5009, %v5010
      %v5012 = vmax.f32 %v5011, 0.0
      %v5013 = vsub.f32 %v4870, %v5008
      %v5014 = vsub.f32 %v4871, %v5008
      %v5015 = vsub.f32 %v4872, %v5008
      %v5016 = vsub.f32 %v4873, %v5008
      %v5017 = vsub.f32 %v4874, %v5008
      %v5018 = vsub.f32 %v4875, %v5008
      %v5019 = vsub.f32 %v4876, %v5008
      %v5020 = vsub.f32 %v4877, %v5008
      %v5021 = vsub.f32 %v4878, %v5008
      %v5022 = vsub.f32 %v4879, %v5008
      %v5023 = vsub.f32 %v4880, %v5008
      %v5024 = vsub.f32 %v4881, %v5008
      %v5025 = vsub.f32 %v4882, %v5008
      %v5026 = vsub.f32 %v4883, %v5008
      %v5027 = vsub.f32 %v4884, %v5008
      %v5028 = vsub.f32 %v4885, %v5008
      %v5029 = vsub.f32 %v4886, %v5008
      %v5030 = vsub.f32 %v4887, %v5008
      %v5031 = vsub.f32 %v4888, %v5008
      %v5032 = vsub.f32 %v4889, %v5008
      %v5033 = vsub.f32 %v4890, %v5008
      %v5034 = vsub.f32 %v4891, %v5008
      %v5035 = vsub.f32 %v4892, %v5008
      %v5036 = vsub.f32 %v4893, %v5008
      %v5037 = vsub.f32 %v4894, %v5008
      %v5038 = vsub.f32 %v4895, %v5008
      %v5039 = vsub.f32 %v4896, %v5008
      %v5040 = vsub.f32 %v4897, %v5008
      %v5041 = vsub.f32 %v4898, %v5008
      %v5042 = vsub.f32 %v4899, %v5008
      %v5043 = vsub.f32 %v4900, %v5008
      %v5044 = vsub.f32 %v4901, %v5008
      %v5045 = vadd.f32 %v5012, 1e-05
      %v5046 = vrsqrt.pop %v5045
      %v5047 = vmul.f32 %v5013, %v5046
      %v5048 = vmul.f32 %v5014, %v5046
      %v5049 = vmul.f32 %v5015, %v5046
      %v5050 = vmul.f32 %v5016, %v5046
      %v5051 = vmul.f32 %v5017, %v5046
      %v5052 = vmul.f32 %v5018, %v5046
      %v5053 = vmul.f32 %v5019, %v5046
      %v5054 = vmul.f32 %v5020, %v5046
      %v5055 = vmul.f32 %v5021, %v5046
      %v5056 = vmul.f32 %v5022, %v5046
      %v5057 = vmul.f32 %v5023, %v5046
      %v5058 = vmul.f32 %v5024, %v5046
      %v5059 = vmul.f32 %v5025, %v5046
      %v5060 = vmul.f32 %v5026, %v5046
      %v5061 = vmul.f32 %v5027, %v5046
      %v5062 = vmul.f32 %v5028, %v5046
      %v5063 = vmul.f32 %v5029, %v5046
      %v5064 = vmul.f32 %v5030, %v5046
      %v5065 = vmul.f32 %v5031, %v5046
      %v5066 = vmul.f32 %v5032, %v5046
      %v5067 = vmul.f32 %v5033, %v5046
      %v5068 = vmul.f32 %v5034, %v5046
      %v5069 = vmul.f32 %v5035, %v5046
      %v5070 = vmul.f32 %v5036, %v5046
      %v5071 = vmul.f32 %v5037, %v5046
      %v5072 = vmul.f32 %v5038, %v5046
      %v5073 = vmul.f32 %v5039, %v5046
      %v5074 = vmul.f32 %v5040, %v5046
      %v5075 = vmul.f32 %v5041, %v5046
      %v5076 = vmul.f32 %v5042, %v5046
      %v5077 = vmul.f32 %v5043, %v5046
      %v5078 = vmul.f32 %v5044, %v5046
      %v5079 = vadd.f32 %v172, %v5047
      %v5080 = vadd.f32 %v173, %v5048
      %v5081 = vadd.f32 %v174, %v5049
      %v5082 = vadd.f32 %v175, %v5050
      %v5083 = vadd.f32 %v176, %v5051
      %v5084 = vadd.f32 %v177, %v5052
      %v5085 = vadd.f32 %v178, %v5053
      %v5086 = vadd.f32 %v179, %v5054
      %v5087 = vadd.f32 %v180, %v5055
      %v5088 = vadd.f32 %v181, %v5056
      %v5089 = vadd.f32 %v182, %v5057
      %v5090 = vadd.f32 %v183, %v5058
      %v5091 = vadd.f32 %v184, %v5059
      %v5092 = vadd.f32 %v185, %v5060
      %v5093 = vadd.f32 %v186, %v5061
      %v5094 = vadd.f32 %v187, %v5062
      %v5095 = vadd.f32 %v188, %v5063
      %v5096 = vadd.f32 %v189, %v5064
      %v5097 = vadd.f32 %v190, %v5065
      %v5098 = vadd.f32 %v191, %v5066
      %v5099 = vadd.f32 %v192, %v5067
      %v5100 = vadd.f32 %v193, %v5068
      %v5101 = vadd.f32 %v194, %v5069
      %v5102 = vadd.f32 %v195, %v5070
      %v5103 = vadd.f32 %v196, %v5071
      %v5104 = vadd.f32 %v197, %v5072
      %v5105 = vadd.f32 %v198, %v5073
      %v5106 = vadd.f32 %v199, %v5074
      %v5107 = vadd.f32 %v200, %v5075
      %v5108 = vadd.f32 %v201, %v5076
      %v5109 = vadd.f32 %v202, %v5077
      %v5110 = vadd.f32 %v203, %v5078
      %5111 = vst [vmem:[%s170] sm:$0xff] %v5079
      %5112 = vst [vmem:[%s170 + $0x8] sm:$0xff] %v5080
      %5113 = vst [vmem:[%s170 + $0x10] sm:$0xff] %v5081
      %5114 = vst [vmem:[%s170 + $0x18] sm:$0xff] %v5082
      %5115 = vst [vmem:[%s170 + $0x20] sm:$0xff] %v5083
      %5116 = vst [vmem:[%s170 + $0x28] sm:$0xff] %v5084
      %5117 = vst [vmem:[%s170 + $0x30] sm:$0xff] %v5085
      %5118 = vst [vmem:[%s170 + $0x38] sm:$0xff] %v5086
      %5119 = vst [vmem:[%s170 + $0x40] sm:$0xff] %v5087
      %5120 = vst [vmem:[%s170 + $0x48] sm:$0xff] %v5088
      %5121 = vst [vmem:[%s170 + $0x50] sm:$0xff] %v5089
      %5122 = vst [vmem:[%s170 + $0x58] sm:$0xff] %v5090
      %5123 = vst [vmem:[%s170 + $0x60] sm:$0xff] %v5091
      %5124 = vst [vmem:[%s170 + $0x68] sm:$0xff] %v5092
      %5125 = vst [vmem:[%s170 + $0x70] sm:$0xff] %v5093
      %5126 = vst [vmem:[%s170 + $0x78] sm:$0xff] %v5094
      %5127 = vst [vmem:[%s170 + $0x80] sm:$0xff] %v5095
      %5128 = vst [vmem:[%s170 + $0x88] sm:$0xff] %v5096
      %5129 = vst [vmem:[%s170 + $0x90] sm:$0xff] %v5097
      %5130 = vst [vmem:[%s170 + $0x98] sm:$0xff] %v5098
      %5131 = vst [vmem:[%s170 + $0xa0] sm:$0xff] %v5099
      %5132 = vst [vmem:[%s170 + $0xa8] sm:$0xff] %v5100
      %5133 = vst [vmem:[%s170 + $0xb0] sm:$0xff] %v5101
      %5134 = vst [vmem:[%s170 + $0xb8] sm:$0xff] %v5102
      %5135 = vst [vmem:[%s170 + $0xc0] sm:$0xff] %v5103
      %5136 = vst [vmem:[%s170 + $0xc8] sm:$0xff] %v5104
      %5137 = vst [vmem:[%s170 + $0xd0] sm:$0xff] %v5105
      %5138 = vst [vmem:[%s170 + $0xd8] sm:$0xff] %v5106
      %5139 = vst [vmem:[%s170 + $0xe0] sm:$0xff] %v5107
      %5140 = vst [vmem:[%s170 + $0xe8] sm:$0xff] %v5108
      %5141 = vst [vmem:[%s170 + $0xf0] sm:$0xff] %v5109
      %5142 = vst [vmem:[%s170 + $0xf8] sm:$0xff] %v5110
      %p5143 = scmp.lt.s32.totalorder %s14, 1
      %s5144 = scalar_select %p5143, %s14, 1
      %s5145 = smul.addr %s5144, 32
      %s5146 = smul.addr %s5145, 8
      %s5147 = scalar_lea.vmem %s3, %s5146
      // Predicated region
      $region33: #{residual_block_nchw.1} parent=31 // pred_check
        %p5148 = pneg %p100
      $region34: #{residual_block_nchw.1} parent=31 // pred_check_branch
        %5150 = sbr.rel (%p5148) target = $region36
      $region35: #{residual_block_nchw.1} parent=31 // pred_region
        _
      $region36: #{residual_block_nchw.1} parent=31 // pred_fallthru
        _
    $region32: #{residual_block_nchw.1} parent=5 // pred_fallthru
      _
    %p5151 = scmp.le.s32.totalorder 2, %s9
    // Predicated region
    $region37: #{residual_block_nchw.1} parent=5 // pred_check
      %p5152 = pneg %p5151
    $region38: #{residual_block_nchw.1} parent=5 // pred_check_branch
      %5154 = sbr.rel (%p5152) target = $region40
    $region39: #{residual_block_nchw.1} parent=5 // pred_region
      %s5155 = ssub.s32 %s9, 2
      // Predicated region
      $region41: #{residual_block_nchw.1} parent=39 // pred_check
        %p5156 = pneg %p106
      $region42: #{residual_block_nchw.1} parent=39 // pred_check_branch
        %5158 = sbr.rel (%p5156) target = $region44
      $region43: #{residual_block_nchw.1} parent=39 // pred_region
        %p5159 = scmp.lt.s32.totalorder %s15, 1
        %s5160 = scalar_select %p5159, %s15, 1
        %s5161 = smul.addr %s5160, 32
        %s5162 = smul.addr %s5161, 8
        %s5163 = scalar_lea.vmem %s3, %s5162
      $region44: #{residual_block_nchw.1} parent=39 // pred_fallthru
        _
    $region40: #{residual_block_nchw.1} parent=5 // pred_fallthru
      _
  $region6: #{residual_block_nchw.1} parent=0 // loop_footer
    %s13 = sadd.s32 1, %s9
  $region7: #{residual_block_nchw.1} parent=0 // loop_footer_branch
    %8 = sbr.rel target = $region3
  $region8: #{residual_block_nchw.1} parent=0 // loop_exit
    _

</llo_original>
